<compile_context>
chip_gen: v7x
topology: tpu7x:2x2x1
jax: 0.10.0
libtpu: 0.0.40
codegen_flags: <defaults>
</compile_context>

<pallas_src>
import jax
import jax.numpy as jnp
from jax.experimental import pallas as pl
from jax.experimental.pallas import tpu as pltpu

# ----------------------- hyper-parameters (small, synthetic) ----------------
N_ATOM_FEATURES = 16
N_BOND_FEATURES = 8
N_HIDDEN = 32
N_TASKS = 1
T = 2                  # message-passing iterations
T2 = 1                 # knowledge-attention message-passing iterations
# M = 0 -> AggregateReadout path (Set2Set/LSTM branch is not exercised)

_SELU_ALPHA = 1.6732632423543772848170429916717
_SELU_SCALE = 1.0507009873554804934193349852946


def _relu(x):
    return jnp.maximum(x, 0.0)


def _selu(x):
    return _SELU_SCALE * jnp.where(
        x > 0, x, _SELU_ALPHA * (jnp.exp(jnp.minimum(x, 0.0)) - 1.0))


def _sigmoid_ref(x):                       # pure-JAX reference
    return 1.0 / (1.0 + jnp.exp(-x))


def _sigmoid_tanh(x):                      # in-kernel: 1 EUP push, exact
    return 0.5 * (1.0 + jnp.tanh(0.5 * x))


def _tile_lanes(x, reps):
    """np.tile(x, (1, reps)) along the lane axis via (mostly aligned) concats."""
    w = x.shape[-1]
    total = w * reps
    if w < 128 and 128 % w == 0 and total % 128 == 0 and reps > 128 // w:
        inner = jnp.concatenate([x] * (128 // w), axis=-1)          # one 128-lane tile
        return jnp.concatenate([inner] * (total // 128), axis=-1)   # aligned copies
    return jnp.concatenate([x] * reps, axis=-1)


# ----------------------------- Pallas kernel --------------------------------
def kempnn_kernel(nf_ref, ef_ref, ohr_ref, ohdt_ref, ohgt_ref, smat_ref,
                  w_in_ref, ew_ref, w_gru_ref, w_hh_ref, b_ref, out_ref):
    f32 = jnp.float32
    bf16 = jnp.bfloat16

    f_atom = nf_ref.shape[1]
    f_bond = ef_ref.shape[1]
    hdim = w_gru_ref.shape[0] // 2

    def mm(x, y, out_dtype=f32):
        # bf16 MXU operands, f32 accumulate / output
        return jnp.dot(x.astype(bf16), y.astype(bf16),
                       preferred_element_type=out_dtype)

    # ---- static views / loads of packed parameter slabs ---------------------
    w1 = w_in_ref[0:f_atom, :]
    wem = w_in_ref[f_atom:f_atom + f_bond, :]
    w_gru = w_gru_ref[...]               # (2H, 4H) = [[Wir|Wiz|Win|0],[Whr|Whz|0|Whn]]
    whh = w_hh_ref[...]                  # (H, 7H)  = [wam|waa|war|wgr|wm|wo|wao]
    wam = whh[:, 0:hdim]
    w_att = whh[:, hdim:3 * hdim]        # fused [waa | war]
    wgr = whh[:, 3 * hdim:4 * hdim]
    wm = whh[:, 4 * hdim:5 * hdim]
    wo = whh[:, 5 * hdim:6 * hdim]       # n_tasks cols valid, rest zero-padded
    wao = whh[:, 6 * hdim:7 * hdim]

    b = b_ref[...]
    b1, bem = b[0:1, :], b[1:2, :]
    br, bz, bin_, bhn = b[2:3, :], b[3:4, :], b[4:5, :], b[5:6, :]
    bam, baa, bar = b[6:7, :], b[7:8, :], b[8:9, :]
    bgr, bm = b[9:10, :], b[10:11, :]
    bo, bao = b[11:12, :], b[12:13, :]

    smat = smat_ref[...]                 # (H*H, H) bf16: smat[i*H+j, i'] = (i == i')
    ohr = ohr_ref[...]                   # (Ne, N) one-hot(edge_range)      gather
    ohdt = ohdt_ref[...]                 # (N, Ne) one-hot(edge_domain)^T   index_add
    ohgt = ohgt_ref[...]                 # (B, N)  one-hot(graph_id)^T      graph sum

    # ---- edge MLP / per-edge weight matrix A hoisted (independent of h) -----
    mlp_feat = _relu(mm(ef_ref[...], wem) + bem)          # (Ne, H)
    A = mm(mlp_feat, ew_ref[...])                         # (Ne, H*H) f32

    def enn(h):
        rn = mm(ohr, h)                                   # gather          (Ne, H)
        rt = _tile_lanes(rn, hdim)                        # lane replicate  (Ne, H*H)
        prod = (A * rt).astype(bf16)                      # f32 product, one bf16 cast
        edge_msg = jnp.dot(prod, smat,                    # per-edge matvec (Ne, H)
                           preferred_element_type=f32)
        return _relu(mm(ohdt, edge_msg))                  # scatter-add     (N, H)

    def gru(x, h):
        g = mm(jnp.concatenate([x, h], axis=1), w_gru)    # one MXU pass    (N, 4H)
        r = _sigmoid_tanh(g[:, 0:hdim] + br)
        z = _sigmoid_tanh(g[:, hdim:2 * hdim] + bz)
        n = jnp.tanh(g[:, 2 * hdim:3 * hdim] + bin_
                     + r * (g[:, 3 * hdim:4 * hdim] + bhn))
        return (1.0 - z) * n + z * h

    def graph_readout(act):                               # index_add_(graph_id)+tanh
        return jnp.tanh(mm(ohgt, act))

    # h = relu(first(node_features))
    h = _relu(mm(nf_ref[...], w1) + b1)

    # T message-passing steps with GRU state update
    for _ in range(T):
        h = gru(enn(h), h)

    # knowledge-attention branch (T2 > 0)
    h_att = h
    for _ in range(T2):
        h_att = _relu(mm(enn(h_att), wam) + bam + h_att)
    msg = enn(h_att)
    g_att = mm(msg, w_att)                                # fused waa|war   (N, 2H)
    att = g_att[:, 0:hdim] + baa + h_att                  # linear Message
    att_readout = graph_readout(_selu(g_att[:, hdim:2 * hdim] + bar))
    h = h * att

    # readout + heads (padded-width matmuls; host slices to n_tasks)
    mol = graph_readout(_selu(mm(h, wgr) + bgr))
    mlp_out = _relu(mm(mol, wm) + bm)
    out_head = mm(mlp_out, wo) + bo                       # (B, H); cols >= n_tasks = 0
    att_head = mm(att_readout, wao) + bao                 # (B, H)
    out_ref[...] = jnp.concatenate([out_head, att_head], axis=1)


# ------------------------------- host glue ----------------------------------
def init_params(key, f_atom=N_ATOM_FEATURES, f_bond=N_BOND_FEATURES,
                h=N_HIDDEN, n_tasks=N_TASKS):
    keys = jax.random.split(key, 32)

    def w(i, shape, scale=0.1):
        return (scale * jax.random.normal(keys[i], shape)).astype(jnp.float32)

    # weights stored pre-transposed as (in, out) so the kernel does x @ W
    return dict(
        w1=w(0, (f_atom, h)), b1=w(1, (1, h)),
        wem=w(2, (f_bond, h)), bem=w(3, (1, h)),
        ew=w(4, (h, h * h)),                       # E.weight (H, H*H), no bias
        wir=w(5, (h, h)), wiz=w(6, (h, h)), win=w(7, (h, h)),
        whr=w(8, (h, h)), whz=w(9, (h, h)), whn=w(10, (h, h)),
        br=w(11, (1, h)), bz=w(12, (1, h)), bin=w(13, (1, h)), bhn=w(14, (1, h)),
        wam=w(15, (h, h)), bam=w(16, (1, h)),
        waa=w(17, (h, h)), baa=w(18, (1, h)),
        war=w(19, (h, h)), bar=w(20, (1, h)),
        wgr=w(21, (h, h)), bgr=w(22, (1, h)),
        wm=w(23, (h, h)), bm=w(24, (1, h)),
        wo=w(25, (h, n_tasks)), bo=w(26, (1, n_tasks)),
        wao=w(27, (h, n_tasks)), bao=w(28, (1, n_tasks)),
    )


def pack_params(params):
    """Pack ~30 tiny arrays into 4 slabs (bf16 weights, f32 biases) + smat."""
    bf16, f32 = jnp.bfloat16, jnp.float32
    h = params["w1"].shape[1]
    n_tasks = params["wo"].shape[1]
    assert n_tasks <= h
    zeros_h = jnp.zeros((h, h), f32)

    w_in = jnp.concatenate([params["w1"], params["wem"]], axis=0).astype(bf16)
    ew = params["ew"].astype(bf16)

    # One (2H, 4H) slab -> whole GRU gate pre-activation from a single matmul
    # of [x | h]; the zero blocks keep W_in@x and W_hn@h separate so the reset
    # gate r only multiplies the hidden contribution (GRUCell semantics).
    w_gru = jnp.concatenate([
        jnp.concatenate([params["wir"], params["wiz"], params["win"], zeros_h], axis=1),
        jnp.concatenate([params["whr"], params["whz"], zeros_h, params["whn"]], axis=1),
    ], axis=0).astype(bf16)

    def pad_cols(a):  # (r, n_tasks) -> (r, h)
        return jnp.pad(a, ((0, 0), (0, h - n_tasks)))

    # Column-stacked so waa|war form one fused (H, 2H) RHS and the head matmuls
    # run at padded H width (sliced to n_tasks on the host).
    w_hh = jnp.concatenate(
        [params["wam"], params["waa"], params["war"], params["wgr"],
         params["wm"], pad_cols(params["wo"]), pad_cols(params["wao"])],
        axis=1).astype(bf16)

    biases = jnp.concatenate(
        [params["b1"], params["bem"], params["br"], params["bz"], params["bin"],
         params["bhn"], params["bam"], params["baa"], params["bar"],
         params["bgr"], params["bm"],
         pad_cols(params["bo"]), pad_cols(params["bao"])],
        axis=0).astype(f32)

    # smat[i*H + j, i'] = (i == i'): per-edge row-sum matrix, exact in bf16,
    # DMA'd once instead of rebuilding from iotas in-kernel.
    smat = (jnp.arange(h * h)[:, None] // h ==
            jnp.arange(h)[None, :]).astype(bf16)

    return w_in, ew, w_gru, w_hh, biases, smat


def kempnn_forward_pallas(params, node_features, edge_features,
                          edge_domain, edge_range, graph_id, batchsize):
    f32, bf16 = jnp.float32, jnp.bfloat16
    n_atoms = node_features.shape[0]
    h = params["w1"].shape[1]
    n_tasks = params["wo"].shape[1]

    # index arrays -> one-hot encodings (exact in bf16); gather / index_add run
    # as matmuls on the MXU inside the kernel.
    # TODO(synk): at real graph sizes pass the raw int32 indices via scalar
    # prefetch (SMEM) and use an edge-tiled grid instead of one-hot matmuls.
    oh_range = (edge_range[:, None] == jnp.arange(n_atoms)[None, :]).astype(bf16)
    oh_dom_t = (edge_domain[None, :] == jnp.arange(n_atoms)[:, None]).astype(bf16)
    oh_graph_t = (graph_id[None, :] == jnp.arange(batchsize)[:, None]).astype(bf16)

    w_in, ew, w_gru, w_hh, biases, smat = pack_params(params)

    args = (node_features.astype(f32), edge_features.astype(f32),
            oh_range, oh_dom_t, oh_graph_t, smat, w_in, ew, w_gru, w_hh, biases)

    vmem = pl.BlockSpec(memory_space=pltpu.MemorySpace.VMEM)
    out2 = pl.pallas_call(
        kempnn_kernel,
        out_shape=jax.ShapeDtypeStruct((batchsize, 2 * h), f32),
        in_specs=[vmem] * len(args),
        out_specs=vmem,
        compiler_params=pltpu.CompilerParams(vmem_limit_bytes=32 * 1024 * 1024),
    )(*args)
    # padded, lane-denser output written in-kernel; slice to n_tasks on host.
    return out2[:, :n_tasks], out2[:, h:h + n_tasks]


# -------------------- pure-JAX reference (for sanity check) -----------------
def kempnn_forward_reference(params, node_features, edge_features,
                             edge_domain, edge_range, graph_id, batchsize):
    hdim = params["w1"].shape[1]
    n_atoms = node_features.shape[0]
    mm = jnp.dot

    def enn(h):
        mlp_feat = _relu(mm(edge_features, params["wem"]) + params["bem"])
        A = mm(mlp_feat, params["ew"]).reshape(-1, hdim, hdim)
        rn = jnp.take(h, edge_range, axis=0)
        edge_msg = jnp.einsum("eij,ej->ei", A, rn)
        agg = jnp.zeros((n_atoms, hdim), jnp.float32).at[edge_domain].add(edge_msg)
        return _relu(agg)

    def gru(x, h):
        r = _sigmoid_ref(mm(x, params["wir"]) + mm(h, params["whr"]) + params["br"])
        z = _sigmoid_ref(mm(x, params["wiz"]) + mm(h, params["whz"]) + params["bz"])
        n = jnp.tanh(mm(x, params["win"]) + params["bin"]
                     + r * (mm(h, params["whn"]) + params["bhn"]))
        return (1.0 - z) * n + z * h

    def aggregate_readout(x, w, b):
        act = _selu(mm(x, w) + b)
        gsum = jnp.zeros((batchsize, hdim), jnp.float32).at[graph_id].add(act)
        return jnp.tanh(gsum)

    h = _relu(mm(node_features, params["w1"]) + params["b1"])
    for _ in range(T):
        h = gru(enn(h), h)
    h_att = h
    for _ in range(T2):
        msg = enn(h_att)
        h_att = _relu(mm(msg, params["wam"]) + params["bam"] + h_att)
    msg = enn(h_att)
    att = mm(msg, params["waa"]) + params["baa"] + h_att
    att_readout = aggregate_readout(msg, params["war"], params["bar"])
    h = h * att
    mol = aggregate_readout(h, params["wgr"], params["bgr"])
    mlp_out = _relu(mm(mol, params["wm"]) + params["bm"])
    out = mm(mlp_out, params["wo"]) + params["bo"]
    att_out = mm(att_readout, params["wao"]) + params["bao"]
    return out, att_out


# --------------------------------- main --------------------------------------
if __name__ == "__main__":
    key = jax.random.PRNGKey(0)
    k_nf, k_ef, k_dom, k_rng, k_par = jax.random.split(key, 5)

    N_ATOMS, N_EDGES, BATCH = 16, 32, 2
    node_features = jax.random.normal(k_nf, (N_ATOMS, N_ATOM_FEATURES), jnp.float32)
    edge_features = jax.random.normal(k_ef, (N_EDGES, N_BOND_FEATURES), jnp.float32)
    edge_domain = jax.random.randint(k_dom, (N_EDGES,), 0, N_ATOMS, dtype=jnp.int32)
    edge_range = jax.random.randint(k_rng, (N_EDGES,), 0, N_ATOMS, dtype=jnp.int32)
    graph_id = jnp.concatenate([
        jnp.zeros((N_ATOMS // 2,), jnp.int32),
        jnp.ones((N_ATOMS - N_ATOMS // 2,), jnp.int32)])

    params = init_params(k_par)

    out, att_out = kempnn_forward_pallas(
        params, node_features, edge_features, edge_domain, edge_range,
        graph_id, BATCH)
    jax.block_until_ready((out, att_out))

    ref_out, ref_att_out = kempnn_forward_reference(
        params, node_features, edge_features, edge_domain, edge_range,
        graph_id, BATCH)

    assert out.shape == (BATCH, N_TASKS) and att_out.shape == (BATCH, N_TASKS)
    assert bool(jnp.all(jnp.isfinite(out))) and bool(jnp.all(jnp.isfinite(att_out)))
    # bf16 MXU operands vs. f32 reference
    assert bool(jnp.allclose(out, ref_out, atol=5e-2, rtol=5e-2))
    assert bool(jnp.allclose(att_out, ref_att_out, atol=5e-2, rtol=5e-2))
    print("KERNEL_OK")
</pallas_src>

<mosaic_0001>
module attributes {stable_mosaic.version = 11 : i64} {
  func.func @kempnn_kernel(%arg0: memref<16x16xf32, #tpu.memory_space<vmem>>, %arg1: memref<32x8xf32, #tpu.memory_space<vmem>>, %arg2: memref<32x16xbf16, #tpu.memory_space<vmem>>, %arg3: memref<16x32xbf16, #tpu.memory_space<vmem>>, %arg4: memref<2x16xbf16, #tpu.memory_space<vmem>>, %arg5: memref<1024x32xbf16, #tpu.memory_space<vmem>>, %arg6: memref<24x32xbf16, #tpu.memory_space<vmem>>, %arg7: memref<32x1024xbf16, #tpu.memory_space<vmem>>, %arg8: memref<64x128xbf16, #tpu.memory_space<vmem>>, %arg9: memref<32x224xbf16, #tpu.memory_space<vmem>>, %arg10: memref<13x32xf32, #tpu.memory_space<vmem>>, %arg11: memref<2x64xf32, #tpu.memory_space<vmem>>) attributes {dimension_semantics = [], scalar_prefetch = 0 : i64, scratch_operands = 0 : i64, tpu.core_type = #tpu.core_type<tc>} {
    %c0 = arith.constant 0 : index
    %c0_0 = arith.constant 0 : index
    %0 = vector.load %arg6[%c0, %c0_0] : memref<24x32xbf16, #tpu.memory_space<vmem>>, vector<16x32xbf16>
    %c16 = arith.constant 16 : index
    %c0_1 = arith.constant 0 : index
    %1 = vector.load %arg6[%c16, %c0_1] : memref<24x32xbf16, #tpu.memory_space<vmem>>, vector<8x32xbf16>
    %c0_2 = arith.constant 0 : index
    %c0_3 = arith.constant 0 : index
    %2 = vector.load %arg8[%c0_2, %c0_3] : memref<64x128xbf16, #tpu.memory_space<vmem>>, vector<64x128xbf16>
    %c0_4 = arith.constant 0 : index
    %c0_5 = arith.constant 0 : index
    %3 = vector.load %arg9[%c0_4, %c0_5] : memref<32x224xbf16, #tpu.memory_space<vmem>>, vector<32x224xbf16>
    %4 = vector.extract_strided_slice %3 {offsets = [0, 0], sizes = [32, 32], strides = [1, 1]} : vector<32x224xbf16> to vector<32x32xbf16>
    %5 = vector.extract_strided_slice %3 {offsets = [0, 32], sizes = [32, 64], strides = [1, 1]} : vector<32x224xbf16> to vector<32x64xbf16>
    %6 = vector.extract_strided_slice %3 {offsets = [0, 96], sizes = [32, 32], strides = [1, 1]} : vector<32x224xbf16> to vector<32x32xbf16>
    %7 = vector.extract_strided_slice %3 {offsets = [0, 128], sizes = [32, 32], strides = [1, 1]} : vector<32x224xbf16> to vector<32x32xbf16>
    %8 = vector.extract_strided_slice %3 {offsets = [0, 160], sizes = [32, 32], strides = [1, 1]} : vector<32x224xbf16> to vector<32x32xbf16>
    %9 = vector.extract_strided_slice %3 {offsets = [0, 192], sizes = [32, 32], strides = [1, 1]} : vector<32x224xbf16> to vector<32x32xbf16>
    %c0_6 = arith.constant 0 : index
    %c0_7 = arith.constant 0 : index
    %10 = vector.load %arg10[%c0_6, %c0_7] : memref<13x32xf32, #tpu.memory_space<vmem>>, vector<13x32xf32>
    %11 = vector.extract_strided_slice %10 {offsets = [0, 0], sizes = [1, 32], strides = [1, 1]} : vector<13x32xf32> to vector<1x32xf32>
    %12 = vector.extract_strided_slice %10 {offsets = [1, 0], sizes = [1, 32], strides = [1, 1]} : vector<13x32xf32> to vector<1x32xf32>
    %13 = vector.extract_strided_slice %10 {offsets = [2, 0], sizes = [1, 32], strides = [1, 1]} : vector<13x32xf32> to vector<1x32xf32>
    %14 = vector.extract_strided_slice %10 {offsets = [3, 0], sizes = [1, 32], strides = [1, 1]} : vector<13x32xf32> to vector<1x32xf32>
    %15 = vector.extract_strided_slice %10 {offsets = [4, 0], sizes = [1, 32], strides = [1, 1]} : vector<13x32xf32> to vector<1x32xf32>
    %16 = vector.extract_strided_slice %10 {offsets = [5, 0], sizes = [1, 32], strides = [1, 1]} : vector<13x32xf32> to vector<1x32xf32>
    %17 = vector.extract_strided_slice %10 {offsets = [6, 0], sizes = [1, 32], strides = [1, 1]} : vector<13x32xf32> to vector<1x32xf32>
    %18 = vector.extract_strided_slice %10 {offsets = [7, 0], sizes = [1, 32], strides = [1, 1]} : vector<13x32xf32> to vector<1x32xf32>
    %19 = vector.extract_strided_slice %10 {offsets = [8, 0], sizes = [1, 32], strides = [1, 1]} : vector<13x32xf32> to vector<1x32xf32>
    %20 = vector.extract_strided_slice %10 {offsets = [9, 0], sizes = [1, 32], strides = [1, 1]} : vector<13x32xf32> to vector<1x32xf32>
    %21 = vector.extract_strided_slice %10 {offsets = [10, 0], sizes = [1, 32], strides = [1, 1]} : vector<13x32xf32> to vector<1x32xf32>
    %22 = vector.extract_strided_slice %10 {offsets = [11, 0], sizes = [1, 32], strides = [1, 1]} : vector<13x32xf32> to vector<1x32xf32>
    %23 = vector.extract_strided_slice %10 {offsets = [12, 0], sizes = [1, 32], strides = [1, 1]} : vector<13x32xf32> to vector<1x32xf32>
    %c0_8 = arith.constant 0 : index
    %c0_9 = arith.constant 0 : index
    %24 = vector.load %arg5[%c0_8, %c0_9] : memref<1024x32xbf16, #tpu.memory_space<vmem>>, vector<1024x32xbf16>
    %c0_10 = arith.constant 0 : index
    %c0_11 = arith.constant 0 : index
    %25 = vector.load %arg2[%c0_10, %c0_11] : memref<32x16xbf16, #tpu.memory_space<vmem>>, vector<32x16xbf16>
    %c0_12 = arith.constant 0 : index
    %c0_13 = arith.constant 0 : index
    %26 = vector.load %arg3[%c0_12, %c0_13] : memref<16x32xbf16, #tpu.memory_space<vmem>>, vector<16x32xbf16>
    %c0_14 = arith.constant 0 : index
    %c0_15 = arith.constant 0 : index
    %27 = vector.load %arg4[%c0_14, %c0_15] : memref<2x16xbf16, #tpu.memory_space<vmem>>, vector<2x16xbf16>
    %c0_16 = arith.constant 0 : index
    %c0_17 = arith.constant 0 : index
    %28 = vector.load %arg1[%c0_16, %c0_17] : memref<32x8xf32, #tpu.memory_space<vmem>>, vector<32x8xf32>
    %29 = arith.truncf %28 : vector<32x8xf32> to vector<32x8xbf16>
    %cst = arith.constant dense<0.000000e+00> : vector<32x32xf32>
    %30 = tpu.matmul %29, %1, %cst {dimension_numbers = #tpu.dot_dimension_numbers<[1], [0], [0], [1], [0, 0, 1, 1], [], []>} : vector<32x8xbf16>, vector<8x32xbf16>, vector<32x32xf32> -> vector<32x32xf32>
    %31 = vector.broadcast %12 : vector<1x32xf32> to vector<32x32xf32>
    %32 = arith.addf %30, %31 : vector<32x32xf32>
    %cst_18 = arith.constant 0.000000e+00 : f32
    %33 = vector.broadcast %cst_18 : f32 to vector<32x32xf32>
    %34 = arith.maximumf %32, %33 : vector<32x32xf32>
    %c0_19 = arith.constant 0 : index
    %c0_20 = arith.constant 0 : index
    %35 = vector.load %arg7[%c0_19, %c0_20] : memref<32x1024xbf16, #tpu.memory_space<vmem>>, vector<32x1024xbf16>
    %36 = arith.truncf %34 : vector<32x32xf32> to vector<32x32xbf16>
    %cst_21 = arith.constant dense<0.000000e+00> : vector<32x1024xf32>
    %37 = tpu.matmul %36, %35, %cst_21 {dimension_numbers = #tpu.dot_dimension_numbers<[1], [0], [0], [1], [0, 0, 1, 1], [], []>} : vector<32x32xbf16>, vector<32x1024xbf16>, vector<32x1024xf32> -> vector<32x1024xf32>
    %c0_22 = arith.constant 0 : index
    %c0_23 = arith.constant 0 : index
    %38 = vector.load %arg0[%c0_22, %c0_23] : memref<16x16xf32, #tpu.memory_space<vmem>>, vector<16x16xf32>
    %39 = arith.truncf %38 : vector<16x16xf32> to vector<16x16xbf16>
    %cst_24 = arith.constant dense<0.000000e+00> : vector<16x32xf32>
    %40 = tpu.matmul %39, %0, %cst_24 {dimension_numbers = #tpu.dot_dimension_numbers<[1], [0], [0], [1], [0, 0, 1, 1], [], []>} : vector<16x16xbf16>, vector<16x32xbf16>, vector<16x32xf32> -> vector<16x32xf32>
    %41 = vector.broadcast %11 : vector<1x32xf32> to vector<16x32xf32>
    %42 = arith.addf %40, %41 : vector<16x32xf32>
    %cst_25 = arith.constant 0.000000e+00 : f32
    %43 = vector.broadcast %cst_25 : f32 to vector<16x32xf32>
    %44 = arith.maximumf %42, %43 : vector<16x32xf32>
    %45 = arith.truncf %44 : vector<16x32xf32> to vector<16x32xbf16>
    %cst_26 = arith.constant dense<0.000000e+00> : vector<32x32xf32>
    %46 = tpu.matmul %25, %45, %cst_26 {dimension_numbers = #tpu.dot_dimension_numbers<[1], [0], [0], [1], [0, 0, 1, 1], [], []>} : vector<32x16xbf16>, vector<16x32xbf16>, vector<32x32xf32> -> vector<32x32xf32>
    %47 = tpu.concatenate %46, %46, %46, %46 in 1 : vector<32x32xf32>, vector<32x32xf32>, vector<32x32xf32>, vector<32x32xf32> -> vector<32x128xf32>
    %48 = tpu.concatenate %47, %47, %47, %47, %47, %47, %47, %47 in 1 : vector<32x128xf32>, vector<32x128xf32>, vector<32x128xf32>, vector<32x128xf32>, vector<32x128xf32>, vector<32x128xf32>, vector<32x128xf32>, vector<32x128xf32> -> vector<32x1024xf32>
    %49 = arith.mulf %37, %48 : vector<32x1024xf32>
    %50 = arith.truncf %49 : vector<32x1024xf32> to vector<32x1024xbf16>
    %cst_27 = arith.constant dense<0.000000e+00> : vector<32x32xf32>
    %51 = tpu.matmul %50, %24, %cst_27 {dimension_numbers = #tpu.dot_dimension_numbers<[1], [0], [0], [1], [0, 0, 1, 1], [], []>} : vector<32x1024xbf16>, vector<1024x32xbf16>, vector<32x32xf32> -> vector<32x32xf32>
    %52 = arith.truncf %51 : vector<32x32xf32> to vector<32x32xbf16>
    %cst_28 = arith.constant dense<0.000000e+00> : vector<16x32xf32>
    %53 = tpu.matmul %26, %52, %cst_28 {dimension_numbers = #tpu.dot_dimension_numbers<[1], [0], [0], [1], [0, 0, 1, 1], [], []>} : vector<16x32xbf16>, vector<32x32xbf16>, vector<16x32xf32> -> vector<16x32xf32>
    %cst_29 = arith.constant 0.000000e+00 : f32
    %54 = vector.broadcast %cst_29 : f32 to vector<16x32xf32>
    %55 = arith.maximumf %53, %54 : vector<16x32xf32>
    %56 = tpu.concatenate %55, %44 in 1 : vector<16x32xf32>, vector<16x32xf32> -> vector<16x64xf32>
    %57 = arith.truncf %56 : vector<16x64xf32> to vector<16x64xbf16>
    %cst_30 = arith.constant dense<0.000000e+00> : vector<16x128xf32>
    %58 = tpu.matmul %57, %2, %cst_30 {dimension_numbers = #tpu.dot_dimension_numbers<[1], [0], [0], [1], [0, 0, 1, 1], [], []>} : vector<16x64xbf16>, vector<64x128xbf16>, vector<16x128xf32> -> vector<16x128xf32>
    %59 = vector.extract_strided_slice %58 {offsets = [0, 0], sizes = [16, 32], strides = [1, 1]} : vector<16x128xf32> to vector<16x32xf32>
    %60 = vector.broadcast %13 : vector<1x32xf32> to vector<16x32xf32>
    %61 = arith.addf %59, %60 : vector<16x32xf32>
    %cst_31 = arith.constant 5.000000e-01 : f32
    %62 = vector.broadcast %cst_31 : f32 to vector<16x32xf32>
    %63 = arith.mulf %62, %61 : vector<16x32xf32>
    %64 = math.tanh %63 : vector<16x32xf32>
    %cst_32 = arith.constant 1.000000e+00 : f32
    %65 = vector.broadcast %cst_32 : f32 to vector<16x32xf32>
    %66 = arith.addf %65, %64 : vector<16x32xf32>
    %cst_33 = arith.constant 5.000000e-01 : f32
    %67 = vector.broadcast %cst_33 : f32 to vector<16x32xf32>
    %68 = arith.mulf %67, %66 : vector<16x32xf32>
    %69 = vector.extract_strided_slice %58 {offsets = [0, 32], sizes = [16, 32], strides = [1, 1]} : vector<16x128xf32> to vector<16x32xf32>
    %70 = vector.broadcast %14 : vector<1x32xf32> to vector<16x32xf32>
    %71 = arith.addf %69, %70 : vector<16x32xf32>
    %cst_34 = arith.constant 5.000000e-01 : f32
    %72 = vector.broadcast %cst_34 : f32 to vector<16x32xf32>
    %73 = arith.mulf %72, %71 : vector<16x32xf32>
    %74 = math.tanh %73 : vector<16x32xf32>
    %cst_35 = arith.constant 1.000000e+00 : f32
    %75 = vector.broadcast %cst_35 : f32 to vector<16x32xf32>
    %76 = arith.addf %75, %74 : vector<16x32xf32>
    %cst_36 = arith.constant 5.000000e-01 : f32
    %77 = vector.broadcast %cst_36 : f32 to vector<16x32xf32>
    %78 = arith.mulf %77, %76 : vector<16x32xf32>
    %79 = vector.extract_strided_slice %58 {offsets = [0, 64], sizes = [16, 32], strides = [1, 1]} : vector<16x128xf32> to vector<16x32xf32>
    %80 = vector.broadcast %15 : vector<1x32xf32> to vector<16x32xf32>
    %81 = arith.addf %79, %80 : vector<16x32xf32>
    %82 = vector.extract_strided_slice %58 {offsets = [0, 96], sizes = [16, 32], strides = [1, 1]} : vector<16x128xf32> to vector<16x32xf32>
    %83 = vector.broadcast %16 : vector<1x32xf32> to vector<16x32xf32>
    %84 = arith.addf %82, %83 : vector<16x32xf32>
    %85 = arith.mulf %68, %84 : vector<16x32xf32>
    %86 = arith.addf %81, %85 : vector<16x32xf32>
    %87 = math.tanh %86 : vector<16x32xf32>
    %cst_37 = arith.constant 1.000000e+00 : f32
    %88 = vector.broadcast %cst_37 : f32 to vector<16x32xf32>
    %89 = arith.subf %88, %78 : vector<16x32xf32>
    %90 = arith.mulf %89, %87 : vector<16x32xf32>
    %91 = arith.mulf %78, %44 : vector<16x32xf32>
    %92 = arith.addf %90, %91 : vector<16x32xf32>
    %93 = arith.truncf %92 : vector<16x32xf32> to vector<16x32xbf16>
    %cst_38 = arith.constant dense<0.000000e+00> : vector<32x32xf32>
    %94 = tpu.matmul %25, %93, %cst_38 {dimension_numbers = #tpu.dot_dimension_numbers<[1], [0], [0], [1], [0, 0, 1, 1], [], []>} : vector<32x16xbf16>, vector<16x32xbf16>, vector<32x32xf32> -> vector<32x32xf32>
    %95 = tpu.concatenate %94, %94, %94, %94 in 1 : vector<32x32xf32>, vector<32x32xf32>, vector<32x32xf32>, vector<32x32xf32> -> vector<32x128xf32>
    %96 = tpu.concatenate %95, %95, %95, %95, %95, %95, %95, %95 in 1 : vector<32x128xf32>, vector<32x128xf32>, vector<32x128xf32>, vector<32x128xf32>, vector<32x128xf32>, vector<32x128xf32>, vector<32x128xf32>, vector<32x128xf32> -> vector<32x1024xf32>
    %97 = arith.mulf %37, %96 : vector<32x1024xf32>
    %98 = arith.truncf %97 : vector<32x1024xf32> to vector<32x1024xbf16>
    %cst_39 = arith.constant dense<0.000000e+00> : vector<32x32xf32>
    %99 = tpu.matmul %98, %24, %cst_39 {dimension_numbers = #tpu.dot_dimension_numbers<[1], [0], [0], [1], [0, 0, 1, 1], [], []>} : vector<32x1024xbf16>, vector<1024x32xbf16>, vector<32x32xf32> -> vector<32x32xf32>
    %100 = arith.truncf %99 : vector<32x32xf32> to vector<32x32xbf16>
    %cst_40 = arith.constant dense<0.000000e+00> : vector<16x32xf32>
    %101 = tpu.matmul %26, %100, %cst_40 {dimension_numbers = #tpu.dot_dimension_numbers<[1], [0], [0], [1], [0, 0, 1, 1], [], []>} : vector<16x32xbf16>, vector<32x32xbf16>, vector<16x32xf32> -> vector<16x32xf32>
    %cst_41 = arith.constant 0.000000e+00 : f32
    %102 = vector.broadcast %cst_41 : f32 to vector<16x32xf32>
    %103 = arith.maximumf %101, %102 : vector<16x32xf32>
    %104 = tpu.concatenate %103, %92 in 1 : vector<16x32xf32>, vector<16x32xf32> -> vector<16x64xf32>
    %105 = arith.truncf %104 : vector<16x64xf32> to vector<16x64xbf16>
    %cst_42 = arith.constant dense<0.000000e+00> : vector<16x128xf32>
    %106 = tpu.matmul %105, %2, %cst_42 {dimension_numbers = #tpu.dot_dimension_numbers<[1], [0], [0], [1], [0, 0, 1, 1], [], []>} : vector<16x64xbf16>, vector<64x128xbf16>, vector<16x128xf32> -> vector<16x128xf32>
    %107 = vector.extract_strided_slice %106 {offsets = [0, 0], sizes = [16, 32], strides = [1, 1]} : vector<16x128xf32> to vector<16x32xf32>
    %108 = vector.broadcast %13 : vector<1x32xf32> to vector<16x32xf32>
    %109 = arith.addf %107, %108 : vector<16x32xf32>
    %cst_43 = arith.constant 5.000000e-01 : f32
    %110 = vector.broadcast %cst_43 : f32 to vector<16x32xf32>
    %111 = arith.mulf %110, %109 : vector<16x32xf32>
    %112 = math.tanh %111 : vector<16x32xf32>
    %cst_44 = arith.constant 1.000000e+00 : f32
    %113 = vector.broadcast %cst_44 : f32 to vector<16x32xf32>
    %114 = arith.addf %113, %112 : vector<16x32xf32>
    %cst_45 = arith.constant 5.000000e-01 : f32
    %115 = vector.broadcast %cst_45 : f32 to vector<16x32xf32>
    %116 = arith.mulf %115, %114 : vector<16x32xf32>
    %117 = vector.extract_strided_slice %106 {offsets = [0, 32], sizes = [16, 32], strides = [1, 1]} : vector<16x128xf32> to vector<16x32xf32>
    %118 = vector.broadcast %14 : vector<1x32xf32> to vector<16x32xf32>
    %119 = arith.addf %117, %118 : vector<16x32xf32>
    %cst_46 = arith.constant 5.000000e-01 : f32
    %120 = vector.broadcast %cst_46 : f32 to vector<16x32xf32>
    %121 = arith.mulf %120, %119 : vector<16x32xf32>
    %122 = math.tanh %121 : vector<16x32xf32>
    %cst_47 = arith.constant 1.000000e+00 : f32
    %123 = vector.broadcast %cst_47 : f32 to vector<16x32xf32>
    %124 = arith.addf %123, %122 : vector<16x32xf32>
    %cst_48 = arith.constant 5.000000e-01 : f32
    %125 = vector.broadcast %cst_48 : f32 to vector<16x32xf32>
    %126 = arith.mulf %125, %124 : vector<16x32xf32>
    %127 = vector.extract_strided_slice %106 {offsets = [0, 64], sizes = [16, 32], strides = [1, 1]} : vector<16x128xf32> to vector<16x32xf32>
    %128 = vector.broadcast %15 : vector<1x32xf32> to vector<16x32xf32>
    %129 = arith.addf %127, %128 : vector<16x32xf32>
    %130 = vector.extract_strided_slice %106 {offsets = [0, 96], sizes = [16, 32], strides = [1, 1]} : vector<16x128xf32> to vector<16x32xf32>
    %131 = vector.broadcast %16 : vector<1x32xf32> to vector<16x32xf32>
    %132 = arith.addf %130, %131 : vector<16x32xf32>
    %133 = arith.mulf %116, %132 : vector<16x32xf32>
    %134 = arith.addf %129, %133 : vector<16x32xf32>
    %135 = math.tanh %134 : vector<16x32xf32>
    %cst_49 = arith.constant 1.000000e+00 : f32
    %136 = vector.broadcast %cst_49 : f32 to vector<16x32xf32>
    %137 = arith.subf %136, %126 : vector<16x32xf32>
    %138 = arith.mulf %137, %135 : vector<16x32xf32>
    %139 = arith.mulf %126, %92 : vector<16x32xf32>
    %140 = arith.addf %138, %139 : vector<16x32xf32>
    %141 = arith.truncf %140 : vector<16x32xf32> to vector<16x32xbf16>
    %cst_50 = arith.constant dense<0.000000e+00> : vector<32x32xf32>
    %142 = tpu.matmul %25, %141, %cst_50 {dimension_numbers = #tpu.dot_dimension_numbers<[1], [0], [0], [1], [0, 0, 1, 1], [], []>} : vector<32x16xbf16>, vector<16x32xbf16>, vector<32x32xf32> -> vector<32x32xf32>
    %143 = tpu.concatenate %142, %142, %142, %142 in 1 : vector<32x32xf32>, vector<32x32xf32>, vector<32x32xf32>, vector<32x32xf32> -> vector<32x128xf32>
    %144 = tpu.concatenate %143, %143, %143, %143, %143, %143, %143, %143 in 1 : vector<32x128xf32>, vector<32x128xf32>, vector<32x128xf32>, vector<32x128xf32>, vector<32x128xf32>, vector<32x128xf32>, vector<32x128xf32>, vector<32x128xf32> -> vector<32x1024xf32>
    %145 = arith.mulf %37, %144 : vector<32x1024xf32>
    %146 = arith.truncf %145 : vector<32x1024xf32> to vector<32x1024xbf16>
    %cst_51 = arith.constant dense<0.000000e+00> : vector<32x32xf32>
    %147 = tpu.matmul %146, %24, %cst_51 {dimension_numbers = #tpu.dot_dimension_numbers<[1], [0], [0], [1], [0, 0, 1, 1], [], []>} : vector<32x1024xbf16>, vector<1024x32xbf16>, vector<32x32xf32> -> vector<32x32xf32>
    %148 = arith.truncf %147 : vector<32x32xf32> to vector<32x32xbf16>
    %cst_52 = arith.constant dense<0.000000e+00> : vector<16x32xf32>
    %149 = tpu.matmul %26, %148, %cst_52 {dimension_numbers = #tpu.dot_dimension_numbers<[1], [0], [0], [1], [0, 0, 1, 1], [], []>} : vector<16x32xbf16>, vector<32x32xbf16>, vector<16x32xf32> -> vector<16x32xf32>
    %cst_53 = arith.constant 0.000000e+00 : f32
    %150 = vector.broadcast %cst_53 : f32 to vector<16x32xf32>
    %151 = arith.maximumf %149, %150 : vector<16x32xf32>
    %152 = arith.truncf %151 : vector<16x32xf32> to vector<16x32xbf16>
    %cst_54 = arith.constant dense<0.000000e+00> : vector<16x32xf32>
    %153 = tpu.matmul %152, %4, %cst_54 {dimension_numbers = #tpu.dot_dimension_numbers<[1], [0], [0], [1], [0, 0, 1, 1], [], []>} : vector<16x32xbf16>, vector<32x32xbf16>, vector<16x32xf32> -> vector<16x32xf32>
    %154 = vector.broadcast %17 : vector<1x32xf32> to vector<16x32xf32>
    %155 = arith.addf %153, %154 : vector<16x32xf32>
    %156 = arith.addf %155, %140 : vector<16x32xf32>
    %cst_55 = arith.constant 0.000000e+00 : f32
    %157 = vector.broadcast %cst_55 : f32 to vector<16x32xf32>
    %158 = arith.maximumf %156, %157 : vector<16x32xf32>
    %159 = arith.truncf %158 : vector<16x32xf32> to vector<16x32xbf16>
    %cst_56 = arith.constant dense<0.000000e+00> : vector<32x32xf32>
    %160 = tpu.matmul %25, %159, %cst_56 {dimension_numbers = #tpu.dot_dimension_numbers<[1], [0], [0], [1], [0, 0, 1, 1], [], []>} : vector<32x16xbf16>, vector<16x32xbf16>, vector<32x32xf32> -> vector<32x32xf32>
    %161 = tpu.concatenate %160, %160, %160, %160 in 1 : vector<32x32xf32>, vector<32x32xf32>, vector<32x32xf32>, vector<32x32xf32> -> vector<32x128xf32>
    %162 = tpu.concatenate %161, %161, %161, %161, %161, %161, %161, %161 in 1 : vector<32x128xf32>, vector<32x128xf32>, vector<32x128xf32>, vector<32x128xf32>, vector<32x128xf32>, vector<32x128xf32>, vector<32x128xf32>, vector<32x128xf32> -> vector<32x1024xf32>
    %163 = arith.mulf %37, %162 : vector<32x1024xf32>
    %164 = arith.truncf %163 : vector<32x1024xf32> to vector<32x1024xbf16>
    %cst_57 = arith.constant dense<0.000000e+00> : vector<32x32xf32>
    %165 = tpu.matmul %164, %24, %cst_57 {dimension_numbers = #tpu.dot_dimension_numbers<[1], [0], [0], [1], [0, 0, 1, 1], [], []>} : vector<32x1024xbf16>, vector<1024x32xbf16>, vector<32x32xf32> -> vector<32x32xf32>
    %166 = arith.truncf %165 : vector<32x32xf32> to vector<32x32xbf16>
    %cst_58 = arith.constant dense<0.000000e+00> : vector<16x32xf32>
    %167 = tpu.matmul %26, %166, %cst_58 {dimension_numbers = #tpu.dot_dimension_numbers<[1], [0], [0], [1], [0, 0, 1, 1], [], []>} : vector<16x32xbf16>, vector<32x32xbf16>, vector<16x32xf32> -> vector<16x32xf32>
    %cst_59 = arith.constant 0.000000e+00 : f32
    %168 = vector.broadcast %cst_59 : f32 to vector<16x32xf32>
    %169 = arith.maximumf %167, %168 : vector<16x32xf32>
    %170 = arith.truncf %169 : vector<16x32xf32> to vector<16x32xbf16>
    %cst_60 = arith.constant dense<0.000000e+00> : vector<16x64xf32>
    %171 = tpu.matmul %170, %5, %cst_60 {dimension_numbers = #tpu.dot_dimension_numbers<[1], [0], [0], [1], [0, 0, 1, 1], [], []>} : vector<16x32xbf16>, vector<32x64xbf16>, vector<16x64xf32> -> vector<16x64xf32>
    %172 = vector.extract_strided_slice %171 {offsets = [0, 0], sizes = [16, 32], strides = [1, 1]} : vector<16x64xf32> to vector<16x32xf32>
    %173 = vector.broadcast %18 : vector<1x32xf32> to vector<16x32xf32>
    %174 = arith.addf %172, %173 : vector<16x32xf32>
    %175 = arith.addf %174, %158 : vector<16x32xf32>
    %176 = vector.extract_strided_slice %171 {offsets = [0, 32], sizes = [16, 32], strides = [1, 1]} : vector<16x64xf32> to vector<16x32xf32>
    %177 = vector.broadcast %19 : vector<1x32xf32> to vector<16x32xf32>
    %178 = arith.addf %176, %177 : vector<16x32xf32>
    %cst_61 = arith.constant 0.000000e+00 : f32
    %179 = vector.broadcast %cst_61 : f32 to vector<16x32xf32>
    %180 = arith.cmpf ogt, %178, %179 : vector<16x32xf32>
    %cst_62 = arith.constant 0.000000e+00 : f32
    %181 = vector.broadcast %cst_62 : f32 to vector<16x32xf32>
    %182 = arith.minimumf %178, %181 : vector<16x32xf32>
    %183 = math.exp %182 : vector<16x32xf32>
    %cst_63 = arith.constant 1.000000e+00 : f32
    %184 = vector.broadcast %cst_63 : f32 to vector<16x32xf32>
    %185 = arith.subf %183, %184 : vector<16x32xf32>
    %cst_64 = arith.constant 1.67326319 : f32
    %186 = vector.broadcast %cst_64 : f32 to vector<16x32xf32>
    %187 = arith.mulf %186, %185 : vector<16x32xf32>
    %188 = arith.select %180, %178, %187 : vector<16x32xi1>, vector<16x32xf32>
    %cst_65 = arith.constant 1.05070102 : f32
    %189 = vector.broadcast %cst_65 : f32 to vector<16x32xf32>
    %190 = arith.mulf %189, %188 : vector<16x32xf32>
    %191 = arith.truncf %190 : vector<16x32xf32> to vector<16x32xbf16>
    %cst_66 = arith.constant dense<0.000000e+00> : vector<2x32xf32>
    %192 = tpu.matmul %27, %191, %cst_66 {dimension_numbers = #tpu.dot_dimension_numbers<[1], [0], [0], [1], [0, 0, 1, 1], [], []>} : vector<2x16xbf16>, vector<16x32xbf16>, vector<2x32xf32> -> vector<2x32xf32>
    %193 = math.tanh %192 : vector<2x32xf32>
    %194 = arith.mulf %140, %175 : vector<16x32xf32>
    %195 = arith.truncf %194 : vector<16x32xf32> to vector<16x32xbf16>
    %cst_67 = arith.constant dense<0.000000e+00> : vector<16x32xf32>
    %196 = tpu.matmul %195, %6, %cst_67 {dimension_numbers = #tpu.dot_dimension_numbers<[1], [0], [0], [1], [0, 0, 1, 1], [], []>} : vector<16x32xbf16>, vector<32x32xbf16>, vector<16x32xf32> -> vector<16x32xf32>
    %197 = vector.broadcast %20 : vector<1x32xf32> to vector<16x32xf32>
    %198 = arith.addf %196, %197 : vector<16x32xf32>
    %cst_68 = arith.constant 0.000000e+00 : f32
    %199 = vector.broadcast %cst_68 : f32 to vector<16x32xf32>
    %200 = arith.cmpf ogt, %198, %199 : vector<16x32xf32>
    %cst_69 = arith.constant 0.000000e+00 : f32
    %201 = vector.broadcast %cst_69 : f32 to vector<16x32xf32>
    %202 = arith.minimumf %198, %201 : vector<16x32xf32>
    %203 = math.exp %202 : vector<16x32xf32>
    %cst_70 = arith.constant 1.000000e+00 : f32
    %204 = vector.broadcast %cst_70 : f32 to vector<16x32xf32>
    %205 = arith.subf %203, %204 : vector<16x32xf32>
    %cst_71 = arith.constant 1.67326319 : f32
    %206 = vector.broadcast %cst_71 : f32 to vector<16x32xf32>
    %207 = arith.mulf %206, %205 : vector<16x32xf32>
    %208 = arith.select %200, %198, %207 : vector<16x32xi1>, vector<16x32xf32>
    %cst_72 = arith.constant 1.05070102 : f32
    %209 = vector.broadcast %cst_72 : f32 to vector<16x32xf32>
    %210 = arith.mulf %209, %208 : vector<16x32xf32>
    %211 = arith.truncf %210 : vector<16x32xf32> to vector<16x32xbf16>
    %cst_73 = arith.constant dense<0.000000e+00> : vector<2x32xf32>
    %212 = tpu.matmul %27, %211, %cst_73 {dimension_numbers = #tpu.dot_dimension_numbers<[1], [0], [0], [1], [0, 0, 1, 1], [], []>} : vector<2x16xbf16>, vector<16x32xbf16>, vector<2x32xf32> -> vector<2x32xf32>
    %213 = math.tanh %212 : vector<2x32xf32>
    %214 = arith.truncf %213 : vector<2x32xf32> to vector<2x32xbf16>
    %cst_74 = arith.constant dense<0.000000e+00> : vector<2x32xf32>
    %215 = tpu.matmul %214, %7, %cst_74 {dimension_numbers = #tpu.dot_dimension_numbers<[1], [0], [0], [1], [0, 0, 1, 1], [], []>} : vector<2x32xbf16>, vector<32x32xbf16>, vector<2x32xf32> -> vector<2x32xf32>
    %216 = vector.broadcast %21 : vector<1x32xf32> to vector<2x32xf32>
    %217 = arith.addf %215, %216 : vector<2x32xf32>
    %cst_75 = arith.constant 0.000000e+00 : f32
    %218 = vector.broadcast %cst_75 : f32 to vector<2x32xf32>
    %219 = arith.maximumf %217, %218 : vector<2x32xf32>
    %220 = arith.truncf %219 : vector<2x32xf32> to vector<2x32xbf16>
    %cst_76 = arith.constant dense<0.000000e+00> : vector<2x32xf32>
    %221 = tpu.matmul %220, %8, %cst_76 {dimension_numbers = #tpu.dot_dimension_numbers<[1], [0], [0], [1], [0, 0, 1, 1], [], []>} : vector<2x32xbf16>, vector<32x32xbf16>, vector<2x32xf32> -> vector<2x32xf32>
    %222 = vector.broadcast %22 : vector<1x32xf32> to vector<2x32xf32>
    %223 = arith.addf %221, %222 : vector<2x32xf32>
    %224 = arith.truncf %193 : vector<2x32xf32> to vector<2x32xbf16>
    %cst_77 = arith.constant dense<0.000000e+00> : vector<2x32xf32>
    %225 = tpu.matmul %224, %9, %cst_77 {dimension_numbers = #tpu.dot_dimension_numbers<[1], [0], [0], [1], [0, 0, 1, 1], [], []>} : vector<2x32xbf16>, vector<32x32xbf16>, vector<2x32xf32> -> vector<2x32xf32>
    %226 = vector.broadcast %23 : vector<1x32xf32> to vector<2x32xf32>
    %227 = arith.addf %225, %226 : vector<2x32xf32>
    %228 = tpu.concatenate %223, %227 in 1 : vector<2x32xf32>, vector<2x32xf32> -> vector<2x64xf32>
    %c0_78 = arith.constant 0 : index
    %c0_79 = arith.constant 0 : index
    %229 = vector.load %arg11[%c0_78, %c0_79] : memref<2x64xf32, #tpu.memory_space<vmem>>, vector<2x64xf32>
    tpu.vector_store %arg11[%c0_78, %c0_79], %228 {strides = array<i32>} : memref<2x64xf32, #tpu.memory_space<vmem>>, vector<2x64xf32>,
    return
  }
}

</mosaic_0001>

<llo_original>
// kernel: tpu_custom_call.1
$region0: #{tpu_custom_call.1}
  #allocation0 [shape = 'u32[]', space=smem, size = 0x4, offset = 0x4, fixed_abs, tag = 'smem constant byte address 0x4 - core index']
  #allocation1 [shape = 'u32[144,128]{1,0:T(1,128)}', space=vmem, size = 0x12000, scoped, tag = 'internal scratch']
  %s0 = inlined_call_operand.vmem [shape: f32[16,16], index: 0, kind: input, shape index: {}]
  %s1 = inlined_call_operand.vmem [shape: f32[32,8], index: 1, kind: input, shape index: {}]
  %s2 = inlined_call_operand.vmem [shape: bf16[32,16], index: 2, kind: input, shape index: {}]
  %s3 = inlined_call_operand.vmem [shape: bf16[16,32], index: 3, kind: input, shape index: {}]
  %s4 = inlined_call_operand.vmem [shape: bf16[2,16], index: 4, kind: input, shape index: {}]
  %s5 = inlined_call_operand.vmem [shape: bf16[1024,32], index: 5, kind: input, shape index: {}]
  %s6 = inlined_call_operand.vmem [shape: bf16[24,32], index: 6, kind: input, shape index: {}]
  %s7 = inlined_call_operand.vmem [shape: bf16[32,1024], index: 7, kind: input, shape index: {}]
  %s8 = inlined_call_operand.vmem [shape: bf16[64,128], index: 8, kind: input, shape index: {}]
  %s9 = inlined_call_operand.vmem [shape: bf16[32,224], index: 9, kind: input, shape index: {}]
  %s10 = inlined_call_operand.vmem [shape: f32[13,32], index: 10, kind: input, shape index: {}]
  %s11 = inlined_call_operand.hbm [shape: f32[2,64], index: 11, kind: output, shape index: {}]
  %s12 = sld [smem:[#allocation0]]
  $region54: #{tpu_custom_call.1} parent=0
    _
  %s14 = ssub.s32 1, %s12
  %s15 = scalar_select 0, %s14, %s12
  $region1: #{tpu_custom_call.1} parent=0
    #allocation2 [shape = 'u8[1024]{0}', space=vmem, size = 0x400, scoped, tag = 'output window, operand 0, single buffered']
    #allocation3 [shape = 's32[1]{0}', space=sflag, size = 0x4, scoped, tag = 'scoped memory for tpu_custom_call.1']
    %16 = vsyncpa [#allocation3], 0
    // Predicated region
    $region2: #{tpu_custom_call.1} parent=1 // pred_check
      _
    $region3: #{tpu_custom_call.1} parent=1 // pred_check_branch
      %18 = sbr.rel (0) target = $region5
    $region4: #{tpu_custom_call.1} parent=1 // pred_region
      _
    $region5: #{tpu_custom_call.1} parent=1 // pred_fallthru
      _
    // Predicated region
    $region6: #{tpu_custom_call.1} parent=1 // pred_check
      _
    $region7: #{tpu_custom_call.1} parent=1 // pred_check_branch
      %20 = sbr.rel (0) target = $region9
    $region8: #{tpu_custom_call.1} parent=1 // pred_region
      _
    $region9: #{tpu_custom_call.1} parent=1 // pred_fallthru
      _
    // Predicated region
    $region10: #{tpu_custom_call.1} parent=1 // pred_check
      _
    $region11: #{tpu_custom_call.1} parent=1 // pred_check_branch
      %22 = sbr.rel (0) target = $region13
    $region12: #{tpu_custom_call.1} parent=1 // pred_region
      _
    $region13: #{tpu_custom_call.1} parent=1 // pred_fallthru
      _
    // Predicated region
    $region14: #{tpu_custom_call.1} parent=1 // pred_check
      _
    $region15: #{tpu_custom_call.1} parent=1 // pred_check_branch
      %24 = sbr.rel (0) target = $region17
    $region16: #{tpu_custom_call.1} parent=1 // pred_region
      _
    $region17: #{tpu_custom_call.1} parent=1 // pred_fallthru
      _
    // Predicated region
    $region18: #{tpu_custom_call.1} parent=1 // pred_check
      _
    $region19: #{tpu_custom_call.1} parent=1 // pred_check_branch
      %26 = sbr.rel (0) target = $region21
    $region20: #{tpu_custom_call.1} parent=1 // pred_region
      _
    $region21: #{tpu_custom_call.1} parent=1 // pred_fallthru
      _
    // Predicated region
    $region22: #{tpu_custom_call.1} parent=1 // pred_check
      _
    $region23: #{tpu_custom_call.1} parent=1 // pred_check_branch
      %28 = sbr.rel (0) target = $region25
    $region24: #{tpu_custom_call.1} parent=1 // pred_region
      _
    $region25: #{tpu_custom_call.1} parent=1 // pred_fallthru
      _
    // Predicated region
    $region26: #{tpu_custom_call.1} parent=1 // pred_check
      _
    $region27: #{tpu_custom_call.1} parent=1 // pred_check_branch
      %30 = sbr.rel (0) target = $region29
    $region28: #{tpu_custom_call.1} parent=1 // pred_region
      _
    $region29: #{tpu_custom_call.1} parent=1 // pred_fallthru
      _
    // Predicated region
    $region30: #{tpu_custom_call.1} parent=1 // pred_check
      _
    $region31: #{tpu_custom_call.1} parent=1 // pred_check_branch
      %32 = sbr.rel (0) target = $region33
    $region32: #{tpu_custom_call.1} parent=1 // pred_region
      _
    $region33: #{tpu_custom_call.1} parent=1 // pred_fallthru
      _
    // Predicated region
    $region34: #{tpu_custom_call.1} parent=1 // pred_check
      _
    $region35: #{tpu_custom_call.1} parent=1 // pred_check_branch
      %34 = sbr.rel (0) target = $region37
    $region36: #{tpu_custom_call.1} parent=1 // pred_region
      _
    $region37: #{tpu_custom_call.1} parent=1 // pred_fallthru
      _
    // Predicated region
    $region38: #{tpu_custom_call.1} parent=1 // pred_check
      _
    $region39: #{tpu_custom_call.1} parent=1 // pred_check_branch
      %36 = sbr.rel (0) target = $region41
    $region40: #{tpu_custom_call.1} parent=1 // pred_region
      _
    $region41: #{tpu_custom_call.1} parent=1 // pred_fallthru
      _
    // Predicated region
    $region42: #{tpu_custom_call.1} parent=1 // pred_check
      _
    $region43: #{tpu_custom_call.1} parent=1 // pred_check_branch
      %38 = sbr.rel (0) target = $region45
    $region44: #{tpu_custom_call.1} parent=1 // pred_region
      _
    $region45: #{tpu_custom_call.1} parent=1 // pred_fallthru
      _
    %v40 = vld [vmem:[%s6] sm:$0xf]
    %v41 = vld [vmem:[%s6 + $0x4] sm:$0xf]
    %v42 = vld [vmem:[%s6 + $0x8] sm:$0xf]
    %v43 = vld [vmem:[%s8] sm:$0xf]
    %v44 = vld [vmem:[%s8 + $0x4] sm:$0xf]
    %v45 = vld [vmem:[%s8 + $0x8] sm:$0xf]
    %v46 = vld [vmem:[%s8 + $0xc] sm:$0xf]
    %v47 = vld [vmem:[%s8 + $0x10] sm:$0xf]
    %v48 = vld [vmem:[%s8 + $0x14] sm:$0xf]
    %v49 = vld [vmem:[%s8 + $0x18] sm:$0xf]
    %v50 = vld [vmem:[%s8 + $0x1c] sm:$0xf]
    %v51 = vld [vmem:[%s9] sm:$0xff]
    %v52 = vld [vmem:[%s9 + $0x8] sm:$0xff]
    %v53 = vld [vmem:[%s9 + $0x10] sm:$0xff]
    %v54 = vld [vmem:[%s9 + $0x18] sm:$0xff]
    %v55 = vld [vmem:[%s10] sm:$0xff]
    %v56 = vld [vmem:[%s10 + $0x8] sm:$0x1f]
    %v57 = vld [vmem:[%s5] sm:$0xf]
    %v58 = vld [vmem:[%s5 + $0x4] sm:$0xf]
    %v59 = vld [vmem:[%s5 + $0x8] sm:$0xf]
    %v60 = vld [vmem:[%s5 + $0xc] sm:$0xf]
    %v61 = vld [vmem:[%s5 + $0x10] sm:$0xf]
    %v62 = vld [vmem:[%s5 + $0x14] sm:$0xf]
    %v63 = vld [vmem:[%s5 + $0x18] sm:$0xf]
    %v64 = vld [vmem:[%s5 + $0x1c] sm:$0xf]
    %v65 = vld [vmem:[%s5 + $0x20] sm:$0xf]
    %v66 = vld [vmem:[%s5 + $0x24] sm:$0xf]
    %v67 = vld [vmem:[%s5 + $0x28] sm:$0xf]
    %v68 = vld [vmem:[%s5 + $0x2c] sm:$0xf]
    %v69 = vld [vmem:[%s5 + $0x30] sm:$0xf]
    %v70 = vld [vmem:[%s5 + $0x34] sm:$0xf]
    %v71 = vld [vmem:[%s5 + $0x38] sm:$0xf]
    %v72 = vld [vmem:[%s5 + $0x3c] sm:$0xf]
    %v73 = vld [vmem:[%s5 + $0x40] sm:$0xf]
    %v74 = vld [vmem:[%s5 + $0x44] sm:$0xf]
    %v75 = vld [vmem:[%s5 + $0x48] sm:$0xf]
    %v76 = vld [vmem:[%s5 + $0x4c] sm:$0xf]
    %v77 = vld [vmem:[%s5 + $0x50] sm:$0xf]
    %v78 = vld [vmem:[%s5 + $0x54] sm:$0xf]
    %v79 = vld [vmem:[%s5 + $0x58] sm:$0xf]
    %v80 = vld [vmem:[%s5 + $0x5c] sm:$0xf]
    %v81 = vld [vmem:[%s5 + $0x60] sm:$0xf]
    %v82 = vld [vmem:[%s5 + $0x64] sm:$0xf]
    %v83 = vld [vmem:[%s5 + $0x68] sm:$0xf]
    %v84 = vld [vmem:[%s5 + $0x6c] sm:$0xf]
    %v85 = vld [vmem:[%s5 + $0x70] sm:$0xf]
    %v86 = vld [vmem:[%s5 + $0x74] sm:$0xf]
    %v87 = vld [vmem:[%s5 + $0x78] sm:$0xf]
    %v88 = vld [vmem:[%s5 + $0x7c] sm:$0xf]
    %v89 = vld [vmem:[%s5 + $0x80] sm:$0xf]
    %v90 = vld [vmem:[%s5 + $0x84] sm:$0xf]
    %v91 = vld [vmem:[%s5 + $0x88] sm:$0xf]
    %v92 = vld [vmem:[%s5 + $0x8c] sm:$0xf]
    %v93 = vld [vmem:[%s5 + $0x90] sm:$0xf]
    %v94 = vld [vmem:[%s5 + $0x94] sm:$0xf]
    %v95 = vld [vmem:[%s5 + $0x98] sm:$0xf]
    %v96 = vld [vmem:[%s5 + $0x9c] sm:$0xf]
    %v97 = vld [vmem:[%s5 + $0xa0] sm:$0xf]
    %v98 = vld [vmem:[%s5 + $0xa4] sm:$0xf]
    %v99 = vld [vmem:[%s5 + $0xa8] sm:$0xf]
    %v100 = vld [vmem:[%s5 + $0xac] sm:$0xf]
    %v101 = vld [vmem:[%s5 + $0xb0] sm:$0xf]
    %v102 = vld [vmem:[%s5 + $0xb4] sm:$0xf]
    %v103 = vld [vmem:[%s5 + $0xb8] sm:$0xf]
    %v104 = vld [vmem:[%s5 + $0xbc] sm:$0xf]
    %v105 = vld [vmem:[%s5 + $0xc0] sm:$0xf]
    %v106 = vld [vmem:[%s5 + $0xc4] sm:$0xf]
    %v107 = vld [vmem:[%s5 + $0xc8] sm:$0xf]
    %v108 = vld [vmem:[%s5 + $0xcc] sm:$0xf]
    %v109 = vld [vmem:[%s5 + $0xd0] sm:$0xf]
    %v110 = vld [vmem:[%s5 + $0xd4] sm:$0xf]
    %v111 = vld [vmem:[%s5 + $0xd8] sm:$0xf]
    %v112 = vld [vmem:[%s5 + $0xdc] sm:$0xf]
    %v113 = vld [vmem:[%s5 + $0xe0] sm:$0xf]
    %v114 = vld [vmem:[%s5 + $0xe4] sm:$0xf]
    %v115 = vld [vmem:[%s5 + $0xe8] sm:$0xf]
    %v116 = vld [vmem:[%s5 + $0xec] sm:$0xf]
    %v117 = vld [vmem:[%s5 + $0xf0] sm:$0xf]
    %v118 = vld [vmem:[%s5 + $0xf4] sm:$0xf]
    %v119 = vld [vmem:[%s5 + $0xf8] sm:$0xf]
    %v120 = vld [vmem:[%s5 + $0xfc] sm:$0xf]
    %v121 = vld [vmem:[%s5 + $0x100] sm:$0xf]
    %v122 = vld [vmem:[%s5 + $0x104] sm:$0xf]
    %v123 = vld [vmem:[%s5 + $0x108] sm:$0xf]
    %v124 = vld [vmem:[%s5 + $0x10c] sm:$0xf]
    %v125 = vld [vmem:[%s5 + $0x110] sm:$0xf]
    %v126 = vld [vmem:[%s5 + $0x114] sm:$0xf]
    %v127 = vld [vmem:[%s5 + $0x118] sm:$0xf]
    %v128 = vld [vmem:[%s5 + $0x11c] sm:$0xf]
    %v129 = vld [vmem:[%s5 + $0x120] sm:$0xf]
    %v130 = vld [vmem:[%s5 + $0x124] sm:$0xf]
    %v131 = vld [vmem:[%s5 + $0x128] sm:$0xf]
    %v132 = vld [vmem:[%s5 + $0x12c] sm:$0xf]
    %v133 = vld [vmem:[%s5 + $0x130] sm:$0xf]
    %v134 = vld [vmem:[%s5 + $0x134] sm:$0xf]
    %v135 = vld [vmem:[%s5 + $0x138] sm:$0xf]
    %v136 = vld [vmem:[%s5 + $0x13c] sm:$0xf]
    %v137 = vld [vmem:[%s5 + $0x140] sm:$0xf]
    %v138 = vld [vmem:[%s5 + $0x144] sm:$0xf]
    %v139 = vld [vmem:[%s5 + $0x148] sm:$0xf]
    %v140 = vld [vmem:[%s5 + $0x14c] sm:$0xf]
    %v141 = vld [vmem:[%s5 + $0x150] sm:$0xf]
    %v142 = vld [vmem:[%s5 + $0x154] sm:$0xf]
    %v143 = vld [vmem:[%s5 + $0x158] sm:$0xf]
    %v144 = vld [vmem:[%s5 + $0x15c] sm:$0xf]
    %v145 = vld [vmem:[%s5 + $0x160] sm:$0xf]
    %v146 = vld [vmem:[%s5 + $0x164] sm:$0xf]
    %v147 = vld [vmem:[%s5 + $0x168] sm:$0xf]
    %v148 = vld [vmem:[%s5 + $0x16c] sm:$0xf]
    %v149 = vld [vmem:[%s5 + $0x170] sm:$0xf]
    %v150 = vld [vmem:[%s5 + $0x174] sm:$0xf]
    %v151 = vld [vmem:[%s5 + $0x178] sm:$0xf]
    %v152 = vld [vmem:[%s5 + $0x17c] sm:$0xf]
    %v153 = vld [vmem:[%s5 + $0x180] sm:$0xf]
    %v154 = vld [vmem:[%s5 + $0x184] sm:$0xf]
    %v155 = vld [vmem:[%s5 + $0x188] sm:$0xf]
    %v156 = vld [vmem:[%s5 + $0x18c] sm:$0xf]
    %v157 = vld [vmem:[%s5 + $0x190] sm:$0xf]
    %v158 = vld [vmem:[%s5 + $0x194] sm:$0xf]
    %v159 = vld [vmem:[%s5 + $0x198] sm:$0xf]
    %v160 = vld [vmem:[%s5 + $0x19c] sm:$0xf]
    %v161 = vld [vmem:[%s5 + $0x1a0] sm:$0xf]
    %v162 = vld [vmem:[%s5 + $0x1a4] sm:$0xf]
    %v163 = vld [vmem:[%s5 + $0x1a8] sm:$0xf]
    %v164 = vld [vmem:[%s5 + $0x1ac] sm:$0xf]
    %v165 = vld [vmem:[%s5 + $0x1b0] sm:$0xf]
    %v166 = vld [vmem:[%s5 + $0x1b4] sm:$0xf]
    %v167 = vld [vmem:[%s5 + $0x1b8] sm:$0xf]
    %v168 = vld [vmem:[%s5 + $0x1bc] sm:$0xf]
    %v169 = vld [vmem:[%s5 + $0x1c0] sm:$0xf]
    %v170 = vld [vmem:[%s5 + $0x1c4] sm:$0xf]
    %v171 = vld [vmem:[%s5 + $0x1c8] sm:$0xf]
    %v172 = vld [vmem:[%s5 + $0x1cc] sm:$0xf]
    %v173 = vld [vmem:[%s5 + $0x1d0] sm:$0xf]
    %v174 = vld [vmem:[%s5 + $0x1d4] sm:$0xf]
    %v175 = vld [vmem:[%s5 + $0x1d8] sm:$0xf]
    %v176 = vld [vmem:[%s5 + $0x1dc] sm:$0xf]
    %v177 = vld [vmem:[%s5 + $0x1e0] sm:$0xf]
    %v178 = vld [vmem:[%s5 + $0x1e4] sm:$0xf]
    %v179 = vld [vmem:[%s5 + $0x1e8] sm:$0xf]
    %v180 = vld [vmem:[%s5 + $0x1ec] sm:$0xf]
    %v181 = vld [vmem:[%s5 + $0x1f0] sm:$0xf]
    %v182 = vld [vmem:[%s5 + $0x1f4] sm:$0xf]
    %v183 = vld [vmem:[%s5 + $0x1f8] sm:$0xf]
    %v184 = vld [vmem:[%s5 + $0x1fc] sm:$0xf]
    %v185 = vld [vmem:[%s2] sm:$0xf]
    %v186 = vld [vmem:[%s2 + $0x4] sm:$0xf]
    %v187 = vld [vmem:[%s2 + $0x8] sm:$0xf]
    %v188 = vld [vmem:[%s2 + $0xc] sm:$0xf]
    %v189 = vld [vmem:[%s3] sm:$0xf]
    %v190 = vld [vmem:[%s3 + $0x4] sm:$0xf]
    %v191 = vld [vmem:[%s4] sm:$0x1]
    %v192 = vld [vmem:[%s1] sm:$0xff]
    %v193 = vld [vmem:[%s1 + $0x8] sm:$0xff]
    %v194 = vld [vmem:[%s1 + $0x10] sm:$0xff]
    %v195 = vld [vmem:[%s1 + $0x18] sm:$0xff]
    %v196 = vpack.c.bf16 %v193, %v192
    %v197 = vpack.c.bf16 %v195, %v194
    %v198 = vlaneseq
    %v199 = vshrl.u32 %v198, 7
    %v200 = vsub.s32 1, %v199
    %v201 = vrot.slane %v55, %v200
    %vm202 = vcmask 64512
    %v204 = vsel %vm202, %v196, 0
    %v207 = vsel %vm202, %v197, 0
    %vm209 = vcmask 1043456
    %v211 = vsel %vm209, %v42, 0
    %213 = vmatprep.subr.bf16.mxu0 0
    %214 = vmatpush1.bf16.msra.mxu0 %v211
    %215 = vmatprep.subr.bf16.mxu0 0
    %216 = vmatpush1.bf16.msra.mxu0 0
    %217 = vmatprep.subr.bf16.mxu0 0
    %218 = vmatpush1.bf16.msra.mxu0 0
    %219 = vmatprep.subr.bf16.mxu0 0
    %220 = vmatpush1.bf16.msra.mxu0 0
    %221 = vmatprep.subr.bf16.mxu0 0
    %222 = vmatpush1.bf16.msra.mxu0 0
    %223 = vmatprep.subr.bf16.mxu0 0
    %224 = vmatpush1.bf16.msra.mxu0 0
    %225 = vmatprep.subr.bf16.mxu0 0
    %226 = vmatpush1.bf16.msra.mxu0 0
    %227 = vmatprep.subr.bf16.mxu0 0
    %228 = vmatpush1.bf16.msra.mxu0 0
    %229 = vmatprep.subr.bf16.mxu0 0
    %230 = vmatpush1.bf16.msra.mxu0 0
    %231 = vmatprep.subr.bf16.mxu0 0
    %232 = vmatpush1.bf16.msra.mxu0 0
    %233 = vmatprep.subr.bf16.mxu0 0
    %234 = vmatpush1.bf16.msra.mxu0 0
    %235 = vmatprep.subr.bf16.mxu0 0
    %236 = vmatpush1.bf16.msra.mxu0 0
    %237 = vmatprep.subr.bf16.mxu0 0
    %238 = vmatpush1.bf16.msra.mxu0 0
    %239 = vmatprep.subr.bf16.mxu0 0
    %240 = vmatpush1.bf16.msra.mxu0 0
    %241 = vmatprep.subr.bf16.mxu0 0
    %242 = vmatpush1.bf16.msra.mxu0 0
    %243 = vmatprep.subr.bf16.mxu0 0
    %244 = vmatpush1.bf16.msra.mxu0 0
    %245 = vmatprep.mubr.bf16.mxu0 0
    %246 = vmatmul.mubr.bf16.gmra.mrb[0].mxu0 %v204
    %v247 = vpop.f32.mrb[0].mxu0
    %v248 = vadd.f32 %v201, %v247
    %v249 = vpop.f32.mrb[0].mxu0
    %v250 = vpop.f32.mrb[0].mxu0
    %v251 = vadd.f32 %v201, %v250
    %v252 = vpop.f32.mrb[0].mxu0
    %253 = vmatprep.mubr.bf16.mxu0 0
    %254 = vmatmul.mubr.bf16.gmra.mrb[0].mxu0 %v207
    %v255 = vpop.f32.mrb[0].mxu0
    %v256 = vadd.f32 %v201, %v255
    %v257 = vpop.f32.mrb[0].mxu0
    %v258 = vpop.f32.mrb[0].mxu0
    %v259 = vadd.f32 %v201, %v258
    %v260 = vpop.f32.mrb[0].mxu0
    %261 = vdwg.mxu0
    %v262 = vmax.f32 %v248, 0.0
    %v263 = vmax.f32 %v251, 0.0
    %v264 = vmax.f32 %v256, 0.0
    %v265 = vmax.f32 %v259, 0.0
    %v266 = vld [vmem:[%s7] sm:$0xff]
    %v267 = vld [vmem:[%s7 + $0x8] sm:$0xff]
    %v268 = vld [vmem:[%s7 + $0x10] sm:$0xff]
    %v269 = vld [vmem:[%s7 + $0x18] sm:$0xff]
    %v270 = vld [vmem:[%s7 + $0x20] sm:$0xff]
    %v271 = vld [vmem:[%s7 + $0x28] sm:$0xff]
    %v272 = vld [vmem:[%s7 + $0x30] sm:$0xff]
    %v273 = vld [vmem:[%s7 + $0x38] sm:$0xff]
    %v274 = vld [vmem:[%s7 + $0x40] sm:$0xff]
    %v275 = vld [vmem:[%s7 + $0x48] sm:$0xff]
    %v276 = vld [vmem:[%s7 + $0x50] sm:$0xff]
    %v277 = vld [vmem:[%s7 + $0x58] sm:$0xff]
    %v278 = vld [vmem:[%s7 + $0x60] sm:$0xff]
    %v279 = vld [vmem:[%s7 + $0x68] sm:$0xff]
    %v280 = vld [vmem:[%s7 + $0x70] sm:$0xff]
    %v281 = vld [vmem:[%s7 + $0x78] sm:$0xff]
    %v282 = vpack.c.bf16 %v263, %v262
    %v283 = vpack.c.bf16 %v265, %v264
    %v300 = vunpack.c.l.b16 %v266
    %v301 = vunpack.c.h.b16 %v266
    %v302 = vunpack.c.l.b16 %v267
    %v303 = vunpack.c.h.b16 %v267
    %v304 = vunpack.c.l.b16 %v268
    %v305 = vunpack.c.h.b16 %v268
    %v306 = vunpack.c.l.b16 %v269
    %v307 = vunpack.c.h.b16 %v269
    %v308 = vunpack.c.l.b16 %v270
    %v309 = vunpack.c.h.b16 %v270
    %v310 = vunpack.c.l.b16 %v271
    %v311 = vunpack.c.h.b16 %v271
    %v312 = vunpack.c.l.b16 %v272
    %v313 = vunpack.c.h.b16 %v272
    %v314 = vunpack.c.l.b16 %v273
    %v315 = vunpack.c.h.b16 %v273
    %v316 = vunpack.c.l.b16 %v274
    %v317 = vunpack.c.h.b16 %v274
    %v318 = vunpack.c.l.b16 %v275
    %v319 = vunpack.c.h.b16 %v275
    %v320 = vunpack.c.l.b16 %v276
    %v321 = vunpack.c.h.b16 %v276
    %v322 = vunpack.c.l.b16 %v277
    %v323 = vunpack.c.h.b16 %v277
    %v324 = vunpack.c.l.b16 %v278
    %v325 = vunpack.c.h.b16 %v278
    %v326 = vunpack.c.l.b16 %v279
    %v327 = vunpack.c.h.b16 %v279
    %v328 = vunpack.c.l.b16 %v280
    %v329 = vunpack.c.h.b16 %v280
    %v330 = vunpack.c.l.b16 %v281
    %v331 = vunpack.c.h.b16 %v281
    %v332 = vpack.c.b16 %v308, %v300
    %v333 = vpack.c.b16 %v309, %v301
    %v334 = vpack.c.b16 %v310, %v302
    %v335 = vpack.c.b16 %v311, %v303
    %v336 = vpack.c.b16 %v312, %v304
    %v337 = vpack.c.b16 %v313, %v305
    %v338 = vpack.c.b16 %v314, %v306
    %v339 = vpack.c.b16 %v315, %v307
    %v340 = vpack.c.b16 %v324, %v316
    %v341 = vpack.c.b16 %v325, %v317
    %v342 = vpack.c.b16 %v326, %v318
    %v343 = vpack.c.b16 %v327, %v319
    %v344 = vpack.c.b16 %v328, %v320
    %v345 = vpack.c.b16 %v329, %v321
    %v346 = vpack.c.b16 %v330, %v322
    %v347 = vpack.c.b16 %v331, %v323
    %vm364 = vcmask 261120
    %v366 = vsel %vm364, %v282, 0
    %v369 = vsel %vm364, %v283, 0
    %371 = vmatprep.subr.bf16.mxu0 %v333
    %372 = vmatpush1.bf16.msra.mxu0 %v332
    %373 = vmatprep.subr.bf16.mxu0 %v341
    %374 = vmatpush1.bf16.msra.mxu0 %v340
    %375 = vmatprep.subr.bf16.mxu0 0
    %376 = vmatpush1.bf16.msra.mxu0 0
    %377 = vmatprep.subr.bf16.mxu0 0
    %378 = vmatpush1.bf16.msra.mxu0 0
    %379 = vmatprep.subr.bf16.mxu0 0
    %380 = vmatpush1.bf16.msra.mxu0 0
    %381 = vmatprep.subr.bf16.mxu0 0
    %382 = vmatpush1.bf16.msra.mxu0 0
    %383 = vmatprep.subr.bf16.mxu0 0
    %384 = vmatpush1.bf16.msra.mxu0 0
    %385 = vmatprep.subr.bf16.mxu0 0
    %386 = vmatpush1.bf16.msra.mxu0 0
    %387 = vmatprep.subr.bf16.mxu0 0
    %388 = vmatpush1.bf16.msra.mxu0 0
    %389 = vmatprep.subr.bf16.mxu0 0
    %390 = vmatpush1.bf16.msra.mxu0 0
    %391 = vmatprep.subr.bf16.mxu0 0
    %392 = vmatpush1.bf16.msra.mxu0 0
    %393 = vmatprep.subr.bf16.mxu0 0
    %394 = vmatpush1.bf16.msra.mxu0 0
    %395 = vmatprep.subr.bf16.mxu0 0
    %396 = vmatpush1.bf16.msra.mxu0 0
    %397 = vmatprep.subr.bf16.mxu0 0
    %398 = vmatpush1.bf16.msra.mxu0 0
    %399 = vmatprep.subr.bf16.mxu0 0
    %400 = vmatpush1.bf16.msra.mxu0 0
    %401 = vmatprep.subr.bf16.mxu0 0
    %402 = vmatpush1.bf16.msra.mxu0 0
    %403 = vmatprep.mubr.bf16.mxu0 0
    %404 = vmatmul.mubr.bf16.gmra.mrb[0].mxu0 %v366
    %v405 = vpop.f32.mrb[0].mxu0
    %v406 = vadd.f32 0.0, %v405
    %v407 = vpop.f32.mrb[0].mxu0
    %v408 = vadd.f32 0.0, %v407
    %v409 = vpop.f32.mrb[0].mxu0
    %v410 = vadd.f32 0.0, %v409
    %v411 = vpop.f32.mrb[0].mxu0
    %v412 = vadd.f32 0.0, %v411
    %413 = vmatprep.mubr.bf16.mxu0 0
    %414 = vmatmul.mubr.bf16.gmra.mrb[0].mxu0 %v369
    %v415 = vpop.f32.mrb[0].mxu0
    %v416 = vadd.f32 0.0, %v415
    %v417 = vpop.f32.mrb[0].mxu0
    %v418 = vadd.f32 0.0, %v417
    %v419 = vpop.f32.mrb[0].mxu0
    %v420 = vadd.f32 0.0, %v419
    %v421 = vpop.f32.mrb[0].mxu0
    %v422 = vadd.f32 0.0, %v421
    %423 = vdwg.mxu0
    %424 = vmatprep.subr.bf16.mxu0 %v335
    %425 = vmatpush1.bf16.msra.mxu0 %v334
    %426 = vmatprep.subr.bf16.mxu0 %v343
    %427 = vmatpush1.bf16.msra.mxu0 %v342
    %428 = vmatprep.subr.bf16.mxu0 0
    %429 = vmatpush1.bf16.msra.mxu0 0
    %430 = vmatprep.subr.bf16.mxu0 0
    %431 = vmatpush1.bf16.msra.mxu0 0
    %432 = vmatprep.subr.bf16.mxu0 0
    %433 = vmatpush1.bf16.msra.mxu0 0
    %434 = vmatprep.subr.bf16.mxu0 0
    %435 = vmatpush1.bf16.msra.mxu0 0
    %436 = vmatprep.subr.bf16.mxu0 0
    %437 = vmatpush1.bf16.msra.mxu0 0
    %438 = vmatprep.subr.bf16.mxu0 0
    %439 = vmatpush1.bf16.msra.mxu0 0
    %440 = vmatprep.subr.bf16.mxu0 0
    %441 = vmatpush1.bf16.msra.mxu0 0
    %442 = vmatprep.subr.bf16.mxu0 0
    %443 = vmatpush1.bf16.msra.mxu0 0
    %444 = vmatprep.subr.bf16.mxu0 0
    %445 = vmatpush1.bf16.msra.mxu0 0
    %446 = vmatprep.subr.bf16.mxu0 0
    %447 = vmatpush1.bf16.msra.mxu0 0
    %448 = vmatprep.subr.bf16.mxu0 0
    %449 = vmatpush1.bf16.msra.mxu0 0
    %450 = vmatprep.subr.bf16.mxu0 0
    %451 = vmatpush1.bf16.msra.mxu0 0
    %452 = vmatprep.subr.bf16.mxu0 0
    %453 = vmatpush1.bf16.msra.mxu0 0
    %454 = vmatprep.subr.bf16.mxu0 0
    %455 = vmatpush1.bf16.msra.mxu0 0
    %456 = vmatprep.mubr.bf16.mxu0 0
    %457 = vmatmul.mubr.bf16.gmra.mrb[0].mxu0 %v366
    %v458 = vpop.f32.mrb[0].mxu0
    %v459 = vadd.f32 0.0, %v458
    %v460 = vpop.f32.mrb[0].mxu0
    %v461 = vadd.f32 0.0, %v460
    %v462 = vpop.f32.mrb[0].mxu0
    %v463 = vadd.f32 0.0, %v462
    %v464 = vpop.f32.mrb[0].mxu0
    %v465 = vadd.f32 0.0, %v464
    %466 = vmatprep.mubr.bf16.mxu0 0
    %467 = vmatmul.mubr.bf16.gmra.mrb[0].mxu0 %v369
    %v468 = vpop.f32.mrb[0].mxu0
    %v469 = vadd.f32 0.0, %v468
    %v470 = vpop.f32.mrb[0].mxu0
    %v471 = vadd.f32 0.0, %v470
    %v472 = vpop.f32.mrb[0].mxu0
    %v473 = vadd.f32 0.0, %v472
    %v474 = vpop.f32.mrb[0].mxu0
    %v475 = vadd.f32 0.0, %v474
    %476 = vdwg.mxu0
    %477 = vmatprep.subr.bf16.mxu0 %v337
    %478 = vmatpush1.bf16.msra.mxu0 %v336
    %479 = vmatprep.subr.bf16.mxu0 %v345
    %480 = vmatpush1.bf16.msra.mxu0 %v344
    %481 = vmatprep.subr.bf16.mxu0 0
    %482 = vmatpush1.bf16.msra.mxu0 0
    %483 = vmatprep.subr.bf16.mxu0 0
    %484 = vmatpush1.bf16.msra.mxu0 0
    %485 = vmatprep.subr.bf16.mxu0 0
    %486 = vmatpush1.bf16.msra.mxu0 0
    %487 = vmatprep.subr.bf16.mxu0 0
    %488 = vmatpush1.bf16.msra.mxu0 0
    %489 = vmatprep.subr.bf16.mxu0 0
    %490 = vmatpush1.bf16.msra.mxu0 0
    %491 = vmatprep.subr.bf16.mxu0 0
    %492 = vmatpush1.bf16.msra.mxu0 0
    %493 = vmatprep.subr.bf16.mxu0 0
    %494 = vmatpush1.bf16.msra.mxu0 0
    %495 = vmatprep.subr.bf16.mxu0 0
    %496 = vmatpush1.bf16.msra.mxu0 0
    %497 = vmatprep.subr.bf16.mxu0 0
    %498 = vmatpush1.bf16.msra.mxu0 0
    %499 = vmatprep.subr.bf16.mxu0 0
    %500 = vmatpush1.bf16.msra.mxu0 0
    %501 = vmatprep.subr.bf16.mxu0 0
    %502 = vmatpush1.bf16.msra.mxu0 0
    %503 = vmatprep.subr.bf16.mxu0 0
    %504 = vmatpush1.bf16.msra.mxu0 0
    %505 = vmatprep.subr.bf16.mxu0 0
    %506 = vmatpush1.bf16.msra.mxu0 0
    %507 = vmatprep.subr.bf16.mxu0 0
    %508 = vmatpush1.bf16.msra.mxu0 0
    %509 = vmatprep.mubr.bf16.mxu0 0
    %510 = vmatmul.mubr.bf16.gmra.mrb[0].mxu0 %v366
    %v511 = vpop.f32.mrb[0].mxu0
    %v512 = vadd.f32 0.0, %v511
    %v513 = vpop.f32.mrb[0].mxu0
    %v514 = vadd.f32 0.0, %v513
    %v515 = vpop.f32.mrb[0].mxu0
    %v516 = vadd.f32 0.0, %v515
    %v517 = vpop.f32.mrb[0].mxu0
    %v518 = vadd.f32 0.0, %v517
    %519 = vmatprep.mubr.bf16.mxu0 0
    %520 = vmatmul.mubr.bf16.gmra.mrb[0].mxu0 %v369
    %v521 = vpop.f32.mrb[0].mxu0
    %v522 = vadd.f32 0.0, %v521
    %v523 = vpop.f32.mrb[0].mxu0
    %v524 = vadd.f32 0.0, %v523
    %v525 = vpop.f32.mrb[0].mxu0
    %v526 = vadd.f32 0.0, %v525
    %v527 = vpop.f32.mrb[0].mxu0
    %v528 = vadd.f32 0.0, %v527
    %529 = vdwg.mxu0
    %530 = vmatprep.subr.bf16.mxu0 %v339
    %531 = vmatpush1.bf16.msra.mxu0 %v338
    %532 = vmatprep.subr.bf16.mxu0 %v347
    %533 = vmatpush1.bf16.msra.mxu0 %v346
    %534 = vmatprep.subr.bf16.mxu0 0
    %535 = vmatpush1.bf16.msra.mxu0 0
    %536 = vmatprep.subr.bf16.mxu0 0
    %537 = vmatpush1.bf16.msra.mxu0 0
    %538 = vmatprep.subr.bf16.mxu0 0
    %539 = vmatpush1.bf16.msra.mxu0 0
    %540 = vmatprep.subr.bf16.mxu0 0
    %541 = vmatpush1.bf16.msra.mxu0 0
    %542 = vmatprep.subr.bf16.mxu0 0
    %543 = vmatpush1.bf16.msra.mxu0 0
    %544 = vmatprep.subr.bf16.mxu0 0
    %545 = vmatpush1.bf16.msra.mxu0 0
    %546 = vmatprep.subr.bf16.mxu0 0
    %547 = vmatpush1.bf16.msra.mxu0 0
    %548 = vmatprep.subr.bf16.mxu0 0
    %549 = vmatpush1.bf16.msra.mxu0 0
    %550 = vmatprep.subr.bf16.mxu0 0
    %551 = vmatpush1.bf16.msra.mxu0 0
    %552 = vmatprep.subr.bf16.mxu0 0
    %553 = vmatpush1.bf16.msra.mxu0 0
    %554 = vmatprep.subr.bf16.mxu0 0
    %555 = vmatpush1.bf16.msra.mxu0 0
    %556 = vmatprep.subr.bf16.mxu0 0
    %557 = vmatpush1.bf16.msra.mxu0 0
    %558 = vmatprep.subr.bf16.mxu0 0
    %559 = vmatpush1.bf16.msra.mxu0 0
    %560 = vmatprep.subr.bf16.mxu0 0
    %561 = vmatpush1.bf16.msra.mxu0 0
    %562 = vmatprep.mubr.bf16.mxu0 0
    %563 = vmatmul.mubr.bf16.gmra.mrb[0].mxu0 %v366
    %v564 = vpop.f32.mrb[0].mxu0
    %v565 = vadd.f32 0.0, %v564
    %v566 = vpop.f32.mrb[0].mxu0
    %v567 = vadd.f32 0.0, %v566
    %v568 = vpop.f32.mrb[0].mxu0
    %v569 = vadd.f32 0.0, %v568
    %v570 = vpop.f32.mrb[0].mxu0
    %v571 = vadd.f32 0.0, %v570
    %572 = vmatprep.mubr.bf16.mxu0 0
    %573 = vmatmul.mubr.bf16.gmra.mrb[0].mxu0 %v369
    %v574 = vpop.f32.mrb[0].mxu0
    %v575 = vadd.f32 0.0, %v574
    %v576 = vpop.f32.mrb[0].mxu0
    %v577 = vadd.f32 0.0, %v576
    %v578 = vpop.f32.mrb[0].mxu0
    %v579 = vadd.f32 0.0, %v578
    %v580 = vpop.f32.mrb[0].mxu0
    %v581 = vadd.f32 0.0, %v580
    %582 = vdwg.mxu0
    %v583 = vld [vmem:[%s0] sm:$0xff]
    %v584 = vld [vmem:[%s0 + $0x8] sm:$0xff]
    %v585 = vpack.c.bf16 %v584, %v583
    %v586 = vlaneseq
    %v587 = vshrl.u32 %v586, 7
    %v588 = vsub.s32 0, %v587
    %v589 = vrot.slane %v55, %v588
    %v592 = vunpack.c.l.b16 %v40
    %v593 = vunpack.c.l.b16 %v41
    %v594 = vpack.c.b16 %v593, %v592
    %vm596 = vcmask 130048
    %v598 = vsel %vm596, %v585, 0
    %600 = vmatprep.subr.bf16.mxu0 0
    %601 = vmatpush1.bf16.msra.mxu0 %v594
    %602 = vmatprep.subr.bf16.mxu0 0
    %603 = vmatpush1.bf16.msra.mxu0 0
    %604 = vmatprep.subr.bf16.mxu0 0
    %605 = vmatpush1.bf16.msra.mxu0 0
    %606 = vmatprep.subr.bf16.mxu0 0
    %607 = vmatpush1.bf16.msra.mxu0 0
    %608 = vmatprep.subr.bf16.mxu0 0
    %609 = vmatpush1.bf16.msra.mxu0 0
    %610 = vmatprep.subr.bf16.mxu0 0
    %611 = vmatpush1.bf16.msra.mxu0 0
    %612 = vmatprep.subr.bf16.mxu0 0
    %613 = vmatpush1.bf16.msra.mxu0 0
    %614 = vmatprep.subr.bf16.mxu0 0
    %615 = vmatpush1.bf16.msra.mxu0 0
    %616 = vmatprep.subr.bf16.mxu0 0
    %617 = vmatpush1.bf16.msra.mxu0 0
    %618 = vmatprep.subr.bf16.mxu0 0
    %619 = vmatpush1.bf16.msra.mxu0 0
    %620 = vmatprep.subr.bf16.mxu0 0
    %621 = vmatpush1.bf16.msra.mxu0 0
    %622 = vmatprep.subr.bf16.mxu0 0
    %623 = vmatpush1.bf16.msra.mxu0 0
    %624 = vmatprep.subr.bf16.mxu0 0
    %625 = vmatpush1.bf16.msra.mxu0 0
    %626 = vmatprep.subr.bf16.mxu0 0
    %627 = vmatpush1.bf16.msra.mxu0 0
    %628 = vmatprep.subr.bf16.mxu0 0
    %629 = vmatpush1.bf16.msra.mxu0 0
    %630 = vmatprep.subr.bf16.mxu0 0
    %631 = vmatpush1.bf16.msra.mxu0 0
    %632 = vmatprep.mubr.bf16.mxu0 0
    %633 = vmatmul.mubr.bf16.gmra.mrb[0].mxu0 %v598
    %v634 = vpop.f32.mrb[0].mxu0
    %v635 = vadd.f32 %v589, %v634
    %v636 = vpop.f32.mrb[0].mxu0
    %v637 = vpop.f32.mrb[0].mxu0
    %v638 = vadd.f32 %v589, %v637
    %v639 = vpop.f32.mrb[0].mxu0
    %640 = vdwg.mxu0
    %v641 = vmax.f32 %v635, 0.0
    %v642 = vmax.f32 %v638, 0.0
    %v643 = vpack.c.bf16 %v642, %v641
    %v648 = vunpack.c.l.b16 %v185
    %v649 = vunpack.c.l.b16 %v186
    %v650 = vunpack.c.l.b16 %v187
    %v651 = vunpack.c.l.b16 %v188
    %v652 = vpack.c.b16 %v649, %v648
    %v653 = vpack.c.b16 %v651, %v650
    %v655 = vsel %vm596, %v652, 0
    %v658 = vsel %vm596, %v653, 0
    %660 = vmatprep.subr.bf16.mxu0 0
    %661 = vmatpush1.bf16.msra.mxu0 %v643
    %662 = vmatprep.subr.bf16.mxu0 0
    %663 = vmatpush1.bf16.msra.mxu0 0
    %664 = vmatprep.subr.bf16.mxu0 0
    %665 = vmatpush1.bf16.msra.mxu0 0
    %666 = vmatprep.subr.bf16.mxu0 0
    %667 = vmatpush1.bf16.msra.mxu0 0
    %668 = vmatprep.subr.bf16.mxu0 0
    %669 = vmatpush1.bf16.msra.mxu0 0
    %670 = vmatprep.subr.bf16.mxu0 0
    %671 = vmatpush1.bf16.msra.mxu0 0
    %672 = vmatprep.subr.bf16.mxu0 0
    %673 = vmatpush1.bf16.msra.mxu0 0
    %674 = vmatprep.subr.bf16.mxu0 0
    %675 = vmatpush1.bf16.msra.mxu0 0
    %676 = vmatprep.subr.bf16.mxu0 0
    %677 = vmatpush1.bf16.msra.mxu0 0
    %678 = vmatprep.subr.bf16.mxu0 0
    %679 = vmatpush1.bf16.msra.mxu0 0
    %680 = vmatprep.subr.bf16.mxu0 0
    %681 = vmatpush1.bf16.msra.mxu0 0
    %682 = vmatprep.subr.bf16.mxu0 0
    %683 = vmatpush1.bf16.msra.mxu0 0
    %684 = vmatprep.subr.bf16.mxu0 0
    %685 = vmatpush1.bf16.msra.mxu0 0
    %686 = vmatprep.subr.bf16.mxu0 0
    %687 = vmatpush1.bf16.msra.mxu0 0
    %688 = vmatprep.subr.bf16.mxu0 0
    %689 = vmatpush1.bf16.msra.mxu0 0
    %690 = vmatprep.subr.bf16.mxu0 0
    %691 = vmatpush1.bf16.msra.mxu0 0
    %692 = vmatprep.mubr.bf16.mxu0 0
    %693 = vmatmul.mubr.bf16.gmra.mrb[0].mxu0 %v655
    %v694 = vpop.f32.mrb[0].mxu0
    %v695 = vadd.f32 0.0, %v694
    %v696 = vpop.f32.mrb[0].mxu0
    %v697 = vpop.f32.mrb[0].mxu0
    %v698 = vadd.f32 0.0, %v697
    %v699 = vpop.f32.mrb[0].mxu0
    %700 = vmatprep.mubr.bf16.mxu0 0
    %701 = vmatmul.mubr.bf16.gmra.mrb[0].mxu0 %v658
    %v702 = vpop.f32.mrb[0].mxu0
    %v703 = vadd.f32 0.0, %v702
    %v704 = vpop.f32.mrb[0].mxu0
    %v705 = vpop.f32.mrb[0].mxu0
    %v706 = vadd.f32 0.0, %v705
    %v707 = vpop.f32.mrb[0].mxu0
    %708 = vdwg.mxu0
    %713 = vrot.lane.b32.xlu0 %v695, 32
    %v714 = vpop.permute.xlu0 %713
    %715 = vrot.lane.b32.xlu0 %v698, 32
    %v716 = vpop.permute.xlu0 %715
    %717 = vrot.lane.b32.xlu0 %v703, 32
    %v718 = vpop.permute.xlu0 %717
    %719 = vrot.lane.b32.xlu0 %v706, 32
    %v720 = vpop.permute.xlu0 %719
    %725 = vrot.lane.b32.xlu0 %v695, 64
    %v726 = vpop.permute.xlu0 %725
    %727 = vrot.lane.b32.xlu0 %v698, 64
    %v728 = vpop.permute.xlu0 %727
    %729 = vrot.lane.b32.xlu0 %v703, 64
    %v730 = vpop.permute.xlu0 %729
    %731 = vrot.lane.b32.xlu0 %v706, 64
    %v732 = vpop.permute.xlu0 %731
    %737 = vrot.lane.b32.xlu0 %v695, 96
    %v738 = vpop.permute.xlu0 %737
    %739 = vrot.lane.b32.xlu0 %v698, 96
    %v740 = vpop.permute.xlu0 %739
    %741 = vrot.lane.b32.xlu0 %v703, 96
    %v742 = vpop.permute.xlu0 %741
    %743 = vrot.lane.b32.xlu0 %v706, 96
    %v744 = vpop.permute.xlu0 %743
    %v749 = vsel %vm364, %v695, %v714
    %v750 = vsel %vm364, %v698, %v716
    %v751 = vsel %vm364, %v703, %v718
    %v752 = vsel %vm364, %v706, %v720
    %vm753 = vcmask 523264
    %v754 = vsel %vm753, %v749, %v726
    %v755 = vsel %vm753, %v750, %v728
    %v756 = vsel %vm753, %v751, %v730
    %v757 = vsel %vm753, %v752, %v732
    %vm758 = vcmask 785408
    %v759 = vsel %vm758, %v754, %v738
    %v760 = vsel %vm758, %v755, %v740
    %v761 = vsel %vm758, %v756, %v742
    %v762 = vsel %vm758, %v757, %v744
    %v763 = vmul.f32 %v406, %v759
    %v764 = vmul.f32 %v408, %v759
    %v765 = vmul.f32 %v459, %v759
    %v766 = vmul.f32 %v461, %v759
    %v767 = vmul.f32 %v512, %v759
    %v768 = vmul.f32 %v514, %v759
    %v769 = vmul.f32 %v565, %v759
    %v770 = vmul.f32 %v567, %v759
    %v771 = vmul.f32 %v410, %v760
    %v772 = vmul.f32 %v412, %v760
    %v773 = vmul.f32 %v463, %v760
    %v774 = vmul.f32 %v465, %v760
    %v775 = vmul.f32 %v516, %v760
    %v776 = vmul.f32 %v518, %v760
    %v777 = vmul.f32 %v569, %v760
    %v778 = vmul.f32 %v571, %v760
    %v779 = vmul.f32 %v416, %v761
    %v780 = vmul.f32 %v418, %v761
    %v781 = vmul.f32 %v469, %v761
    %v782 = vmul.f32 %v471, %v761
    %v783 = vmul.f32 %v522, %v761
    %v784 = vmul.f32 %v524, %v761
    %v785 = vmul.f32 %v575, %v761
    %v786 = vmul.f32 %v577, %v761
    %v787 = vmul.f32 %v420, %v762
    %v788 = vmul.f32 %v422, %v762
    %v789 = vmul.f32 %v473, %v762
    %v790 = vmul.f32 %v475, %v762
    %v791 = vmul.f32 %v526, %v762
    %v792 = vmul.f32 %v528, %v762
    %v793 = vmul.f32 %v579, %v762
    %v794 = vmul.f32 %v581, %v762
    %v795 = vpack.c.bf16 %v771, %v763
    %v796 = vpack.c.bf16 %v772, %v764
    %v797 = vpack.c.bf16 %v773, %v765
    %v798 = vpack.c.bf16 %v774, %v766
    %v799 = vpack.c.bf16 %v775, %v767
    %v800 = vpack.c.bf16 %v776, %v768
    %v801 = vpack.c.bf16 %v777, %v769
    %v802 = vpack.c.bf16 %v778, %v770
    %v803 = vpack.c.bf16 %v787, %v779
    %v804 = vpack.c.bf16 %v788, %v780
    %v805 = vpack.c.bf16 %v789, %v781
    %v806 = vpack.c.bf16 %v790, %v782
    %v807 = vpack.c.bf16 %v791, %v783
    %v808 = vpack.c.bf16 %v792, %v784
    %v809 = vpack.c.bf16 %v793, %v785
    %v810 = vpack.c.bf16 %v794, %v786
    %v939 = vunpack.c.l.b16 %v57
    %v940 = vunpack.c.l.b16 %v58
    %v941 = vunpack.c.l.b16 %v59
    %v942 = vunpack.c.l.b16 %v60
    %v943 = vunpack.c.l.b16 %v61
    %v944 = vunpack.c.l.b16 %v62
    %v945 = vunpack.c.l.b16 %v63
    %v946 = vunpack.c.l.b16 %v64
    %v947 = vunpack.c.l.b16 %v65
    %v948 = vunpack.c.l.b16 %v66
    %v949 = vunpack.c.l.b16 %v67
    %v950 = vunpack.c.l.b16 %v68
    %v951 = vunpack.c.l.b16 %v69
    %v952 = vunpack.c.l.b16 %v70
    %v953 = vunpack.c.l.b16 %v71
    %v954 = vunpack.c.l.b16 %v72
    %v955 = vunpack.c.l.b16 %v73
    %v956 = vunpack.c.l.b16 %v74
    %v957 = vunpack.c.l.b16 %v75
    %v958 = vunpack.c.l.b16 %v76
    %v959 = vunpack.c.l.b16 %v77
    %v960 = vunpack.c.l.b16 %v78
    %v961 = vunpack.c.l.b16 %v79
    %v962 = vunpack.c.l.b16 %v80
    %v963 = vunpack.c.l.b16 %v81
    %v964 = vunpack.c.l.b16 %v82
    %v965 = vunpack.c.l.b16 %v83
    %v966 = vunpack.c.l.b16 %v84
    %v967 = vunpack.c.l.b16 %v85
    %v968 = vunpack.c.l.b16 %v86
    %v969 = vunpack.c.l.b16 %v87
    %v970 = vunpack.c.l.b16 %v88
    %v971 = vunpack.c.l.b16 %v89
    %v972 = vunpack.c.l.b16 %v90
    %v973 = vunpack.c.l.b16 %v91
    %v974 = vunpack.c.l.b16 %v92
    %v975 = vunpack.c.l.b16 %v93
    %v976 = vunpack.c.l.b16 %v94
    %v977 = vunpack.c.l.b16 %v95
    %v978 = vunpack.c.l.b16 %v96
    %v979 = vunpack.c.l.b16 %v97
    %v980 = vunpack.c.l.b16 %v98
    %v981 = vunpack.c.l.b16 %v99
    %v982 = vunpack.c.l.b16 %v100
    %v983 = vunpack.c.l.b16 %v101
    %v984 = vunpack.c.l.b16 %v102
    %v985 = vunpack.c.l.b16 %v103
    %v986 = vunpack.c.l.b16 %v104
    %v987 = vunpack.c.l.b16 %v105
    %v988 = vunpack.c.l.b16 %v106
    %v989 = vunpack.c.l.b16 %v107
    %v990 = vunpack.c.l.b16 %v108
    %v991 = vunpack.c.l.b16 %v109
    %v992 = vunpack.c.l.b16 %v110
    %v993 = vunpack.c.l.b16 %v111
    %v994 = vunpack.c.l.b16 %v112
    %v995 = vunpack.c.l.b16 %v113
    %v996 = vunpack.c.l.b16 %v114
    %v997 = vunpack.c.l.b16 %v115
    %v998 = vunpack.c.l.b16 %v116
    %v999 = vunpack.c.l.b16 %v117
    %v1000 = vunpack.c.l.b16 %v118
    %v1001 = vunpack.c.l.b16 %v119
    %v1002 = vunpack.c.l.b16 %v120
    %v1003 = vunpack.c.l.b16 %v121
    %v1004 = vunpack.c.l.b16 %v122
    %v1005 = vunpack.c.l.b16 %v123
    %v1006 = vunpack.c.l.b16 %v124
    %v1007 = vunpack.c.l.b16 %v125
    %v1008 = vunpack.c.l.b16 %v126
    %v1009 = vunpack.c.l.b16 %v127
    %v1010 = vunpack.c.l.b16 %v128
    %v1011 = vunpack.c.l.b16 %v129
    %v1012 = vunpack.c.l.b16 %v130
    %v1013 = vunpack.c.l.b16 %v131
    %v1014 = vunpack.c.l.b16 %v132
    %v1015 = vunpack.c.l.b16 %v133
    %v1016 = vunpack.c.l.b16 %v134
    %v1017 = vunpack.c.l.b16 %v135
    %v1018 = vunpack.c.l.b16 %v136
    %v1019 = vunpack.c.l.b16 %v137
    %v1020 = vunpack.c.l.b16 %v138
    %v1021 = vunpack.c.l.b16 %v139
    %v1022 = vunpack.c.l.b16 %v140
    %v1023 = vunpack.c.l.b16 %v141
    %v1024 = vunpack.c.l.b16 %v142
    %v1025 = vunpack.c.l.b16 %v143
    %v1026 = vunpack.c.l.b16 %v144
    %v1027 = vunpack.c.l.b16 %v145
    %v1028 = vunpack.c.l.b16 %v146
    %v1029 = vunpack.c.l.b16 %v147
    %v1030 = vunpack.c.l.b16 %v148
    %v1031 = vunpack.c.l.b16 %v149
    %v1032 = vunpack.c.l.b16 %v150
    %v1033 = vunpack.c.l.b16 %v151
    %v1034 = vunpack.c.l.b16 %v152
    %v1035 = vunpack.c.l.b16 %v153
    %v1036 = vunpack.c.l.b16 %v154
    %v1037 = vunpack.c.l.b16 %v155
    %v1038 = vunpack.c.l.b16 %v156
    %v1039 = vunpack.c.l.b16 %v157
    %v1040 = vunpack.c.l.b16 %v158
    %v1041 = vunpack.c.l.b16 %v159
    %v1042 = vunpack.c.l.b16 %v160
    %v1043 = vunpack.c.l.b16 %v161
    %v1044 = vunpack.c.l.b16 %v162
    %v1045 = vunpack.c.l.b16 %v163
    %v1046 = vunpack.c.l.b16 %v164
    %v1047 = vunpack.c.l.b16 %v165
    %v1048 = vunpack.c.l.b16 %v166
    %v1049 = vunpack.c.l.b16 %v167
    %v1050 = vunpack.c.l.b16 %v168
    %v1051 = vunpack.c.l.b16 %v169
    %v1052 = vunpack.c.l.b16 %v170
    %v1053 = vunpack.c.l.b16 %v171
    %v1054 = vunpack.c.l.b16 %v172
    %v1055 = vunpack.c.l.b16 %v173
    %v1056 = vunpack.c.l.b16 %v174
    %v1057 = vunpack.c.l.b16 %v175
    %v1058 = vunpack.c.l.b16 %v176
    %v1059 = vunpack.c.l.b16 %v177
    %v1060 = vunpack.c.l.b16 %v178
    %v1061 = vunpack.c.l.b16 %v179
    %v1062 = vunpack.c.l.b16 %v180
    %v1063 = vunpack.c.l.b16 %v181
    %v1064 = vunpack.c.l.b16 %v182
    %v1065 = vunpack.c.l.b16 %v183
    %v1066 = vunpack.c.l.b16 %v184
    %v1067 = vpack.c.b16 %v940, %v939
    %v1068 = vpack.c.b16 %v942, %v941
    %v1069 = vpack.c.b16 %v944, %v943
    %v1070 = vpack.c.b16 %v946, %v945
    %v1071 = vpack.c.b16 %v948, %v947
    %v1072 = vpack.c.b16 %v950, %v949
    %v1073 = vpack.c.b16 %v952, %v951
    %v1074 = vpack.c.b16 %v954, %v953
    %v1075 = vpack.c.b16 %v956, %v955
    %v1076 = vpack.c.b16 %v958, %v957
    %v1077 = vpack.c.b16 %v960, %v959
    %v1078 = vpack.c.b16 %v962, %v961
    %v1079 = vpack.c.b16 %v964, %v963
    %v1080 = vpack.c.b16 %v966, %v965
    %v1081 = vpack.c.b16 %v968, %v967
    %v1082 = vpack.c.b16 %v970, %v969
    %v1083 = vpack.c.b16 %v972, %v971
    %v1084 = vpack.c.b16 %v974, %v973
    %v1085 = vpack.c.b16 %v976, %v975
    %v1086 = vpack.c.b16 %v978, %v977
    %v1087 = vpack.c.b16 %v980, %v979
    %v1088 = vpack.c.b16 %v982, %v981
    %v1089 = vpack.c.b16 %v984, %v983
    %v1090 = vpack.c.b16 %v986, %v985
    %v1091 = vpack.c.b16 %v988, %v987
    %v1092 = vpack.c.b16 %v990, %v989
    %v1093 = vpack.c.b16 %v992, %v991
    %v1094 = vpack.c.b16 %v994, %v993
    %v1095 = vpack.c.b16 %v996, %v995
    %v1096 = vpack.c.b16 %v998, %v997
    %v1097 = vpack.c.b16 %v1000, %v999
    %v1098 = vpack.c.b16 %v1002, %v1001
    %v1099 = vpack.c.b16 %v1004, %v1003
    %v1100 = vpack.c.b16 %v1006, %v1005
    %v1101 = vpack.c.b16 %v1008, %v1007
    %v1102 = vpack.c.b16 %v1010, %v1009
    %v1103 = vpack.c.b16 %v1012, %v1011
    %v1104 = vpack.c.b16 %v1014, %v1013
    %v1105 = vpack.c.b16 %v1016, %v1015
    %v1106 = vpack.c.b16 %v1018, %v1017
    %v1107 = vpack.c.b16 %v1020, %v1019
    %v1108 = vpack.c.b16 %v1022, %v1021
    %v1109 = vpack.c.b16 %v1024, %v1023
    %v1110 = vpack.c.b16 %v1026, %v1025
    %v1111 = vpack.c.b16 %v1028, %v1027
    %v1112 = vpack.c.b16 %v1030, %v1029
    %v1113 = vpack.c.b16 %v1032, %v1031
    %v1114 = vpack.c.b16 %v1034, %v1033
    %v1115 = vpack.c.b16 %v1036, %v1035
    %v1116 = vpack.c.b16 %v1038, %v1037
    %v1117 = vpack.c.b16 %v1040, %v1039
    %v1118 = vpack.c.b16 %v1042, %v1041
    %v1119 = vpack.c.b16 %v1044, %v1043
    %v1120 = vpack.c.b16 %v1046, %v1045
    %v1121 = vpack.c.b16 %v1048, %v1047
    %v1122 = vpack.c.b16 %v1050, %v1049
    %v1123 = vpack.c.b16 %v1052, %v1051
    %v1124 = vpack.c.b16 %v1054, %v1053
    %v1125 = vpack.c.b16 %v1056, %v1055
    %v1126 = vpack.c.b16 %v1058, %v1057
    %v1127 = vpack.c.b16 %v1060, %v1059
    %v1128 = vpack.c.b16 %v1062, %v1061
    %v1129 = vpack.c.b16 %v1064, %v1063
    %v1130 = vpack.c.b16 %v1066, %v1065
    %1195 = vmatprep.subr.bf16.mxu0 0
    %1196 = vmatpush1.bf16.msra.mxu0 %v1067
    %1197 = vmatprep.subr.bf16.mxu0 0
    %1198 = vmatpush1.bf16.msra.mxu0 %v1068
    %1199 = vmatprep.subr.bf16.mxu0 0
    %1200 = vmatpush1.bf16.msra.mxu0 %v1069
    %1201 = vmatprep.subr.bf16.mxu0 0
    %1202 = vmatpush1.bf16.msra.mxu0 %v1070
    %1203 = vmatprep.subr.bf16.mxu0 0
    %1204 = vmatpush1.bf16.msra.mxu0 %v1071
    %1205 = vmatprep.subr.bf16.mxu0 0
    %1206 = vmatpush1.bf16.msra.mxu0 %v1072
    %1207 = vmatprep.subr.bf16.mxu0 0
    %1208 = vmatpush1.bf16.msra.mxu0 %v1073
    %1209 = vmatprep.subr.bf16.mxu0 0
    %1210 = vmatpush1.bf16.msra.mxu0 %v1074
    %1211 = vmatprep.subr.bf16.mxu0 0
    %1212 = vmatpush1.bf16.msra.mxu0 %v1075
    %1213 = vmatprep.subr.bf16.mxu0 0
    %1214 = vmatpush1.bf16.msra.mxu0 %v1076
    %1215 = vmatprep.subr.bf16.mxu0 0
    %1216 = vmatpush1.bf16.msra.mxu0 %v1077
    %1217 = vmatprep.subr.bf16.mxu0 0
    %1218 = vmatpush1.bf16.msra.mxu0 %v1078
    %1219 = vmatprep.subr.bf16.mxu0 0
    %1220 = vmatpush1.bf16.msra.mxu0 %v1079
    %1221 = vmatprep.subr.bf16.mxu0 0
    %1222 = vmatpush1.bf16.msra.mxu0 %v1080
    %1223 = vmatprep.subr.bf16.mxu0 0
    %1224 = vmatpush1.bf16.msra.mxu0 %v1081
    %1225 = vmatprep.subr.bf16.mxu0 0
    %1226 = vmatpush1.bf16.msra.mxu0 %v1082
    %1227 = vmatprep.mubr.bf16.mxu0 %v796
    %1228 = vmatmul.mubr.bf16.gmra.mrb[0].mxu0 %v795
    %v1229 = vpop.f32.mrb[0].mxu0
    %v1230 = vadd.f32 0.0, %v1229
    %v1231 = vpop.f32.mrb[0].mxu0
    %v1232 = vpop.f32.mrb[0].mxu0
    %v1233 = vadd.f32 0.0, %v1232
    %v1234 = vpop.f32.mrb[0].mxu0
    %1235 = vmatprep.mubr.bf16.mxu0 %v804
    %1236 = vmatmul.mubr.bf16.gmra.mrb[0].mxu0 %v803
    %v1237 = vpop.f32.mrb[0].mxu0
    %v1238 = vadd.f32 0.0, %v1237
    %v1239 = vpop.f32.mrb[0].mxu0
    %v1240 = vpop.f32.mrb[0].mxu0
    %v1241 = vadd.f32 0.0, %v1240
    %v1242 = vpop.f32.mrb[0].mxu0
    %1243 = vdwg.mxu0
    %1244 = vmatprep.subr.bf16.mxu0 0
    %1245 = vmatpush1.bf16.msra.mxu0 %v1083
    %1246 = vmatprep.subr.bf16.mxu0 0
    %1247 = vmatpush1.bf16.msra.mxu0 %v1084
    %1248 = vmatprep.subr.bf16.mxu0 0
    %1249 = vmatpush1.bf16.msra.mxu0 %v1085
    %1250 = vmatprep.subr.bf16.mxu0 0
    %1251 = vmatpush1.bf16.msra.mxu0 %v1086
    %1252 = vmatprep.subr.bf16.mxu0 0
    %1253 = vmatpush1.bf16.msra.mxu0 %v1087
    %1254 = vmatprep.subr.bf16.mxu0 0
    %1255 = vmatpush1.bf16.msra.mxu0 %v1088
    %1256 = vmatprep.subr.bf16.mxu0 0
    %1257 = vmatpush1.bf16.msra.mxu0 %v1089
    %1258 = vmatprep.subr.bf16.mxu0 0
    %1259 = vmatpush1.bf16.msra.mxu0 %v1090
    %1260 = vmatprep.subr.bf16.mxu0 0
    %1261 = vmatpush1.bf16.msra.mxu0 %v1091
    %1262 = vmatprep.subr.bf16.mxu0 0
    %1263 = vmatpush1.bf16.msra.mxu0 %v1092
    %1264 = vmatprep.subr.bf16.mxu0 0
    %1265 = vmatpush1.bf16.msra.mxu0 %v1093
    %1266 = vmatprep.subr.bf16.mxu0 0
    %1267 = vmatpush1.bf16.msra.mxu0 %v1094
    %1268 = vmatprep.subr.bf16.mxu0 0
    %1269 = vmatpush1.bf16.msra.mxu0 %v1095
    %1270 = vmatprep.subr.bf16.mxu0 0
    %1271 = vmatpush1.bf16.msra.mxu0 %v1096
    %1272 = vmatprep.subr.bf16.mxu0 0
    %1273 = vmatpush1.bf16.msra.mxu0 %v1097
    %1274 = vmatprep.subr.bf16.mxu0 0
    %1275 = vmatpush1.bf16.msra.mxu0 %v1098
    %1276 = vmatprep.mubr.bf16.mxu0 %v798
    %1277 = vmatmul.mubr.bf16.gmra.mrb[0].mxu0 %v797
    %v1278 = vpop.f32.mrb[0].mxu0
    %v1279 = vadd.f32 %v1230, %v1278
    %v1280 = vpop.f32.mrb[0].mxu0
    %v1281 = vpop.f32.mrb[0].mxu0
    %v1282 = vadd.f32 %v1233, %v1281
    %v1283 = vpop.f32.mrb[0].mxu0
    %1284 = vmatprep.mubr.bf16.mxu0 %v806
    %1285 = vmatmul.mubr.bf16.gmra.mrb[0].mxu0 %v805
    %v1286 = vpop.f32.mrb[0].mxu0
    %v1287 = vadd.f32 %v1238, %v1286
    %v1288 = vpop.f32.mrb[0].mxu0
    %v1289 = vpop.f32.mrb[0].mxu0
    %v1290 = vadd.f32 %v1241, %v1289
    %v1291 = vpop.f32.mrb[0].mxu0
    %1292 = vdwg.mxu0
    %1293 = vmatprep.subr.bf16.mxu0 0
    %1294 = vmatpush1.bf16.msra.mxu0 %v1099
    %1295 = vmatprep.subr.bf16.mxu0 0
    %1296 = vmatpush1.bf16.msra.mxu0 %v1100
    %1297 = vmatprep.subr.bf16.mxu0 0
    %1298 = vmatpush1.bf16.msra.mxu0 %v1101
    %1299 = vmatprep.subr.bf16.mxu0 0
    %1300 = vmatpush1.bf16.msra.mxu0 %v1102
    %1301 = vmatprep.subr.bf16.mxu0 0
    %1302 = vmatpush1.bf16.msra.mxu0 %v1103
    %1303 = vmatprep.subr.bf16.mxu0 0
    %1304 = vmatpush1.bf16.msra.mxu0 %v1104
    %1305 = vmatprep.subr.bf16.mxu0 0
    %1306 = vmatpush1.bf16.msra.mxu0 %v1105
    %1307 = vmatprep.subr.bf16.mxu0 0
    %1308 = vmatpush1.bf16.msra.mxu0 %v1106
    %1309 = vmatprep.subr.bf16.mxu0 0
    %1310 = vmatpush1.bf16.msra.mxu0 %v1107
    %1311 = vmatprep.subr.bf16.mxu0 0
    %1312 = vmatpush1.bf16.msra.mxu0 %v1108
    %1313 = vmatprep.subr.bf16.mxu0 0
    %1314 = vmatpush1.bf16.msra.mxu0 %v1109
    %1315 = vmatprep.subr.bf16.mxu0 0
    %1316 = vmatpush1.bf16.msra.mxu0 %v1110
    %1317 = vmatprep.subr.bf16.mxu0 0
    %1318 = vmatpush1.bf16.msra.mxu0 %v1111
    %1319 = vmatprep.subr.bf16.mxu0 0
    %1320 = vmatpush1.bf16.msra.mxu0 %v1112
    %1321 = vmatprep.subr.bf16.mxu0 0
    %1322 = vmatpush1.bf16.msra.mxu0 %v1113
    %1323 = vmatprep.subr.bf16.mxu0 0
    %1324 = vmatpush1.bf16.msra.mxu0 %v1114
    %1325 = vmatprep.mubr.bf16.mxu0 %v800
    %1326 = vmatmul.mubr.bf16.gmra.mrb[0].mxu0 %v799
    %v1327 = vpop.f32.mrb[0].mxu0
    %v1328 = vadd.f32 %v1279, %v1327
    %v1329 = vpop.f32.mrb[0].mxu0
    %v1330 = vpop.f32.mrb[0].mxu0
    %v1331 = vadd.f32 %v1282, %v1330
    %v1332 = vpop.f32.mrb[0].mxu0
    %1333 = vmatprep.mubr.bf16.mxu0 %v808
    %1334 = vmatmul.mubr.bf16.gmra.mrb[0].mxu0 %v807
    %v1335 = vpop.f32.mrb[0].mxu0
    %v1336 = vadd.f32 %v1287, %v1335
    %v1337 = vpop.f32.mrb[0].mxu0
    %v1338 = vpop.f32.mrb[0].mxu0
    %v1339 = vadd.f32 %v1290, %v1338
    %v1340 = vpop.f32.mrb[0].mxu0
    %1341 = vdwg.mxu0
    %1342 = vmatprep.subr.bf16.mxu0 0
    %1343 = vmatpush1.bf16.msra.mxu0 %v1115
    %1344 = vmatprep.subr.bf16.mxu0 0
    %1345 = vmatpush1.bf16.msra.mxu0 %v1116
    %1346 = vmatprep.subr.bf16.mxu0 0
    %1347 = vmatpush1.bf16.msra.mxu0 %v1117
    %1348 = vmatprep.subr.bf16.mxu0 0
    %1349 = vmatpush1.bf16.msra.mxu0 %v1118
    %1350 = vmatprep.subr.bf16.mxu0 0
    %1351 = vmatpush1.bf16.msra.mxu0 %v1119
    %1352 = vmatprep.subr.bf16.mxu0 0
    %1353 = vmatpush1.bf16.msra.mxu0 %v1120
    %1354 = vmatprep.subr.bf16.mxu0 0
    %1355 = vmatpush1.bf16.msra.mxu0 %v1121
    %1356 = vmatprep.subr.bf16.mxu0 0
    %1357 = vmatpush1.bf16.msra.mxu0 %v1122
    %1358 = vmatprep.subr.bf16.mxu0 0
    %1359 = vmatpush1.bf16.msra.mxu0 %v1123
    %1360 = vmatprep.subr.bf16.mxu0 0
    %1361 = vmatpush1.bf16.msra.mxu0 %v1124
    %1362 = vmatprep.subr.bf16.mxu0 0
    %1363 = vmatpush1.bf16.msra.mxu0 %v1125
    %1364 = vmatprep.subr.bf16.mxu0 0
    %1365 = vmatpush1.bf16.msra.mxu0 %v1126
    %1366 = vmatprep.subr.bf16.mxu0 0
    %1367 = vmatpush1.bf16.msra.mxu0 %v1127
    %1368 = vmatprep.subr.bf16.mxu0 0
    %1369 = vmatpush1.bf16.msra.mxu0 %v1128
    %1370 = vmatprep.subr.bf16.mxu0 0
    %1371 = vmatpush1.bf16.msra.mxu0 %v1129
    %1372 = vmatprep.subr.bf16.mxu0 0
    %1373 = vmatpush1.bf16.msra.mxu0 %v1130
    %1374 = vmatprep.mubr.bf16.mxu0 %v802
    %1375 = vmatmul.mubr.bf16.gmra.mrb[0].mxu0 %v801
    %v1376 = vpop.f32.mrb[0].mxu0
    %v1377 = vadd.f32 %v1328, %v1376
    %v1378 = vpop.f32.mrb[0].mxu0
    %v1379 = vpop.f32.mrb[0].mxu0
    %v1380 = vadd.f32 %v1331, %v1379
    %v1381 = vpop.f32.mrb[0].mxu0
    %1382 = vmatprep.mubr.bf16.mxu0 %v810
    %1383 = vmatmul.mubr.bf16.gmra.mrb[0].mxu0 %v809
    %v1384 = vpop.f32.mrb[0].mxu0
    %v1385 = vadd.f32 %v1336, %v1384
    %v1386 = vpop.f32.mrb[0].mxu0
    %v1387 = vpop.f32.mrb[0].mxu0
    %v1388 = vadd.f32 %v1339, %v1387
    %v1389 = vpop.f32.mrb[0].mxu0
    %1390 = vdwg.mxu0
    %v1391 = vpack.c.bf16 %v1380, %v1377
    %v1392 = vpack.c.bf16 %v1388, %v1385
    %v1395 = vunpack.c.l.b16 %v189
    %v1396 = vunpack.c.l.b16 %v190
    %v1397 = vpack.c.b16 %v1396, %v1395
    %v1399 = vsel %vm364, %v1397, 0
    %1401 = vmatprep.subr.bf16.mxu0 0
    %1402 = vmatpush1.bf16.msra.mxu0 %v1391
    %1403 = vmatprep.subr.bf16.mxu0 0
    %1404 = vmatpush1.bf16.msra.mxu0 %v1392
    %1405 = vmatprep.subr.bf16.mxu0 0
    %1406 = vmatpush1.bf16.msra.mxu0 0
    %1407 = vmatprep.subr.bf16.mxu0 0
    %1408 = vmatpush1.bf16.msra.mxu0 0
    %1409 = vmatprep.subr.bf16.mxu0 0
    %1410 = vmatpush1.bf16.msra.mxu0 0
    %1411 = vmatprep.subr.bf16.mxu0 0
    %1412 = vmatpush1.bf16.msra.mxu0 0
    %1413 = vmatprep.subr.bf16.mxu0 0
    %1414 = vmatpush1.bf16.msra.mxu0 0
    %1415 = vmatprep.subr.bf16.mxu0 0
    %1416 = vmatpush1.bf16.msra.mxu0 0
    %1417 = vmatprep.subr.bf16.mxu0 0
    %1418 = vmatpush1.bf16.msra.mxu0 0
    %1419 = vmatprep.subr.bf16.mxu0 0
    %1420 = vmatpush1.bf16.msra.mxu0 0
    %1421 = vmatprep.subr.bf16.mxu0 0
    %1422 = vmatpush1.bf16.msra.mxu0 0
    %1423 = vmatprep.subr.bf16.mxu0 0
    %1424 = vmatpush1.bf16.msra.mxu0 0
    %1425 = vmatprep.subr.bf16.mxu0 0
    %1426 = vmatpush1.bf16.msra.mxu0 0
    %1427 = vmatprep.subr.bf16.mxu0 0
    %1428 = vmatpush1.bf16.msra.mxu0 0
    %1429 = vmatprep.subr.bf16.mxu0 0
    %1430 = vmatpush1.bf16.msra.mxu0 0
    %1431 = vmatprep.subr.bf16.mxu0 0
    %1432 = vmatpush1.bf16.msra.mxu0 0
    %1433 = vmatprep.mubr.bf16.mxu0 0
    %1434 = vmatmul.mubr.bf16.gmra.mrb[0].mxu0 %v1399
    %v1435 = vpop.f32.mrb[0].mxu0
    %v1436 = vadd.f32 0.0, %v1435
    %v1437 = vpop.f32.mrb[0].mxu0
    %v1438 = vpop.f32.mrb[0].mxu0
    %v1439 = vadd.f32 0.0, %v1438
    %v1440 = vpop.f32.mrb[0].mxu0
    %1441 = vdwg.mxu0
    %v1442 = vmax.f32 %v1436, 0.0
    %v1443 = vmax.f32 %v1439, 0.0
    %1446 = vrot.lane.b32.xlu0 %v641, 32
    %v1447 = vpop.permute.xlu0 %1446
    %1448 = vrot.lane.b32.xlu0 %v642, 32
    %v1449 = vpop.permute.xlu0 %1448
    %v1452 = vsel %vm364, %v1442, %v1447
    %v1453 = vsel %vm364, %v1443, %v1449
    %v1454 = vpack.c.bf16 %v1453, %v1452
    %v1463 = vunpack.c.l.b16 %v43
    %v1464 = vunpack.c.l.b16 %v44
    %v1465 = vunpack.c.l.b16 %v45
    %v1466 = vunpack.c.l.b16 %v46
    %v1467 = vunpack.c.l.b16 %v47
    %v1468 = vunpack.c.l.b16 %v48
    %v1469 = vunpack.c.l.b16 %v49
    %v1470 = vunpack.c.l.b16 %v50
    %v1471 = vpack.c.b16 %v1464, %v1463
    %v1472 = vpack.c.b16 %v1466, %v1465
    %v1473 = vpack.c.b16 %v1468, %v1467
    %v1474 = vpack.c.b16 %v1470, %v1469
    %v1480 = vsel %vm753, %v1454, 0
    %1482 = vmatprep.subr.bf16.mxu0 0
    %1483 = vmatpush1.bf16.msra.mxu0 %v1471
    %1484 = vmatprep.subr.bf16.mxu0 0
    %1485 = vmatpush1.bf16.msra.mxu0 %v1472
    %1486 = vmatprep.subr.bf16.mxu0 0
    %1487 = vmatpush1.bf16.msra.mxu0 %v1473
    %1488 = vmatprep.subr.bf16.mxu0 0
    %1489 = vmatpush1.bf16.msra.mxu0 %v1474
    %1490 = vmatprep.subr.bf16.mxu0 0
    %1491 = vmatpush1.bf16.msra.mxu0 0
    %1492 = vmatprep.subr.bf16.mxu0 0
    %1493 = vmatpush1.bf16.msra.mxu0 0
    %1494 = vmatprep.subr.bf16.mxu0 0
    %1495 = vmatpush1.bf16.msra.mxu0 0
    %1496 = vmatprep.subr.bf16.mxu0 0
    %1497 = vmatpush1.bf16.msra.mxu0 0
    %1498 = vmatprep.subr.bf16.mxu0 0
    %1499 = vmatpush1.bf16.msra.mxu0 0
    %1500 = vmatprep.subr.bf16.mxu0 0
    %1501 = vmatpush1.bf16.msra.mxu0 0
    %1502 = vmatprep.subr.bf16.mxu0 0
    %1503 = vmatpush1.bf16.msra.mxu0 0
    %1504 = vmatprep.subr.bf16.mxu0 0
    %1505 = vmatpush1.bf16.msra.mxu0 0
    %1506 = vmatprep.subr.bf16.mxu0 0
    %1507 = vmatpush1.bf16.msra.mxu0 0
    %1508 = vmatprep.subr.bf16.mxu0 0
    %1509 = vmatpush1.bf16.msra.mxu0 0
    %1510 = vmatprep.subr.bf16.mxu0 0
    %1511 = vmatpush1.bf16.msra.mxu0 0
    %1512 = vmatprep.subr.bf16.mxu0 0
    %1513 = vmatpush1.bf16.msra.mxu0 0
    %1514 = vmatprep.mubr.bf16.mxu0 0
    %1515 = vmatmul.mubr.bf16.gmra.mrb[0].mxu0 %v1480
    %v1516 = vpop.f32.mrb[0].mxu0
    %v1517 = vadd.f32 0.0, %v1516
    %v1518 = vpop.f32.mrb[0].mxu0
    %v1519 = vpop.f32.mrb[0].mxu0
    %v1520 = vadd.f32 0.0, %v1519
    %v1521 = vpop.f32.mrb[0].mxu0
    %1522 = vdwg.mxu0
    %v1523 = vlaneseq
    %v1524 = vshrl.u32 %v1523, 7
    %v1525 = vsub.s32 2, %v1524
    %v1526 = vrot.slane %v55, %v1525
    %v1527 = vadd.f32 %v1517, %v1526
    %v1528 = vadd.f32 %v1520, %v1526
    %v1529 = vmul.f32 %v1527, 0.5
    %v1530 = vmul.f32 %v1528, 0.5
    %v1531 = vtanh.pop %v1529
    %v1532 = vtanh.pop %v1530
    %v1533 = vadd.f32 %v1531, 1.0
    %v1534 = vadd.f32 %v1532, 1.0
    %v1535 = vmul.f32 %v1533, 0.5
    %v1536 = vmul.f32 %v1534, 0.5
    %v1537 = vlaneseq
    %v1538 = vshrl.u32 %v1537, 7
    %v1539 = vsub.s32 3, %v1538
    %v1540 = vrot.slane %v55, %v1539
    %1542 = vrot.lane.b32.xlu0 %v1540, 32
    %v1543 = vpop.permute.xlu0 %1542
    %v1545 = vadd.f32 %v1517, %v1543
    %v1546 = vadd.f32 %v1520, %v1543
    %v1547 = vmul.f32 %v1545, 0.5
    %v1548 = vmul.f32 %v1546, 0.5
    %v1549 = vtanh.pop %v1547
    %v1550 = vtanh.pop %v1548
    %v1551 = vadd.f32 %v1549, 1.0
    %v1552 = vadd.f32 %v1550, 1.0
    %v1553 = vmul.f32 %v1551, 0.5
    %v1554 = vmul.f32 %v1552, 0.5
    %v1555 = vlaneseq
    %v1556 = vshrl.u32 %v1555, 7
    %v1557 = vsub.s32 4, %v1556
    %v1558 = vrot.slane %v55, %v1557
    %1560 = vrot.lane.b32.xlu0 %v1558, 64
    %v1561 = vpop.permute.xlu0 %1560
    %v1563 = vadd.f32 %v1517, %v1561
    %v1564 = vadd.f32 %v1520, %v1561
    %v1565 = vlaneseq
    %v1566 = vshrl.u32 %v1565, 7
    %v1567 = vsub.s32 5, %v1566
    %v1568 = vrot.slane %v55, %v1567
    %1570 = vrot.lane.b32.xlu0 %v1568, 96
    %v1571 = vpop.permute.xlu0 %1570
    %v1573 = vadd.f32 %v1517, %v1571
    %v1574 = vadd.f32 %v1520, %v1571
    %1577 = vrot.lane.b32.xlu0 %v1573, 32
    %v1578 = vpop.permute.xlu0 %1577
    %1579 = vrot.lane.b32.xlu0 %v1574, 32
    %v1580 = vpop.permute.xlu0 %1579
    %v1583 = vmul.f32 %v1535, %v1578
    %v1584 = vmul.f32 %v1536, %v1580
    %1587 = vrot.lane.b32.xlu0 %v1583, 64
    %v1588 = vpop.permute.xlu0 %1587
    %1589 = vrot.lane.b32.xlu0 %v1584, 64
    %v1590 = vpop.permute.xlu0 %1589
    %v1593 = vadd.f32 %v1563, %v1588
    %v1594 = vadd.f32 %v1564, %v1590
    %v1595 = vtanh.pop %v1593
    %v1596 = vtanh.pop %v1594
    %v1597 = vsub.f32 1.0, %v1553
    %v1598 = vsub.f32 1.0, %v1554
    %1601 = vrot.lane.b32.xlu0 %v1595, 96
    %v1602 = vpop.permute.xlu0 %1601
    %1603 = vrot.lane.b32.xlu0 %v1596, 96
    %v1604 = vpop.permute.xlu0 %1603
    %v1607 = vmul.f32 %v1597, %v1602
    %v1608 = vmul.f32 %v1598, %v1604
    %v1609 = vmul.f32 %v1553, %v1447
    %v1610 = vmul.f32 %v1554, %v1449
    %v1611 = vadd.f32 %v1607, %v1609
    %v1612 = vadd.f32 %v1608, %v1610
    %v1613 = vpack.c.bf16 %v1612, %v1611
    %1615 = vrot.lane.b32.xlu0 %v1613, 96
    %v1616 = vpop.permute.xlu0 %1615
    %1618 = vmatprep.subr.bf16.mxu0 0
    %1619 = vmatpush1.bf16.msra.mxu0 %v1616
    %1620 = vmatprep.subr.bf16.mxu0 0
    %1621 = vmatpush1.bf16.msra.mxu0 0
    %1622 = vmatprep.subr.bf16.mxu0 0
    %1623 = vmatpush1.bf16.msra.mxu0 0
    %1624 = vmatprep.subr.bf16.mxu0 0
    %1625 = vmatpush1.bf16.msra.mxu0 0
    %1626 = vmatprep.subr.bf16.mxu0 0
    %1627 = vmatpush1.bf16.msra.mxu0 0
    %1628 = vmatprep.subr.bf16.mxu0 0
    %1629 = vmatpush1.bf16.msra.mxu0 0
    %1630 = vmatprep.subr.bf16.mxu0 0
    %1631 = vmatpush1.bf16.msra.mxu0 0
    %1632 = vmatprep.subr.bf16.mxu0 0
    %1633 = vmatpush1.bf16.msra.mxu0 0
    %1634 = vmatprep.subr.bf16.mxu0 0
    %1635 = vmatpush1.bf16.msra.mxu0 0
    %1636 = vmatprep.subr.bf16.mxu0 0
    %1637 = vmatpush1.bf16.msra.mxu0 0
    %1638 = vmatprep.subr.bf16.mxu0 0
    %1639 = vmatpush1.bf16.msra.mxu0 0
    %1640 = vmatprep.subr.bf16.mxu0 0
    %1641 = vmatpush1.bf16.msra.mxu0 0
    %1642 = vmatprep.subr.bf16.mxu0 0
    %1643 = vmatpush1.bf16.msra.mxu0 0
    %1644 = vmatprep.subr.bf16.mxu0 0
    %1645 = vmatpush1.bf16.msra.mxu0 0
    %1646 = vmatprep.subr.bf16.mxu0 0
    %1647 = vmatpush1.bf16.msra.mxu0 0
    %1648 = vmatprep.subr.bf16.mxu0 0
    %1649 = vmatpush1.bf16.msra.mxu0 0
    %1650 = vmatprep.mubr.bf16.mxu0 0
    %1651 = vmatmul.mubr.bf16.gmra.mrb[0].mxu0 %v655
    %v1652 = vpop.f32.mrb[0].mxu0
    %v1653 = vadd.f32 0.0, %v1652
    %v1654 = vpop.f32.mrb[0].mxu0
    %v1655 = vpop.f32.mrb[0].mxu0
    %v1656 = vadd.f32 0.0, %v1655
    %v1657 = vpop.f32.mrb[0].mxu0
    %1658 = vmatprep.mubr.bf16.mxu0 0
    %1659 = vmatmul.mubr.bf16.gmra.mrb[0].mxu0 %v658
    %v1660 = vpop.f32.mrb[0].mxu0
    %v1661 = vadd.f32 0.0, %v1660
    %v1662 = vpop.f32.mrb[0].mxu0
    %v1663 = vpop.f32.mrb[0].mxu0
    %v1664 = vadd.f32 0.0, %v1663
    %v1665 = vpop.f32.mrb[0].mxu0
    %1666 = vdwg.mxu0
    %1671 = vrot.lane.b32.xlu0 %v1653, 32
    %v1672 = vpop.permute.xlu0 %1671
    %1673 = vrot.lane.b32.xlu0 %v1656, 32
    %v1674 = vpop.permute.xlu0 %1673
    %1675 = vrot.lane.b32.xlu0 %v1661, 32
    %v1676 = vpop.permute.xlu0 %1675
    %1677 = vrot.lane.b32.xlu0 %v1664, 32
    %v1678 = vpop.permute.xlu0 %1677
    %1683 = vrot.lane.b32.xlu0 %v1653, 64
    %v1684 = vpop.permute.xlu0 %1683
    %1685 = vrot.lane.b32.xlu0 %v1656, 64
    %v1686 = vpop.permute.xlu0 %1685
    %1687 = vrot.lane.b32.xlu0 %v1661, 64
    %v1688 = vpop.permute.xlu0 %1687
    %1689 = vrot.lane.b32.xlu0 %v1664, 64
    %v1690 = vpop.permute.xlu0 %1689
    %1695 = vrot.lane.b32.xlu0 %v1653, 96
    %v1696 = vpop.permute.xlu0 %1695
    %1697 = vrot.lane.b32.xlu0 %v1656, 96
    %v1698 = vpop.permute.xlu0 %1697
    %1699 = vrot.lane.b32.xlu0 %v1661, 96
    %v1700 = vpop.permute.xlu0 %1699
    %1701 = vrot.lane.b32.xlu0 %v1664, 96
    %v1702 = vpop.permute.xlu0 %1701
    %v1707 = vsel %vm364, %v1653, %v1672
    %v1708 = vsel %vm364, %v1656, %v1674
    %v1709 = vsel %vm364, %v1661, %v1676
    %v1710 = vsel %vm364, %v1664, %v1678
    %v1711 = vsel %vm753, %v1707, %v1684
    %v1712 = vsel %vm753, %v1708, %v1686
    %v1713 = vsel %vm753, %v1709, %v1688
    %v1714 = vsel %vm753, %v1710, %v1690
    %v1715 = vsel %vm758, %v1711, %v1696
    %v1716 = vsel %vm758, %v1712, %v1698
    %v1717 = vsel %vm758, %v1713, %v1700
    %v1718 = vsel %vm758, %v1714, %v1702
    %v1719 = vmul.f32 %v406, %v1715
    %v1720 = vmul.f32 %v408, %v1715
    %v1721 = vmul.f32 %v459, %v1715
    %v1722 = vmul.f32 %v461, %v1715
    %v1723 = vmul.f32 %v512, %v1715
    %v1724 = vmul.f32 %v514, %v1715
    %v1725 = vmul.f32 %v565, %v1715
    %v1726 = vmul.f32 %v567, %v1715
    %v1727 = vmul.f32 %v410, %v1716
    %v1728 = vmul.f32 %v412, %v1716
    %v1729 = vmul.f32 %v463, %v1716
    %v1730 = vmul.f32 %v465, %v1716
    %v1731 = vmul.f32 %v516, %v1716
    %v1732 = vmul.f32 %v518, %v1716
    %v1733 = vmul.f32 %v569, %v1716
    %v1734 = vmul.f32 %v571, %v1716
    %v1735 = vmul.f32 %v416, %v1717
    %v1736 = vmul.f32 %v418, %v1717
    %v1737 = vmul.f32 %v469, %v1717
    %v1738 = vmul.f32 %v471, %v1717
    %v1739 = vmul.f32 %v522, %v1717
    %v1740 = vmul.f32 %v524, %v1717
    %v1741 = vmul.f32 %v575, %v1717
    %v1742 = vmul.f32 %v577, %v1717
    %v1743 = vmul.f32 %v420, %v1718
    %v1744 = vmul.f32 %v422, %v1718
    %v1745 = vmul.f32 %v473, %v1718
    %v1746 = vmul.f32 %v475, %v1718
    %v1747 = vmul.f32 %v526, %v1718
    %v1748 = vmul.f32 %v528, %v1718
    %v1749 = vmul.f32 %v579, %v1718
    %v1750 = vmul.f32 %v581, %v1718
    %v1751 = vpack.c.bf16 %v1727, %v1719
    %v1752 = vpack.c.bf16 %v1728, %v1720
    %v1753 = vpack.c.bf16 %v1729, %v1721
    %v1754 = vpack.c.bf16 %v1730, %v1722
    %v1755 = vpack.c.bf16 %v1731, %v1723
    %v1756 = vpack.c.bf16 %v1732, %v1724
    %v1757 = vpack.c.bf16 %v1733, %v1725
    %v1758 = vpack.c.bf16 %v1734, %v1726
    %v1759 = vpack.c.bf16 %v1743, %v1735
    %v1760 = vpack.c.bf16 %v1744, %v1736
    %v1761 = vpack.c.bf16 %v1745, %v1737
    %v1762 = vpack.c.bf16 %v1746, %v1738
    %v1763 = vpack.c.bf16 %v1747, %v1739
    %v1764 = vpack.c.bf16 %v1748, %v1740
    %v1765 = vpack.c.bf16 %v1749, %v1741
    %v1766 = vpack.c.bf16 %v1750, %v1742
    %1767 = vmatprep.subr.bf16.mxu0 0
    %1768 = vmatpush1.bf16.msra.mxu0 %v1067
    %1769 = vmatprep.subr.bf16.mxu0 0
    %1770 = vmatpush1.bf16.msra.mxu0 %v1068
    %1771 = vmatprep.subr.bf16.mxu0 0
    %1772 = vmatpush1.bf16.msra.mxu0 %v1069
    %1773 = vmatprep.subr.bf16.mxu0 0
    %1774 = vmatpush1.bf16.msra.mxu0 %v1070
    %1775 = vmatprep.subr.bf16.mxu0 0
    %1776 = vmatpush1.bf16.msra.mxu0 %v1071
    %1777 = vmatprep.subr.bf16.mxu0 0
    %1778 = vmatpush1.bf16.msra.mxu0 %v1072
    %1779 = vmatprep.subr.bf16.mxu0 0
    %1780 = vmatpush1.bf16.msra.mxu0 %v1073
    %1781 = vmatprep.subr.bf16.mxu0 0
    %1782 = vmatpush1.bf16.msra.mxu0 %v1074
    %1783 = vmatprep.subr.bf16.mxu0 0
    %1784 = vmatpush1.bf16.msra.mxu0 %v1075
    %1785 = vmatprep.subr.bf16.mxu0 0
    %1786 = vmatpush1.bf16.msra.mxu0 %v1076
    %1787 = vmatprep.subr.bf16.mxu0 0
    %1788 = vmatpush1.bf16.msra.mxu0 %v1077
    %1789 = vmatprep.subr.bf16.mxu0 0
    %1790 = vmatpush1.bf16.msra.mxu0 %v1078
    %1791 = vmatprep.subr.bf16.mxu0 0
    %1792 = vmatpush1.bf16.msra.mxu0 %v1079
    %1793 = vmatprep.subr.bf16.mxu0 0
    %1794 = vmatpush1.bf16.msra.mxu0 %v1080
    %1795 = vmatprep.subr.bf16.mxu0 0
    %1796 = vmatpush1.bf16.msra.mxu0 %v1081
    %1797 = vmatprep.subr.bf16.mxu0 0
    %1798 = vmatpush1.bf16.msra.mxu0 %v1082
    %1799 = vmatprep.mubr.bf16.mxu0 %v1752
    %1800 = vmatmul.mubr.bf16.gmra.mrb[0].mxu0 %v1751
    %v1801 = vpop.f32.mrb[0].mxu0
    %v1802 = vadd.f32 0.0, %v1801
    %v1803 = vpop.f32.mrb[0].mxu0
    %v1804 = vpop.f32.mrb[0].mxu0
    %v1805 = vadd.f32 0.0, %v1804
    %v1806 = vpop.f32.mrb[0].mxu0
    %1807 = vmatprep.mubr.bf16.mxu0 %v1760
    %1808 = vmatmul.mubr.bf16.gmra.mrb[0].mxu0 %v1759
    %v1809 = vpop.f32.mrb[0].mxu0
    %v1810 = vadd.f32 0.0, %v1809
    %v1811 = vpop.f32.mrb[0].mxu0
    %v1812 = vpop.f32.mrb[0].mxu0
    %v1813 = vadd.f32 0.0, %v1812
    %v1814 = vpop.f32.mrb[0].mxu0
    %1815 = vdwg.mxu0
    %1816 = vmatprep.subr.bf16.mxu0 0
    %1817 = vmatpush1.bf16.msra.mxu0 %v1083
    %1818 = vmatprep.subr.bf16.mxu0 0
    %1819 = vmatpush1.bf16.msra.mxu0 %v1084
    %1820 = vmatprep.subr.bf16.mxu0 0
    %1821 = vmatpush1.bf16.msra.mxu0 %v1085
    %1822 = vmatprep.subr.bf16.mxu0 0
    %1823 = vmatpush1.bf16.msra.mxu0 %v1086
    %1824 = vmatprep.subr.bf16.mxu0 0
    %1825 = vmatpush1.bf16.msra.mxu0 %v1087
    %1826 = vmatprep.subr.bf16.mxu0 0
    %1827 = vmatpush1.bf16.msra.mxu0 %v1088
    %1828 = vmatprep.subr.bf16.mxu0 0
    %1829 = vmatpush1.bf16.msra.mxu0 %v1089
    %1830 = vmatprep.subr.bf16.mxu0 0
    %1831 = vmatpush1.bf16.msra.mxu0 %v1090
    %1832 = vmatprep.subr.bf16.mxu0 0
    %1833 = vmatpush1.bf16.msra.mxu0 %v1091
    %1834 = vmatprep.subr.bf16.mxu0 0
    %1835 = vmatpush1.bf16.msra.mxu0 %v1092
    %1836 = vmatprep.subr.bf16.mxu0 0
    %1837 = vmatpush1.bf16.msra.mxu0 %v1093
    %1838 = vmatprep.subr.bf16.mxu0 0
    %1839 = vmatpush1.bf16.msra.mxu0 %v1094
    %1840 = vmatprep.subr.bf16.mxu0 0
    %1841 = vmatpush1.bf16.msra.mxu0 %v1095
    %1842 = vmatprep.subr.bf16.mxu0 0
    %1843 = vmatpush1.bf16.msra.mxu0 %v1096
    %1844 = vmatprep.subr.bf16.mxu0 0
    %1845 = vmatpush1.bf16.msra.mxu0 %v1097
    %1846 = vmatprep.subr.bf16.mxu0 0
    %1847 = vmatpush1.bf16.msra.mxu0 %v1098
    %1848 = vmatprep.mubr.bf16.mxu0 %v1754
    %1849 = vmatmul.mubr.bf16.gmra.mrb[0].mxu0 %v1753
    %v1850 = vpop.f32.mrb[0].mxu0
    %v1851 = vadd.f32 %v1802, %v1850
    %v1852 = vpop.f32.mrb[0].mxu0
    %v1853 = vpop.f32.mrb[0].mxu0
    %v1854 = vadd.f32 %v1805, %v1853
    %v1855 = vpop.f32.mrb[0].mxu0
    %1856 = vmatprep.mubr.bf16.mxu0 %v1762
    %1857 = vmatmul.mubr.bf16.gmra.mrb[0].mxu0 %v1761
    %v1858 = vpop.f32.mrb[0].mxu0
    %v1859 = vadd.f32 %v1810, %v1858
    %v1860 = vpop.f32.mrb[0].mxu0
    %v1861 = vpop.f32.mrb[0].mxu0
    %v1862 = vadd.f32 %v1813, %v1861
    %v1863 = vpop.f32.mrb[0].mxu0
    %1864 = vdwg.mxu0
    %1865 = vmatprep.subr.bf16.mxu0 0
    %1866 = vmatpush1.bf16.msra.mxu0 %v1099
    %1867 = vmatprep.subr.bf16.mxu0 0
    %1868 = vmatpush1.bf16.msra.mxu0 %v1100
    %1869 = vmatprep.subr.bf16.mxu0 0
    %1870 = vmatpush1.bf16.msra.mxu0 %v1101
    %1871 = vmatprep.subr.bf16.mxu0 0
    %1872 = vmatpush1.bf16.msra.mxu0 %v1102
    %1873 = vmatprep.subr.bf16.mxu0 0
    %1874 = vmatpush1.bf16.msra.mxu0 %v1103
    %1875 = vmatprep.subr.bf16.mxu0 0
    %1876 = vmatpush1.bf16.msra.mxu0 %v1104
    %1877 = vmatprep.subr.bf16.mxu0 0
    %1878 = vmatpush1.bf16.msra.mxu0 %v1105
    %1879 = vmatprep.subr.bf16.mxu0 0
    %1880 = vmatpush1.bf16.msra.mxu0 %v1106
    %1881 = vmatprep.subr.bf16.mxu0 0
    %1882 = vmatpush1.bf16.msra.mxu0 %v1107
    %1883 = vmatprep.subr.bf16.mxu0 0
    %1884 = vmatpush1.bf16.msra.mxu0 %v1108
    %1885 = vmatprep.subr.bf16.mxu0 0
    %1886 = vmatpush1.bf16.msra.mxu0 %v1109
    %1887 = vmatprep.subr.bf16.mxu0 0
    %1888 = vmatpush1.bf16.msra.mxu0 %v1110
    %1889 = vmatprep.subr.bf16.mxu0 0
    %1890 = vmatpush1.bf16.msra.mxu0 %v1111
    %1891 = vmatprep.subr.bf16.mxu0 0
    %1892 = vmatpush1.bf16.msra.mxu0 %v1112
    %1893 = vmatprep.subr.bf16.mxu0 0
    %1894 = vmatpush1.bf16.msra.mxu0 %v1113
    %1895 = vmatprep.subr.bf16.mxu0 0
    %1896 = vmatpush1.bf16.msra.mxu0 %v1114
    %1897 = vmatprep.mubr.bf16.mxu0 %v1756
    %1898 = vmatmul.mubr.bf16.gmra.mrb[0].mxu0 %v1755
    %v1899 = vpop.f32.mrb[0].mxu0
    %v1900 = vadd.f32 %v1851, %v1899
    %v1901 = vpop.f32.mrb[0].mxu0
    %v1902 = vpop.f32.mrb[0].mxu0
    %v1903 = vadd.f32 %v1854, %v1902
    %v1904 = vpop.f32.mrb[0].mxu0
    %1905 = vmatprep.mubr.bf16.mxu0 %v1764
    %1906 = vmatmul.mubr.bf16.gmra.mrb[0].mxu0 %v1763
    %v1907 = vpop.f32.mrb[0].mxu0
    %v1908 = vadd.f32 %v1859, %v1907
    %v1909 = vpop.f32.mrb[0].mxu0
    %v1910 = vpop.f32.mrb[0].mxu0
    %v1911 = vadd.f32 %v1862, %v1910
    %v1912 = vpop.f32.mrb[0].mxu0
    %1913 = vdwg.mxu0
    %1914 = vmatprep.subr.bf16.mxu0 0
    %1915 = vmatpush1.bf16.msra.mxu0 %v1115
    %1916 = vmatprep.subr.bf16.mxu0 0
    %1917 = vmatpush1.bf16.msra.mxu0 %v1116
    %1918 = vmatprep.subr.bf16.mxu0 0
    %1919 = vmatpush1.bf16.msra.mxu0 %v1117
    %1920 = vmatprep.subr.bf16.mxu0 0
    %1921 = vmatpush1.bf16.msra.mxu0 %v1118
    %1922 = vmatprep.subr.bf16.mxu0 0
    %1923 = vmatpush1.bf16.msra.mxu0 %v1119
    %1924 = vmatprep.subr.bf16.mxu0 0
    %1925 = vmatpush1.bf16.msra.mxu0 %v1120
    %1926 = vmatprep.subr.bf16.mxu0 0
    %1927 = vmatpush1.bf16.msra.mxu0 %v1121
    %1928 = vmatprep.subr.bf16.mxu0 0
    %1929 = vmatpush1.bf16.msra.mxu0 %v1122
    %1930 = vmatprep.subr.bf16.mxu0 0
    %1931 = vmatpush1.bf16.msra.mxu0 %v1123
    %1932 = vmatprep.subr.bf16.mxu0 0
    %1933 = vmatpush1.bf16.msra.mxu0 %v1124
    %1934 = vmatprep.subr.bf16.mxu0 0
    %1935 = vmatpush1.bf16.msra.mxu0 %v1125
    %1936 = vmatprep.subr.bf16.mxu0 0
    %1937 = vmatpush1.bf16.msra.mxu0 %v1126
    %1938 = vmatprep.subr.bf16.mxu0 0
    %1939 = vmatpush1.bf16.msra.mxu0 %v1127
    %1940 = vmatprep.subr.bf16.mxu0 0
    %1941 = vmatpush1.bf16.msra.mxu0 %v1128
    %1942 = vmatprep.subr.bf16.mxu0 0
    %1943 = vmatpush1.bf16.msra.mxu0 %v1129
    %1944 = vmatprep.subr.bf16.mxu0 0
    %1945 = vmatpush1.bf16.msra.mxu0 %v1130
    %1946 = vmatprep.mubr.bf16.mxu0 %v1758
    %1947 = vmatmul.mubr.bf16.gmra.mrb[0].mxu0 %v1757
    %v1948 = vpop.f32.mrb[0].mxu0
    %v1949 = vadd.f32 %v1900, %v1948
    %v1950 = vpop.f32.mrb[0].mxu0
    %v1951 = vpop.f32.mrb[0].mxu0
    %v1952 = vadd.f32 %v1903, %v1951
    %v1953 = vpop.f32.mrb[0].mxu0
    %1954 = vmatprep.mubr.bf16.mxu0 %v1766
    %1955 = vmatmul.mubr.bf16.gmra.mrb[0].mxu0 %v1765
    %v1956 = vpop.f32.mrb[0].mxu0
    %v1957 = vadd.f32 %v1908, %v1956
    %v1958 = vpop.f32.mrb[0].mxu0
    %v1959 = vpop.f32.mrb[0].mxu0
    %v1960 = vadd.f32 %v1911, %v1959
    %v1961 = vpop.f32.mrb[0].mxu0
    %1962 = vdwg.mxu0
    %v1963 = vpack.c.bf16 %v1952, %v1949
    %v1964 = vpack.c.bf16 %v1960, %v1957
    %1965 = vmatprep.subr.bf16.mxu0 0
    %1966 = vmatpush1.bf16.msra.mxu0 %v1963
    %1967 = vmatprep.subr.bf16.mxu0 0
    %1968 = vmatpush1.bf16.msra.mxu0 %v1964
    %1969 = vmatprep.subr.bf16.mxu0 0
    %1970 = vmatpush1.bf16.msra.mxu0 0
    %1971 = vmatprep.subr.bf16.mxu0 0
    %1972 = vmatpush1.bf16.msra.mxu0 0
    %1973 = vmatprep.subr.bf16.mxu0 0
    %1974 = vmatpush1.bf16.msra.mxu0 0
    %1975 = vmatprep.subr.bf16.mxu0 0
    %1976 = vmatpush1.bf16.msra.mxu0 0
    %1977 = vmatprep.subr.bf16.mxu0 0
    %1978 = vmatpush1.bf16.msra.mxu0 0
    %1979 = vmatprep.subr.bf16.mxu0 0
    %1980 = vmatpush1.bf16.msra.mxu0 0
    %1981 = vmatprep.subr.bf16.mxu0 0
    %1982 = vmatpush1.bf16.msra.mxu0 0
    %1983 = vmatprep.subr.bf16.mxu0 0
    %1984 = vmatpush1.bf16.msra.mxu0 0
    %1985 = vmatprep.subr.bf16.mxu0 0
    %1986 = vmatpush1.bf16.msra.mxu0 0
    %1987 = vmatprep.subr.bf16.mxu0 0
    %1988 = vmatpush1.bf16.msra.mxu0 0
    %1989 = vmatprep.subr.bf16.mxu0 0
    %1990 = vmatpush1.bf16.msra.mxu0 0
    %1991 = vmatprep.subr.bf16.mxu0 0
    %1992 = vmatpush1.bf16.msra.mxu0 0
    %1993 = vmatprep.subr.bf16.mxu0 0
    %1994 = vmatpush1.bf16.msra.mxu0 0
    %1995 = vmatprep.subr.bf16.mxu0 0
    %1996 = vmatpush1.bf16.msra.mxu0 0
    %1997 = vmatprep.mubr.bf16.mxu0 0
    %1998 = vmatmul.mubr.bf16.gmra.mrb[0].mxu0 %v1399
    %v1999 = vpop.f32.mrb[0].mxu0
    %v2000 = vadd.f32 0.0, %v1999
    %v2001 = vpop.f32.mrb[0].mxu0
    %v2002 = vpop.f32.mrb[0].mxu0
    %v2003 = vadd.f32 0.0, %v2002
    %v2004 = vpop.f32.mrb[0].mxu0
    %2005 = vdwg.mxu0
    %v2006 = vmax.f32 %v2000, 0.0
    %v2007 = vmax.f32 %v2003, 0.0
    %v2008 = vsel %vm364, %v2006, %v1611
    %v2009 = vsel %vm364, %v2007, %v1612
    %v2010 = vpack.c.bf16 %v2009, %v2008
    %v2012 = vsel %vm753, %v2010, 0
    %2014 = vmatprep.subr.bf16.mxu0 0
    %2015 = vmatpush1.bf16.msra.mxu0 %v1471
    %2016 = vmatprep.subr.bf16.mxu0 0
    %2017 = vmatpush1.bf16.msra.mxu0 %v1472
    %2018 = vmatprep.subr.bf16.mxu0 0
    %2019 = vmatpush1.bf16.msra.mxu0 %v1473
    %2020 = vmatprep.subr.bf16.mxu0 0
    %2021 = vmatpush1.bf16.msra.mxu0 %v1474
    %2022 = vmatprep.subr.bf16.mxu0 0
    %2023 = vmatpush1.bf16.msra.mxu0 0
    %2024 = vmatprep.subr.bf16.mxu0 0
    %2025 = vmatpush1.bf16.msra.mxu0 0
    %2026 = vmatprep.subr.bf16.mxu0 0
    %2027 = vmatpush1.bf16.msra.mxu0 0
    %2028 = vmatprep.subr.bf16.mxu0 0
    %2029 = vmatpush1.bf16.msra.mxu0 0
    %2030 = vmatprep.subr.bf16.mxu0 0
    %2031 = vmatpush1.bf16.msra.mxu0 0
    %2032 = vmatprep.subr.bf16.mxu0 0
    %2033 = vmatpush1.bf16.msra.mxu0 0
    %2034 = vmatprep.subr.bf16.mxu0 0
    %2035 = vmatpush1.bf16.msra.mxu0 0
    %2036 = vmatprep.subr.bf16.mxu0 0
    %2037 = vmatpush1.bf16.msra.mxu0 0
    %2038 = vmatprep.subr.bf16.mxu0 0
    %2039 = vmatpush1.bf16.msra.mxu0 0
    %2040 = vmatprep.subr.bf16.mxu0 0
    %2041 = vmatpush1.bf16.msra.mxu0 0
    %2042 = vmatprep.subr.bf16.mxu0 0
    %2043 = vmatpush1.bf16.msra.mxu0 0
    %2044 = vmatprep.subr.bf16.mxu0 0
    %2045 = vmatpush1.bf16.msra.mxu0 0
    %2046 = vmatprep.mubr.bf16.mxu0 0
    %2047 = vmatmul.mubr.bf16.gmra.mrb[0].mxu0 %v2012
    %v2048 = vpop.f32.mrb[0].mxu0
    %v2049 = vadd.f32 0.0, %v2048
    %v2050 = vpop.f32.mrb[0].mxu0
    %v2051 = vpop.f32.mrb[0].mxu0
    %v2052 = vadd.f32 0.0, %v2051
    %v2053 = vpop.f32.mrb[0].mxu0
    %2054 = vdwg.mxu0
    %v2055 = vadd.f32 %v2049, %v1526
    %v2056 = vadd.f32 %v2052, %v1526
    %v2057 = vmul.f32 %v2055, 0.5
    %v2058 = vmul.f32 %v2056, 0.5
    %v2059 = vtanh.pop %v2057
    %v2060 = vtanh.pop %v2058
    %v2061 = vadd.f32 %v2059, 1.0
    %v2062 = vadd.f32 %v2060, 1.0
    %v2063 = vmul.f32 %v2061, 0.5
    %v2064 = vmul.f32 %v2062, 0.5
    %v2065 = vadd.f32 %v2049, %v1543
    %v2066 = vadd.f32 %v2052, %v1543
    %v2067 = vmul.f32 %v2065, 0.5
    %v2068 = vmul.f32 %v2066, 0.5
    %v2069 = vtanh.pop %v2067
    %v2070 = vtanh.pop %v2068
    %v2071 = vadd.f32 %v2069, 1.0
    %v2072 = vadd.f32 %v2070, 1.0
    %v2073 = vmul.f32 %v2071, 0.5
    %v2074 = vmul.f32 %v2072, 0.5
    %v2075 = vadd.f32 %v2049, %v1561
    %v2076 = vadd.f32 %v2052, %v1561
    %v2077 = vadd.f32 %v2049, %v1571
    %v2078 = vadd.f32 %v2052, %v1571
    %2081 = vrot.lane.b32.xlu0 %v2077, 32
    %v2082 = vpop.permute.xlu0 %2081
    %2083 = vrot.lane.b32.xlu0 %v2078, 32
    %v2084 = vpop.permute.xlu0 %2083
    %v2087 = vmul.f32 %v2063, %v2082
    %v2088 = vmul.f32 %v2064, %v2084
    %2091 = vrot.lane.b32.xlu0 %v2087, 64
    %v2092 = vpop.permute.xlu0 %2091
    %2093 = vrot.lane.b32.xlu0 %v2088, 64
    %v2094 = vpop.permute.xlu0 %2093
    %v2097 = vadd.f32 %v2075, %v2092
    %v2098 = vadd.f32 %v2076, %v2094
    %v2099 = vtanh.pop %v2097
    %v2100 = vtanh.pop %v2098
    %v2101 = vsub.f32 1.0, %v2073
    %v2102 = vsub.f32 1.0, %v2074
    %2105 = vrot.lane.b32.xlu0 %v2099, 96
    %v2106 = vpop.permute.xlu0 %2105
    %2107 = vrot.lane.b32.xlu0 %v2100, 96
    %v2108 = vpop.permute.xlu0 %2107
    %v2111 = vmul.f32 %v2101, %v2106
    %v2112 = vmul.f32 %v2102, %v2108
    %v2113 = vmul.f32 %v2073, %v1611
    %v2114 = vmul.f32 %v2074, %v1612
    %v2115 = vadd.f32 %v2111, %v2113
    %v2116 = vadd.f32 %v2112, %v2114
    %v2117 = vpack.c.bf16 %v2116, %v2115
    %2119 = vrot.lane.b32.xlu0 %v2117, 96
    %v2120 = vpop.permute.xlu0 %2119
    %2122 = vmatprep.subr.bf16.mxu0 0
    %2123 = vmatpush1.bf16.msra.mxu0 %v2120
    %2124 = vmatprep.subr.bf16.mxu0 0
    %2125 = vmatpush1.bf16.msra.mxu0 0
    %2126 = vmatprep.subr.bf16.mxu0 0
    %2127 = vmatpush1.bf16.msra.mxu0 0
    %2128 = vmatprep.subr.bf16.mxu0 0
    %2129 = vmatpush1.bf16.msra.mxu0 0
    %2130 = vmatprep.subr.bf16.mxu0 0
    %2131 = vmatpush1.bf16.msra.mxu0 0
    %2132 = vmatprep.subr.bf16.mxu0 0
    %2133 = vmatpush1.bf16.msra.mxu0 0
    %2134 = vmatprep.subr.bf16.mxu0 0
    %2135 = vmatpush1.bf16.msra.mxu0 0
    %2136 = vmatprep.subr.bf16.mxu0 0
    %2137 = vmatpush1.bf16.msra.mxu0 0
    %2138 = vmatprep.subr.bf16.mxu0 0
    %2139 = vmatpush1.bf16.msra.mxu0 0
    %2140 = vmatprep.subr.bf16.mxu0 0
    %2141 = vmatpush1.bf16.msra.mxu0 0
    %2142 = vmatprep.subr.bf16.mxu0 0
    %2143 = vmatpush1.bf16.msra.mxu0 0
    %2144 = vmatprep.subr.bf16.mxu0 0
    %2145 = vmatpush1.bf16.msra.mxu0 0
    %2146 = vmatprep.subr.bf16.mxu0 0
    %2147 = vmatpush1.bf16.msra.mxu0 0
    %2148 = vmatprep.subr.bf16.mxu0 0
    %2149 = vmatpush1.bf16.msra.mxu0 0
    %2150 = vmatprep.subr.bf16.mxu0 0
    %2151 = vmatpush1.bf16.msra.mxu0 0
    %2152 = vmatprep.subr.bf16.mxu0 0
    %2153 = vmatpush1.bf16.msra.mxu0 0
    %2154 = vmatprep.mubr.bf16.mxu0 0
    %2155 = vmatmul.mubr.bf16.gmra.mrb[0].mxu0 %v655
    %v2156 = vpop.f32.mrb[0].mxu0
    %v2157 = vadd.f32 0.0, %v2156
    %v2158 = vpop.f32.mrb[0].mxu0
    %v2159 = vpop.f32.mrb[0].mxu0
    %v2160 = vadd.f32 0.0, %v2159
    %v2161 = vpop.f32.mrb[0].mxu0
    %2162 = vmatprep.mubr.bf16.mxu0 0
    %2163 = vmatmul.mubr.bf16.gmra.mrb[0].mxu0 %v658
    %v2164 = vpop.f32.mrb[0].mxu0
    %v2165 = vadd.f32 0.0, %v2164
    %v2166 = vpop.f32.mrb[0].mxu0
    %v2167 = vpop.f32.mrb[0].mxu0
    %v2168 = vadd.f32 0.0, %v2167
    %v2169 = vpop.f32.mrb[0].mxu0
    %2170 = vdwg.mxu0
    %2175 = vrot.lane.b32.xlu0 %v2157, 32
    %v2176 = vpop.permute.xlu0 %2175
    %2177 = vrot.lane.b32.xlu0 %v2160, 32
    %v2178 = vpop.permute.xlu0 %2177
    %2179 = vrot.lane.b32.xlu0 %v2165, 32
    %v2180 = vpop.permute.xlu0 %2179
    %2181 = vrot.lane.b32.xlu0 %v2168, 32
    %v2182 = vpop.permute.xlu0 %2181
    %2187 = vrot.lane.b32.xlu0 %v2157, 64
    %v2188 = vpop.permute.xlu0 %2187
    %2189 = vrot.lane.b32.xlu0 %v2160, 64
    %v2190 = vpop.permute.xlu0 %2189
    %2191 = vrot.lane.b32.xlu0 %v2165, 64
    %v2192 = vpop.permute.xlu0 %2191
    %2193 = vrot.lane.b32.xlu0 %v2168, 64
    %v2194 = vpop.permute.xlu0 %2193
    %2199 = vrot.lane.b32.xlu0 %v2157, 96
    %v2200 = vpop.permute.xlu0 %2199
    %2201 = vrot.lane.b32.xlu0 %v2160, 96
    %v2202 = vpop.permute.xlu0 %2201
    %2203 = vrot.lane.b32.xlu0 %v2165, 96
    %v2204 = vpop.permute.xlu0 %2203
    %2205 = vrot.lane.b32.xlu0 %v2168, 96
    %v2206 = vpop.permute.xlu0 %2205
    %v2211 = vsel %vm364, %v2157, %v2176
    %v2212 = vsel %vm364, %v2160, %v2178
    %v2213 = vsel %vm364, %v2165, %v2180
    %v2214 = vsel %vm364, %v2168, %v2182
    %v2215 = vsel %vm753, %v2211, %v2188
    %v2216 = vsel %vm753, %v2212, %v2190
    %v2217 = vsel %vm753, %v2213, %v2192
    %v2218 = vsel %vm753, %v2214, %v2194
    %v2219 = vsel %vm758, %v2215, %v2200
    %v2220 = vsel %vm758, %v2216, %v2202
    %v2221 = vsel %vm758, %v2217, %v2204
    %v2222 = vsel %vm758, %v2218, %v2206
    %v2223 = vmul.f32 %v406, %v2219
    %v2224 = vmul.f32 %v408, %v2219
    %v2225 = vmul.f32 %v459, %v2219
    %v2226 = vmul.f32 %v461, %v2219
    %v2227 = vmul.f32 %v512, %v2219
    %v2228 = vmul.f32 %v514, %v2219
    %v2229 = vmul.f32 %v565, %v2219
    %v2230 = vmul.f32 %v567, %v2219
    %v2231 = vmul.f32 %v410, %v2220
    %v2232 = vmul.f32 %v412, %v2220
    %v2233 = vmul.f32 %v463, %v2220
    %v2234 = vmul.f32 %v465, %v2220
    %v2235 = vmul.f32 %v516, %v2220
    %v2236 = vmul.f32 %v518, %v2220
    %v2237 = vmul.f32 %v569, %v2220
    %v2238 = vmul.f32 %v571, %v2220
    %v2239 = vmul.f32 %v416, %v2221
    %v2240 = vmul.f32 %v418, %v2221
    %v2241 = vmul.f32 %v469, %v2221
    %v2242 = vmul.f32 %v471, %v2221
    %v2243 = vmul.f32 %v522, %v2221
    %v2244 = vmul.f32 %v524, %v2221
    %v2245 = vmul.f32 %v575, %v2221
    %v2246 = vmul.f32 %v577, %v2221
    %v2247 = vmul.f32 %v420, %v2222
    %v2248 = vmul.f32 %v422, %v2222
    %v2249 = vmul.f32 %v473, %v2222
    %v2250 = vmul.f32 %v475, %v2222
    %v2251 = vmul.f32 %v526, %v2222
    %v2252 = vmul.f32 %v528, %v2222
    %v2253 = vmul.f32 %v579, %v2222
    %v2254 = vmul.f32 %v581, %v2222
    %v2255 = vpack.c.bf16 %v2231, %v2223
    %v2256 = vpack.c.bf16 %v2232, %v2224
    %v2257 = vpack.c.bf16 %v2233, %v2225
    %v2258 = vpack.c.bf16 %v2234, %v2226
    %v2259 = vpack.c.bf16 %v2235, %v2227
    %v2260 = vpack.c.bf16 %v2236, %v2228
    %v2261 = vpack.c.bf16 %v2237, %v2229
    %v2262 = vpack.c.bf16 %v2238, %v2230
    %v2263 = vpack.c.bf16 %v2247, %v2239
    %v2264 = vpack.c.bf16 %v2248, %v2240
    %v2265 = vpack.c.bf16 %v2249, %v2241
    %v2266 = vpack.c.bf16 %v2250, %v2242
    %v2267 = vpack.c.bf16 %v2251, %v2243
    %v2268 = vpack.c.bf16 %v2252, %v2244
    %v2269 = vpack.c.bf16 %v2253, %v2245
    %v2270 = vpack.c.bf16 %v2254, %v2246
    %2271 = vmatprep.subr.bf16.mxu0 0
    %2272 = vmatpush1.bf16.msra.mxu0 %v1067
    %2273 = vmatprep.subr.bf16.mxu0 0
    %2274 = vmatpush1.bf16.msra.mxu0 %v1068
    %2275 = vmatprep.subr.bf16.mxu0 0
    %2276 = vmatpush1.bf16.msra.mxu0 %v1069
    %2277 = vmatprep.subr.bf16.mxu0 0
    %2278 = vmatpush1.bf16.msra.mxu0 %v1070
    %2279 = vmatprep.subr.bf16.mxu0 0
    %2280 = vmatpush1.bf16.msra.mxu0 %v1071
    %2281 = vmatprep.subr.bf16.mxu0 0
    %2282 = vmatpush1.bf16.msra.mxu0 %v1072
    %2283 = vmatprep.subr.bf16.mxu0 0
    %2284 = vmatpush1.bf16.msra.mxu0 %v1073
    %2285 = vmatprep.subr.bf16.mxu0 0
    %2286 = vmatpush1.bf16.msra.mxu0 %v1074
    %2287 = vmatprep.subr.bf16.mxu0 0
    %2288 = vmatpush1.bf16.msra.mxu0 %v1075
    %2289 = vmatprep.subr.bf16.mxu0 0
    %2290 = vmatpush1.bf16.msra.mxu0 %v1076
    %2291 = vmatprep.subr.bf16.mxu0 0
    %2292 = vmatpush1.bf16.msra.mxu0 %v1077
    %2293 = vmatprep.subr.bf16.mxu0 0
    %2294 = vmatpush1.bf16.msra.mxu0 %v1078
    %2295 = vmatprep.subr.bf16.mxu0 0
    %2296 = vmatpush1.bf16.msra.mxu0 %v1079
    %2297 = vmatprep.subr.bf16.mxu0 0
    %2298 = vmatpush1.bf16.msra.mxu0 %v1080
    %2299 = vmatprep.subr.bf16.mxu0 0
    %2300 = vmatpush1.bf16.msra.mxu0 %v1081
    %2301 = vmatprep.subr.bf16.mxu0 0
    %2302 = vmatpush1.bf16.msra.mxu0 %v1082
    %2303 = vmatprep.mubr.bf16.mxu0 %v2256
    %2304 = vmatmul.mubr.bf16.gmra.mrb[0].mxu0 %v2255
    %v2305 = vpop.f32.mrb[0].mxu0
    %v2306 = vadd.f32 0.0, %v2305
    %v2307 = vpop.f32.mrb[0].mxu0
    %v2308 = vpop.f32.mrb[0].mxu0
    %v2309 = vadd.f32 0.0, %v2308
    %v2310 = vpop.f32.mrb[0].mxu0
    %2311 = vmatprep.mubr.bf16.mxu0 %v2264
    %2312 = vmatmul.mubr.bf16.gmra.mrb[0].mxu0 %v2263
    %v2313 = vpop.f32.mrb[0].mxu0
    %v2314 = vadd.f32 0.0, %v2313
    %v2315 = vpop.f32.mrb[0].mxu0
    %v2316 = vpop.f32.mrb[0].mxu0
    %v2317 = vadd.f32 0.0, %v2316
    %v2318 = vpop.f32.mrb[0].mxu0
    %2319 = vdwg.mxu0
    %2320 = vmatprep.subr.bf16.mxu0 0
    %2321 = vmatpush1.bf16.msra.mxu0 %v1083
    %2322 = vmatprep.subr.bf16.mxu0 0
    %2323 = vmatpush1.bf16.msra.mxu0 %v1084
    %2324 = vmatprep.subr.bf16.mxu0 0
    %2325 = vmatpush1.bf16.msra.mxu0 %v1085
    %2326 = vmatprep.subr.bf16.mxu0 0
    %2327 = vmatpush1.bf16.msra.mxu0 %v1086
    %2328 = vmatprep.subr.bf16.mxu0 0
    %2329 = vmatpush1.bf16.msra.mxu0 %v1087
    %2330 = vmatprep.subr.bf16.mxu0 0
    %2331 = vmatpush1.bf16.msra.mxu0 %v1088
    %2332 = vmatprep.subr.bf16.mxu0 0
    %2333 = vmatpush1.bf16.msra.mxu0 %v1089
    %2334 = vmatprep.subr.bf16.mxu0 0
    %2335 = vmatpush1.bf16.msra.mxu0 %v1090
    %2336 = vmatprep.subr.bf16.mxu0 0
    %2337 = vmatpush1.bf16.msra.mxu0 %v1091
    %2338 = vmatprep.subr.bf16.mxu0 0
    %2339 = vmatpush1.bf16.msra.mxu0 %v1092
    %2340 = vmatprep.subr.bf16.mxu0 0
    %2341 = vmatpush1.bf16.msra.mxu0 %v1093
    %2342 = vmatprep.subr.bf16.mxu0 0
    %2343 = vmatpush1.bf16.msra.mxu0 %v1094
    %2344 = vmatprep.subr.bf16.mxu0 0
    %2345 = vmatpush1.bf16.msra.mxu0 %v1095
    %2346 = vmatprep.subr.bf16.mxu0 0
    %2347 = vmatpush1.bf16.msra.mxu0 %v1096
    %2348 = vmatprep.subr.bf16.mxu0 0
    %2349 = vmatpush1.bf16.msra.mxu0 %v1097
    %2350 = vmatprep.subr.bf16.mxu0 0
    %2351 = vmatpush1.bf16.msra.mxu0 %v1098
    %2352 = vmatprep.mubr.bf16.mxu0 %v2258
    %2353 = vmatmul.mubr.bf16.gmra.mrb[0].mxu0 %v2257
    %v2354 = vpop.f32.mrb[0].mxu0
    %v2355 = vadd.f32 %v2306, %v2354
    %v2356 = vpop.f32.mrb[0].mxu0
    %v2357 = vpop.f32.mrb[0].mxu0
    %v2358 = vadd.f32 %v2309, %v2357
    %v2359 = vpop.f32.mrb[0].mxu0
    %2360 = vmatprep.mubr.bf16.mxu0 %v2266
    %2361 = vmatmul.mubr.bf16.gmra.mrb[0].mxu0 %v2265
    %v2362 = vpop.f32.mrb[0].mxu0
    %v2363 = vadd.f32 %v2314, %v2362
    %v2364 = vpop.f32.mrb[0].mxu0
    %v2365 = vpop.f32.mrb[0].mxu0
    %v2366 = vadd.f32 %v2317, %v2365
    %v2367 = vpop.f32.mrb[0].mxu0
    %2368 = vdwg.mxu0
    %2369 = vmatprep.subr.bf16.mxu0 0
    %2370 = vmatpush1.bf16.msra.mxu0 %v1099
    %2371 = vmatprep.subr.bf16.mxu0 0
    %2372 = vmatpush1.bf16.msra.mxu0 %v1100
    %2373 = vmatprep.subr.bf16.mxu0 0
    %2374 = vmatpush1.bf16.msra.mxu0 %v1101
    %2375 = vmatprep.subr.bf16.mxu0 0
    %2376 = vmatpush1.bf16.msra.mxu0 %v1102
    %2377 = vmatprep.subr.bf16.mxu0 0
    %2378 = vmatpush1.bf16.msra.mxu0 %v1103
    %2379 = vmatprep.subr.bf16.mxu0 0
    %2380 = vmatpush1.bf16.msra.mxu0 %v1104
    %2381 = vmatprep.subr.bf16.mxu0 0
    %2382 = vmatpush1.bf16.msra.mxu0 %v1105
    %2383 = vmatprep.subr.bf16.mxu0 0
    %2384 = vmatpush1.bf16.msra.mxu0 %v1106
    %2385 = vmatprep.subr.bf16.mxu0 0
    %2386 = vmatpush1.bf16.msra.mxu0 %v1107
    %2387 = vmatprep.subr.bf16.mxu0 0
    %2388 = vmatpush1.bf16.msra.mxu0 %v1108
    %2389 = vmatprep.subr.bf16.mxu0 0
    %2390 = vmatpush1.bf16.msra.mxu0 %v1109
    %2391 = vmatprep.subr.bf16.mxu0 0
    %2392 = vmatpush1.bf16.msra.mxu0 %v1110
    %2393 = vmatprep.subr.bf16.mxu0 0
    %2394 = vmatpush1.bf16.msra.mxu0 %v1111
    %2395 = vmatprep.subr.bf16.mxu0 0
    %2396 = vmatpush1.bf16.msra.mxu0 %v1112
    %2397 = vmatprep.subr.bf16.mxu0 0
    %2398 = vmatpush1.bf16.msra.mxu0 %v1113
    %2399 = vmatprep.subr.bf16.mxu0 0
    %2400 = vmatpush1.bf16.msra.mxu0 %v1114
    %2401 = vmatprep.mubr.bf16.mxu0 %v2260
    %2402 = vmatmul.mubr.bf16.gmra.mrb[0].mxu0 %v2259
    %v2403 = vpop.f32.mrb[0].mxu0
    %v2404 = vadd.f32 %v2355, %v2403
    %v2405 = vpop.f32.mrb[0].mxu0
    %v2406 = vpop.f32.mrb[0].mxu0
    %v2407 = vadd.f32 %v2358, %v2406
    %v2408 = vpop.f32.mrb[0].mxu0
    %2409 = vmatprep.mubr.bf16.mxu0 %v2268
    %2410 = vmatmul.mubr.bf16.gmra.mrb[0].mxu0 %v2267
    %v2411 = vpop.f32.mrb[0].mxu0
    %v2412 = vadd.f32 %v2363, %v2411
    %v2413 = vpop.f32.mrb[0].mxu0
    %v2414 = vpop.f32.mrb[0].mxu0
    %v2415 = vadd.f32 %v2366, %v2414
    %v2416 = vpop.f32.mrb[0].mxu0
    %2417 = vdwg.mxu0
    %2418 = vmatprep.subr.bf16.mxu0 0
    %2419 = vmatpush1.bf16.msra.mxu0 %v1115
    %2420 = vmatprep.subr.bf16.mxu0 0
    %2421 = vmatpush1.bf16.msra.mxu0 %v1116
    %2422 = vmatprep.subr.bf16.mxu0 0
    %2423 = vmatpush1.bf16.msra.mxu0 %v1117
    %2424 = vmatprep.subr.bf16.mxu0 0
    %2425 = vmatpush1.bf16.msra.mxu0 %v1118
    %2426 = vmatprep.subr.bf16.mxu0 0
    %2427 = vmatpush1.bf16.msra.mxu0 %v1119
    %2428 = vmatprep.subr.bf16.mxu0 0
    %2429 = vmatpush1.bf16.msra.mxu0 %v1120
    %2430 = vmatprep.subr.bf16.mxu0 0
    %2431 = vmatpush1.bf16.msra.mxu0 %v1121
    %2432 = vmatprep.subr.bf16.mxu0 0
    %2433 = vmatpush1.bf16.msra.mxu0 %v1122
    %2434 = vmatprep.subr.bf16.mxu0 0
    %2435 = vmatpush1.bf16.msra.mxu0 %v1123
    %2436 = vmatprep.subr.bf16.mxu0 0
    %2437 = vmatpush1.bf16.msra.mxu0 %v1124
    %2438 = vmatprep.subr.bf16.mxu0 0
    %2439 = vmatpush1.bf16.msra.mxu0 %v1125
    %2440 = vmatprep.subr.bf16.mxu0 0
    %2441 = vmatpush1.bf16.msra.mxu0 %v1126
    %2442 = vmatprep.subr.bf16.mxu0 0
    %2443 = vmatpush1.bf16.msra.mxu0 %v1127
    %2444 = vmatprep.subr.bf16.mxu0 0
    %2445 = vmatpush1.bf16.msra.mxu0 %v1128
    %2446 = vmatprep.subr.bf16.mxu0 0
    %2447 = vmatpush1.bf16.msra.mxu0 %v1129
    %2448 = vmatprep.subr.bf16.mxu0 0
    %2449 = vmatpush1.bf16.msra.mxu0 %v1130
    %2450 = vmatprep.mubr.bf16.mxu0 %v2262
    %2451 = vmatmul.mubr.bf16.gmra.mrb[0].mxu0 %v2261
    %v2452 = vpop.f32.mrb[0].mxu0
    %v2453 = vadd.f32 %v2404, %v2452
    %v2454 = vpop.f32.mrb[0].mxu0
    %v2455 = vpop.f32.mrb[0].mxu0
    %v2456 = vadd.f32 %v2407, %v2455
    %v2457 = vpop.f32.mrb[0].mxu0
    %2458 = vmatprep.mubr.bf16.mxu0 %v2270
    %2459 = vmatmul.mubr.bf16.gmra.mrb[0].mxu0 %v2269
    %v2460 = vpop.f32.mrb[0].mxu0
    %v2461 = vadd.f32 %v2412, %v2460
    %v2462 = vpop.f32.mrb[0].mxu0
    %v2463 = vpop.f32.mrb[0].mxu0
    %v2464 = vadd.f32 %v2415, %v2463
    %v2465 = vpop.f32.mrb[0].mxu0
    %2466 = vdwg.mxu0
    %v2467 = vpack.c.bf16 %v2456, %v2453
    %v2468 = vpack.c.bf16 %v2464, %v2461
    %2469 = vmatprep.subr.bf16.mxu0 0
    %2470 = vmatpush1.bf16.msra.mxu0 %v2467
    %2471 = vmatprep.subr.bf16.mxu0 0
    %2472 = vmatpush1.bf16.msra.mxu0 %v2468
    %2473 = vmatprep.subr.bf16.mxu0 0
    %2474 = vmatpush1.bf16.msra.mxu0 0
    %2475 = vmatprep.subr.bf16.mxu0 0
    %2476 = vmatpush1.bf16.msra.mxu0 0
    %2477 = vmatprep.subr.bf16.mxu0 0
    %2478 = vmatpush1.bf16.msra.mxu0 0
    %2479 = vmatprep.subr.bf16.mxu0 0
    %2480 = vmatpush1.bf16.msra.mxu0 0
    %2481 = vmatprep.subr.bf16.mxu0 0
    %2482 = vmatpush1.bf16.msra.mxu0 0
    %2483 = vmatprep.subr.bf16.mxu0 0
    %2484 = vmatpush1.bf16.msra.mxu0 0
    %2485 = vmatprep.subr.bf16.mxu0 0
    %2486 = vmatpush1.bf16.msra.mxu0 0
    %2487 = vmatprep.subr.bf16.mxu0 0
    %2488 = vmatpush1.bf16.msra.mxu0 0
    %2489 = vmatprep.subr.bf16.mxu0 0
    %2490 = vmatpush1.bf16.msra.mxu0 0
    %2491 = vmatprep.subr.bf16.mxu0 0
    %2492 = vmatpush1.bf16.msra.mxu0 0
    %2493 = vmatprep.subr.bf16.mxu0 0
    %2494 = vmatpush1.bf16.msra.mxu0 0
    %2495 = vmatprep.subr.bf16.mxu0 0
    %2496 = vmatpush1.bf16.msra.mxu0 0
    %2497 = vmatprep.subr.bf16.mxu0 0
    %2498 = vmatpush1.bf16.msra.mxu0 0
    %2499 = vmatprep.subr.bf16.mxu0 0
    %2500 = vmatpush1.bf16.msra.mxu0 0
    %2501 = vmatprep.mubr.bf16.mxu0 0
    %2502 = vmatmul.mubr.bf16.gmra.mrb[0].mxu0 %v1399
    %v2503 = vpop.f32.mrb[0].mxu0
    %v2504 = vadd.f32 0.0, %v2503
    %v2505 = vpop.f32.mrb[0].mxu0
    %v2506 = vpop.f32.mrb[0].mxu0
    %v2507 = vadd.f32 0.0, %v2506
    %v2508 = vpop.f32.mrb[0].mxu0
    %2509 = vdwg.mxu0
    %v2510 = vmax.f32 %v2504, 0.0
    %v2511 = vmax.f32 %v2507, 0.0
    %v2512 = vpack.c.bf16 %v2511, %v2510
    %v2513 = vlaneseq
    %v2514 = vshrl.u32 %v2513, 7
    %v2515 = vsub.s32 6, %v2514
    %v2516 = vrot.slane %v55, %v2515
    %v2521 = vunpack.c.l.b16 %v51
    %v2522 = vunpack.c.l.b16 %v52
    %v2523 = vunpack.c.l.b16 %v53
    %v2524 = vunpack.c.l.b16 %v54
    %v2525 = vpack.c.b16 %v2522, %v2521
    %v2526 = vpack.c.b16 %v2524, %v2523
    %v2530 = vsel %vm364, %v2512, 0
    %2532 = vmatprep.subr.bf16.mxu0 0
    %2533 = vmatpush1.bf16.msra.mxu0 %v2525
    %2534 = vmatprep.subr.bf16.mxu0 0
    %2535 = vmatpush1.bf16.msra.mxu0 %v2526
    %2536 = vmatprep.subr.bf16.mxu0 0
    %2537 = vmatpush1.bf16.msra.mxu0 0
    %2538 = vmatprep.subr.bf16.mxu0 0
    %2539 = vmatpush1.bf16.msra.mxu0 0
    %2540 = vmatprep.subr.bf16.mxu0 0
    %2541 = vmatpush1.bf16.msra.mxu0 0
    %2542 = vmatprep.subr.bf16.mxu0 0
    %2543 = vmatpush1.bf16.msra.mxu0 0
    %2544 = vmatprep.subr.bf16.mxu0 0
    %2545 = vmatpush1.bf16.msra.mxu0 0
    %2546 = vmatprep.subr.bf16.mxu0 0
    %2547 = vmatpush1.bf16.msra.mxu0 0
    %2548 = vmatprep.subr.bf16.mxu0 0
    %2549 = vmatpush1.bf16.msra.mxu0 0
    %2550 = vmatprep.subr.bf16.mxu0 0
    %2551 = vmatpush1.bf16.msra.mxu0 0
    %2552 = vmatprep.subr.bf16.mxu0 0
    %2553 = vmatpush1.bf16.msra.mxu0 0
    %2554 = vmatprep.subr.bf16.mxu0 0
    %2555 = vmatpush1.bf16.msra.mxu0 0
    %2556 = vmatprep.subr.bf16.mxu0 0
    %2557 = vmatpush1.bf16.msra.mxu0 0
    %2558 = vmatprep.subr.bf16.mxu0 0
    %2559 = vmatpush1.bf16.msra.mxu0 0
    %2560 = vmatprep.subr.bf16.mxu0 0
    %2561 = vmatpush1.bf16.msra.mxu0 0
    %2562 = vmatprep.subr.bf16.mxu0 0
    %2563 = vmatpush1.bf16.msra.mxu0 0
    %2564 = vmatprep.mubr.bf16.mxu0 0
    %2565 = vmatmul.mubr.bf16.gmra.mrb[0].mxu0 %v2530
    %v2566 = vpop.f32.mrb[0].mxu0
    %v2567 = vadd.f32 %v2516, %v2566
    %v2568 = vpop.f32.mrb[0].mxu0
    %v2569 = vpop.f32.mrb[0].mxu0
    %v2570 = vadd.f32 %v2516, %v2569
    %v2571 = vpop.f32.mrb[0].mxu0
    %2572 = vdwg.mxu0
    %2575 = vrot.lane.b32.xlu0 %v2115, 96
    %v2576 = vpop.permute.xlu0 %2575
    %2577 = vrot.lane.b32.xlu0 %v2116, 96
    %v2578 = vpop.permute.xlu0 %2577
    %v2581 = vadd.f32 %v2567, %v2576
    %v2582 = vadd.f32 %v2570, %v2578
    %v2583 = vmax.f32 %v2581, 0.0
    %v2584 = vmax.f32 %v2582, 0.0
    %v2585 = vpack.c.bf16 %v2584, %v2583
    %2586 = vmatprep.subr.bf16.mxu0 0
    %2587 = vmatpush1.bf16.msra.mxu0 %v2585
    %2588 = vmatprep.subr.bf16.mxu0 0
    %2589 = vmatpush1.bf16.msra.mxu0 0
    %2590 = vmatprep.subr.bf16.mxu0 0
    %2591 = vmatpush1.bf16.msra.mxu0 0
    %2592 = vmatprep.subr.bf16.mxu0 0
    %2593 = vmatpush1.bf16.msra.mxu0 0
    %2594 = vmatprep.subr.bf16.mxu0 0
    %2595 = vmatpush1.bf16.msra.mxu0 0
    %2596 = vmatprep.subr.bf16.mxu0 0
    %2597 = vmatpush1.bf16.msra.mxu0 0
    %2598 = vmatprep.subr.bf16.mxu0 0
    %2599 = vmatpush1.bf16.msra.mxu0 0
    %2600 = vmatprep.subr.bf16.mxu0 0
    %2601 = vmatpush1.bf16.msra.mxu0 0
    %2602 = vmatprep.subr.bf16.mxu0 0
    %2603 = vmatpush1.bf16.msra.mxu0 0
    %2604 = vmatprep.subr.bf16.mxu0 0
    %2605 = vmatpush1.bf16.msra.mxu0 0
    %2606 = vmatprep.subr.bf16.mxu0 0
    %2607 = vmatpush1.bf16.msra.mxu0 0
    %2608 = vmatprep.subr.bf16.mxu0 0
    %2609 = vmatpush1.bf16.msra.mxu0 0
    %2610 = vmatprep.subr.bf16.mxu0 0
    %2611 = vmatpush1.bf16.msra.mxu0 0
    %2612 = vmatprep.subr.bf16.mxu0 0
    %2613 = vmatpush1.bf16.msra.mxu0 0
    %2614 = vmatprep.subr.bf16.mxu0 0
    %2615 = vmatpush1.bf16.msra.mxu0 0
    %2616 = vmatprep.subr.bf16.mxu0 0
    %2617 = vmatpush1.bf16.msra.mxu0 0
    %2618 = vmatprep.mubr.bf16.mxu0 0
    %2619 = vmatmul.mubr.bf16.gmra.mrb[0].mxu0 %v655
    %v2620 = vpop.f32.mrb[0].mxu0
    %v2621 = vadd.f32 0.0, %v2620
    %v2622 = vpop.f32.mrb[0].mxu0
    %v2623 = vpop.f32.mrb[0].mxu0
    %v2624 = vadd.f32 0.0, %v2623
    %v2625 = vpop.f32.mrb[0].mxu0
    %2626 = vmatprep.mubr.bf16.mxu0 0
    %2627 = vmatmul.mubr.bf16.gmra.mrb[0].mxu0 %v658
    %v2628 = vpop.f32.mrb[0].mxu0
    %v2629 = vadd.f32 0.0, %v2628
    %v2630 = vpop.f32.mrb[0].mxu0
    %v2631 = vpop.f32.mrb[0].mxu0
    %v2632 = vadd.f32 0.0, %v2631
    %v2633 = vpop.f32.mrb[0].mxu0
    %2634 = vdwg.mxu0
    %2639 = vrot.lane.b32.xlu0 %v2621, 32
    %v2640 = vpop.permute.xlu0 %2639
    %2641 = vrot.lane.b32.xlu0 %v2624, 32
    %v2642 = vpop.permute.xlu0 %2641
    %2643 = vrot.lane.b32.xlu0 %v2629, 32
    %v2644 = vpop.permute.xlu0 %2643
    %2645 = vrot.lane.b32.xlu0 %v2632, 32
    %v2646 = vpop.permute.xlu0 %2645
    %2651 = vrot.lane.b32.xlu0 %v2621, 64
    %v2652 = vpop.permute.xlu0 %2651
    %2653 = vrot.lane.b32.xlu0 %v2624, 64
    %v2654 = vpop.permute.xlu0 %2653
    %2655 = vrot.lane.b32.xlu0 %v2629, 64
    %v2656 = vpop.permute.xlu0 %2655
    %2657 = vrot.lane.b32.xlu0 %v2632, 64
    %v2658 = vpop.permute.xlu0 %2657
    %2663 = vrot.lane.b32.xlu0 %v2621, 96
    %v2664 = vpop.permute.xlu0 %2663
    %2665 = vrot.lane.b32.xlu0 %v2624, 96
    %v2666 = vpop.permute.xlu0 %2665
    %2667 = vrot.lane.b32.xlu0 %v2629, 96
    %v2668 = vpop.permute.xlu0 %2667
    %2669 = vrot.lane.b32.xlu0 %v2632, 96
    %v2670 = vpop.permute.xlu0 %2669
    %v2675 = vsel %vm364, %v2621, %v2640
    %v2676 = vsel %vm364, %v2624, %v2642
    %v2677 = vsel %vm364, %v2629, %v2644
    %v2678 = vsel %vm364, %v2632, %v2646
    %v2679 = vsel %vm753, %v2675, %v2652
    %v2680 = vsel %vm753, %v2676, %v2654
    %v2681 = vsel %vm753, %v2677, %v2656
    %v2682 = vsel %vm753, %v2678, %v2658
    %v2683 = vsel %vm758, %v2679, %v2664
    %v2684 = vsel %vm758, %v2680, %v2666
    %v2685 = vsel %vm758, %v2681, %v2668
    %v2686 = vsel %vm758, %v2682, %v2670
    %v2687 = vmul.f32 %v406, %v2683
    %v2688 = vmul.f32 %v408, %v2683
    %v2689 = vmul.f32 %v459, %v2683
    %v2690 = vmul.f32 %v461, %v2683
    %v2691 = vmul.f32 %v512, %v2683
    %v2692 = vmul.f32 %v514, %v2683
    %v2693 = vmul.f32 %v565, %v2683
    %v2694 = vmul.f32 %v567, %v2683
    %v2695 = vmul.f32 %v410, %v2684
    %v2696 = vmul.f32 %v412, %v2684
    %v2697 = vmul.f32 %v463, %v2684
    %v2698 = vmul.f32 %v465, %v2684
    %v2699 = vmul.f32 %v516, %v2684
    %v2700 = vmul.f32 %v518, %v2684
    %v2701 = vmul.f32 %v569, %v2684
    %v2702 = vmul.f32 %v571, %v2684
    %v2703 = vmul.f32 %v416, %v2685
    %v2704 = vmul.f32 %v418, %v2685
    %v2705 = vmul.f32 %v469, %v2685
    %v2706 = vmul.f32 %v471, %v2685
    %v2707 = vmul.f32 %v522, %v2685
    %v2708 = vmul.f32 %v524, %v2685
    %v2709 = vmul.f32 %v575, %v2685
    %v2710 = vmul.f32 %v577, %v2685
    %v2711 = vmul.f32 %v420, %v2686
    %v2712 = vmul.f32 %v422, %v2686
    %v2713 = vmul.f32 %v473, %v2686
    %v2714 = vmul.f32 %v475, %v2686
    %v2715 = vmul.f32 %v526, %v2686
    %v2716 = vmul.f32 %v528, %v2686
    %v2717 = vmul.f32 %v579, %v2686
    %v2718 = vmul.f32 %v581, %v2686
    %v2719 = vpack.c.bf16 %v2695, %v2687
    %v2720 = vpack.c.bf16 %v2696, %v2688
    %v2721 = vpack.c.bf16 %v2697, %v2689
    %v2722 = vpack.c.bf16 %v2698, %v2690
    %v2723 = vpack.c.bf16 %v2699, %v2691
    %v2724 = vpack.c.bf16 %v2700, %v2692
    %v2725 = vpack.c.bf16 %v2701, %v2693
    %v2726 = vpack.c.bf16 %v2702, %v2694
    %v2727 = vpack.c.bf16 %v2711, %v2703
    %v2728 = vpack.c.bf16 %v2712, %v2704
    %v2729 = vpack.c.bf16 %v2713, %v2705
    %v2730 = vpack.c.bf16 %v2714, %v2706
    %v2731 = vpack.c.bf16 %v2715, %v2707
    %v2732 = vpack.c.bf16 %v2716, %v2708
    %v2733 = vpack.c.bf16 %v2717, %v2709
    %v2734 = vpack.c.bf16 %v2718, %v2710
    %2735 = vmatprep.subr.bf16.mxu0 0
    %2736 = vmatpush1.bf16.msra.mxu0 %v1067
    %2737 = vmatprep.subr.bf16.mxu0 0
    %2738 = vmatpush1.bf16.msra.mxu0 %v1068
    %2739 = vmatprep.subr.bf16.mxu0 0
    %2740 = vmatpush1.bf16.msra.mxu0 %v1069
    %2741 = vmatprep.subr.bf16.mxu0 0
    %2742 = vmatpush1.bf16.msra.mxu0 %v1070
    %2743 = vmatprep.subr.bf16.mxu0 0
    %2744 = vmatpush1.bf16.msra.mxu0 %v1071
    %2745 = vmatprep.subr.bf16.mxu0 0
    %2746 = vmatpush1.bf16.msra.mxu0 %v1072
    %2747 = vmatprep.subr.bf16.mxu0 0
    %2748 = vmatpush1.bf16.msra.mxu0 %v1073
    %2749 = vmatprep.subr.bf16.mxu0 0
    %2750 = vmatpush1.bf16.msra.mxu0 %v1074
    %2751 = vmatprep.subr.bf16.mxu0 0
    %2752 = vmatpush1.bf16.msra.mxu0 %v1075
    %2753 = vmatprep.subr.bf16.mxu0 0
    %2754 = vmatpush1.bf16.msra.mxu0 %v1076
    %2755 = vmatprep.subr.bf16.mxu0 0
    %2756 = vmatpush1.bf16.msra.mxu0 %v1077
    %2757 = vmatprep.subr.bf16.mxu0 0
    %2758 = vmatpush1.bf16.msra.mxu0 %v1078
    %2759 = vmatprep.subr.bf16.mxu0 0
    %2760 = vmatpush1.bf16.msra.mxu0 %v1079
    %2761 = vmatprep.subr.bf16.mxu0 0
    %2762 = vmatpush1.bf16.msra.mxu0 %v1080
    %2763 = vmatprep.subr.bf16.mxu0 0
    %2764 = vmatpush1.bf16.msra.mxu0 %v1081
    %2765 = vmatprep.subr.bf16.mxu0 0
    %2766 = vmatpush1.bf16.msra.mxu0 %v1082
    %2767 = vmatprep.mubr.bf16.mxu0 %v2720
    %2768 = vmatmul.mubr.bf16.gmra.mrb[0].mxu0 %v2719
    %v2769 = vpop.f32.mrb[0].mxu0
    %v2770 = vadd.f32 0.0, %v2769
    %v2771 = vpop.f32.mrb[0].mxu0
    %v2772 = vpop.f32.mrb[0].mxu0
    %v2773 = vadd.f32 0.0, %v2772
    %v2774 = vpop.f32.mrb[0].mxu0
    %2775 = vmatprep.mubr.bf16.mxu0 %v2728
    %2776 = vmatmul.mubr.bf16.gmra.mrb[0].mxu0 %v2727
    %v2777 = vpop.f32.mrb[0].mxu0
    %v2778 = vadd.f32 0.0, %v2777
    %v2779 = vpop.f32.mrb[0].mxu0
    %v2780 = vpop.f32.mrb[0].mxu0
    %v2781 = vadd.f32 0.0, %v2780
    %v2782 = vpop.f32.mrb[0].mxu0
    %2783 = vdwg.mxu0
    %2784 = vmatprep.subr.bf16.mxu0 0
    %2785 = vmatpush1.bf16.msra.mxu0 %v1083
    %2786 = vmatprep.subr.bf16.mxu0 0
    %2787 = vmatpush1.bf16.msra.mxu0 %v1084
    %2788 = vmatprep.subr.bf16.mxu0 0
    %2789 = vmatpush1.bf16.msra.mxu0 %v1085
    %2790 = vmatprep.subr.bf16.mxu0 0
    %2791 = vmatpush1.bf16.msra.mxu0 %v1086
    %2792 = vmatprep.subr.bf16.mxu0 0
    %2793 = vmatpush1.bf16.msra.mxu0 %v1087
    %2794 = vmatprep.subr.bf16.mxu0 0
    %2795 = vmatpush1.bf16.msra.mxu0 %v1088
    %2796 = vmatprep.subr.bf16.mxu0 0
    %2797 = vmatpush1.bf16.msra.mxu0 %v1089
    %2798 = vmatprep.subr.bf16.mxu0 0
    %2799 = vmatpush1.bf16.msra.mxu0 %v1090
    %2800 = vmatprep.subr.bf16.mxu0 0
    %2801 = vmatpush1.bf16.msra.mxu0 %v1091
    %2802 = vmatprep.subr.bf16.mxu0 0
    %2803 = vmatpush1.bf16.msra.mxu0 %v1092
    %2804 = vmatprep.subr.bf16.mxu0 0
    %2805 = vmatpush1.bf16.msra.mxu0 %v1093
    %2806 = vmatprep.subr.bf16.mxu0 0
    %2807 = vmatpush1.bf16.msra.mxu0 %v1094
    %2808 = vmatprep.subr.bf16.mxu0 0
    %2809 = vmatpush1.bf16.msra.mxu0 %v1095
    %2810 = vmatprep.subr.bf16.mxu0 0
    %2811 = vmatpush1.bf16.msra.mxu0 %v1096
    %2812 = vmatprep.subr.bf16.mxu0 0
    %2813 = vmatpush1.bf16.msra.mxu0 %v1097
    %2814 = vmatprep.subr.bf16.mxu0 0
    %2815 = vmatpush1.bf16.msra.mxu0 %v1098
    %2816 = vmatprep.mubr.bf16.mxu0 %v2722
    %2817 = vmatmul.mubr.bf16.gmra.mrb[0].mxu0 %v2721
    %v2818 = vpop.f32.mrb[0].mxu0
    %v2819 = vadd.f32 %v2770, %v2818
    %v2820 = vpop.f32.mrb[0].mxu0
    %v2821 = vpop.f32.mrb[0].mxu0
    %v2822 = vadd.f32 %v2773, %v2821
    %v2823 = vpop.f32.mrb[0].mxu0
    %2824 = vmatprep.mubr.bf16.mxu0 %v2730
    %2825 = vmatmul.mubr.bf16.gmra.mrb[0].mxu0 %v2729
    %v2826 = vpop.f32.mrb[0].mxu0
    %v2827 = vadd.f32 %v2778, %v2826
    %v2828 = vpop.f32.mrb[0].mxu0
    %v2829 = vpop.f32.mrb[0].mxu0
    %v2830 = vadd.f32 %v2781, %v2829
    %v2831 = vpop.f32.mrb[0].mxu0
    %2832 = vdwg.mxu0
    %2833 = vmatprep.subr.bf16.mxu0 0
    %2834 = vmatpush1.bf16.msra.mxu0 %v1099
    %2835 = vmatprep.subr.bf16.mxu0 0
    %2836 = vmatpush1.bf16.msra.mxu0 %v1100
    %2837 = vmatprep.subr.bf16.mxu0 0
    %2838 = vmatpush1.bf16.msra.mxu0 %v1101
    %2839 = vmatprep.subr.bf16.mxu0 0
    %2840 = vmatpush1.bf16.msra.mxu0 %v1102
    %2841 = vmatprep.subr.bf16.mxu0 0
    %2842 = vmatpush1.bf16.msra.mxu0 %v1103
    %2843 = vmatprep.subr.bf16.mxu0 0
    %2844 = vmatpush1.bf16.msra.mxu0 %v1104
    %2845 = vmatprep.subr.bf16.mxu0 0
    %2846 = vmatpush1.bf16.msra.mxu0 %v1105
    %2847 = vmatprep.subr.bf16.mxu0 0
    %2848 = vmatpush1.bf16.msra.mxu0 %v1106
    %2849 = vmatprep.subr.bf16.mxu0 0
    %2850 = vmatpush1.bf16.msra.mxu0 %v1107
    %2851 = vmatprep.subr.bf16.mxu0 0
    %2852 = vmatpush1.bf16.msra.mxu0 %v1108
    %2853 = vmatprep.subr.bf16.mxu0 0
    %2854 = vmatpush1.bf16.msra.mxu0 %v1109
    %2855 = vmatprep.subr.bf16.mxu0 0
    %2856 = vmatpush1.bf16.msra.mxu0 %v1110
    %2857 = vmatprep.subr.bf16.mxu0 0
    %2858 = vmatpush1.bf16.msra.mxu0 %v1111
    %2859 = vmatprep.subr.bf16.mxu0 0
    %2860 = vmatpush1.bf16.msra.mxu0 %v1112
    %2861 = vmatprep.subr.bf16.mxu0 0
    %2862 = vmatpush1.bf16.msra.mxu0 %v1113
    %2863 = vmatprep.subr.bf16.mxu0 0
    %2864 = vmatpush1.bf16.msra.mxu0 %v1114
    %2865 = vmatprep.mubr.bf16.mxu0 %v2724
    %2866 = vmatmul.mubr.bf16.gmra.mrb[0].mxu0 %v2723
    %v2867 = vpop.f32.mrb[0].mxu0
    %v2868 = vadd.f32 %v2819, %v2867
    %v2869 = vpop.f32.mrb[0].mxu0
    %v2870 = vpop.f32.mrb[0].mxu0
    %v2871 = vadd.f32 %v2822, %v2870
    %v2872 = vpop.f32.mrb[0].mxu0
    %2873 = vmatprep.mubr.bf16.mxu0 %v2732
    %2874 = vmatmul.mubr.bf16.gmra.mrb[0].mxu0 %v2731
    %v2875 = vpop.f32.mrb[0].mxu0
    %v2876 = vadd.f32 %v2827, %v2875
    %v2877 = vpop.f32.mrb[0].mxu0
    %v2878 = vpop.f32.mrb[0].mxu0
    %v2879 = vadd.f32 %v2830, %v2878
    %v2880 = vpop.f32.mrb[0].mxu0
    %2881 = vdwg.mxu0
    %2882 = vmatprep.subr.bf16.mxu0 0
    %2883 = vmatpush1.bf16.msra.mxu0 %v1115
    %2884 = vmatprep.subr.bf16.mxu0 0
    %2885 = vmatpush1.bf16.msra.mxu0 %v1116
    %2886 = vmatprep.subr.bf16.mxu0 0
    %2887 = vmatpush1.bf16.msra.mxu0 %v1117
    %2888 = vmatprep.subr.bf16.mxu0 0
    %2889 = vmatpush1.bf16.msra.mxu0 %v1118
    %2890 = vmatprep.subr.bf16.mxu0 0
    %2891 = vmatpush1.bf16.msra.mxu0 %v1119
    %2892 = vmatprep.subr.bf16.mxu0 0
    %2893 = vmatpush1.bf16.msra.mxu0 %v1120
    %2894 = vmatprep.subr.bf16.mxu0 0
    %2895 = vmatpush1.bf16.msra.mxu0 %v1121
    %2896 = vmatprep.subr.bf16.mxu0 0
    %2897 = vmatpush1.bf16.msra.mxu0 %v1122
    %2898 = vmatprep.subr.bf16.mxu0 0
    %2899 = vmatpush1.bf16.msra.mxu0 %v1123
    %2900 = vmatprep.subr.bf16.mxu0 0
    %2901 = vmatpush1.bf16.msra.mxu0 %v1124
    %2902 = vmatprep.subr.bf16.mxu0 0
    %2903 = vmatpush1.bf16.msra.mxu0 %v1125
    %2904 = vmatprep.subr.bf16.mxu0 0
    %2905 = vmatpush1.bf16.msra.mxu0 %v1126
    %2906 = vmatprep.subr.bf16.mxu0 0
    %2907 = vmatpush1.bf16.msra.mxu0 %v1127
    %2908 = vmatprep.subr.bf16.mxu0 0
    %2909 = vmatpush1.bf16.msra.mxu0 %v1128
    %2910 = vmatprep.subr.bf16.mxu0 0
    %2911 = vmatpush1.bf16.msra.mxu0 %v1129
    %2912 = vmatprep.subr.bf16.mxu0 0
    %2913 = vmatpush1.bf16.msra.mxu0 %v1130
    %2914 = vmatprep.mubr.bf16.mxu0 %v2726
    %2915 = vmatmul.mubr.bf16.gmra.mrb[0].mxu0 %v2725
    %v2916 = vpop.f32.mrb[0].mxu0
    %v2917 = vadd.f32 %v2868, %v2916
    %v2918 = vpop.f32.mrb[0].mxu0
    %v2919 = vpop.f32.mrb[0].mxu0
    %v2920 = vadd.f32 %v2871, %v2919
    %v2921 = vpop.f32.mrb[0].mxu0
    %2922 = vmatprep.mubr.bf16.mxu0 %v2734
    %2923 = vmatmul.mubr.bf16.gmra.mrb[0].mxu0 %v2733
    %v2924 = vpop.f32.mrb[0].mxu0
    %v2925 = vadd.f32 %v2876, %v2924
    %v2926 = vpop.f32.mrb[0].mxu0
    %v2927 = vpop.f32.mrb[0].mxu0
    %v2928 = vadd.f32 %v2879, %v2927
    %v2929 = vpop.f32.mrb[0].mxu0
    %2930 = vdwg.mxu0
    %v2931 = vpack.c.bf16 %v2920, %v2917
    %v2932 = vpack.c.bf16 %v2928, %v2925
    %2933 = vmatprep.subr.bf16.mxu0 0
    %2934 = vmatpush1.bf16.msra.mxu0 %v2931
    %2935 = vmatprep.subr.bf16.mxu0 0
    %2936 = vmatpush1.bf16.msra.mxu0 %v2932
    %2937 = vmatprep.subr.bf16.mxu0 0
    %2938 = vmatpush1.bf16.msra.mxu0 0
    %2939 = vmatprep.subr.bf16.mxu0 0
    %2940 = vmatpush1.bf16.msra.mxu0 0
    %2941 = vmatprep.subr.bf16.mxu0 0
    %2942 = vmatpush1.bf16.msra.mxu0 0
    %2943 = vmatprep.subr.bf16.mxu0 0
    %2944 = vmatpush1.bf16.msra.mxu0 0
    %2945 = vmatprep.subr.bf16.mxu0 0
    %2946 = vmatpush1.bf16.msra.mxu0 0
    %2947 = vmatprep.subr.bf16.mxu0 0
    %2948 = vmatpush1.bf16.msra.mxu0 0
    %2949 = vmatprep.subr.bf16.mxu0 0
    %2950 = vmatpush1.bf16.msra.mxu0 0
    %2951 = vmatprep.subr.bf16.mxu0 0
    %2952 = vmatpush1.bf16.msra.mxu0 0
    %2953 = vmatprep.subr.bf16.mxu0 0
    %2954 = vmatpush1.bf16.msra.mxu0 0
    %2955 = vmatprep.subr.bf16.mxu0 0
    %2956 = vmatpush1.bf16.msra.mxu0 0
    %2957 = vmatprep.subr.bf16.mxu0 0
    %2958 = vmatpush1.bf16.msra.mxu0 0
    %2959 = vmatprep.subr.bf16.mxu0 0
    %2960 = vmatpush1.bf16.msra.mxu0 0
    %2961 = vmatprep.subr.bf16.mxu0 0
    %2962 = vmatpush1.bf16.msra.mxu0 0
    %2963 = vmatprep.subr.bf16.mxu0 0
    %2964 = vmatpush1.bf16.msra.mxu0 0
    %2965 = vmatprep.mubr.bf16.mxu0 0
    %2966 = vmatmul.mubr.bf16.gmra.mrb[0].mxu0 %v1399
    %v2967 = vpop.f32.mrb[0].mxu0
    %v2968 = vadd.f32 0.0, %v2967
    %v2969 = vpop.f32.mrb[0].mxu0
    %v2970 = vpop.f32.mrb[0].mxu0
    %v2971 = vadd.f32 0.0, %v2970
    %v2972 = vpop.f32.mrb[0].mxu0
    %2973 = vdwg.mxu0
    %v2974 = vmax.f32 %v2968, 0.0
    %v2975 = vmax.f32 %v2971, 0.0
    %v2976 = vpack.c.bf16 %v2975, %v2974
    %2977 = vrot.lane.b32.xlu0 %v2525, 96
    %v2978 = vpop.permute.xlu0 %2977
    %2979 = vrot.lane.b32.xlu0 %v2526, 96
    %v2980 = vpop.permute.xlu0 %2979
    %v2984 = vsel %vm364, %v2976, 0
    %2986 = vmatprep.subr.bf16.mxu0 0
    %2987 = vmatpush1.bf16.msra.mxu0 %v2978
    %2988 = vmatprep.subr.bf16.mxu0 0
    %2989 = vmatpush1.bf16.msra.mxu0 %v2980
    %2990 = vmatprep.subr.bf16.mxu0 0
    %2991 = vmatpush1.bf16.msra.mxu0 0
    %2992 = vmatprep.subr.bf16.mxu0 0
    %2993 = vmatpush1.bf16.msra.mxu0 0
    %2994 = vmatprep.subr.bf16.mxu0 0
    %2995 = vmatpush1.bf16.msra.mxu0 0
    %2996 = vmatprep.subr.bf16.mxu0 0
    %2997 = vmatpush1.bf16.msra.mxu0 0
    %2998 = vmatprep.subr.bf16.mxu0 0
    %2999 = vmatpush1.bf16.msra.mxu0 0
    %3000 = vmatprep.subr.bf16.mxu0 0
    %3001 = vmatpush1.bf16.msra.mxu0 0
    %3002 = vmatprep.subr.bf16.mxu0 0
    %3003 = vmatpush1.bf16.msra.mxu0 0
    %3004 = vmatprep.subr.bf16.mxu0 0
    %3005 = vmatpush1.bf16.msra.mxu0 0
    %3006 = vmatprep.subr.bf16.mxu0 0
    %3007 = vmatpush1.bf16.msra.mxu0 0
    %3008 = vmatprep.subr.bf16.mxu0 0
    %3009 = vmatpush1.bf16.msra.mxu0 0
    %3010 = vmatprep.subr.bf16.mxu0 0
    %3011 = vmatpush1.bf16.msra.mxu0 0
    %3012 = vmatprep.subr.bf16.mxu0 0
    %3013 = vmatpush1.bf16.msra.mxu0 0
    %3014 = vmatprep.subr.bf16.mxu0 0
    %3015 = vmatpush1.bf16.msra.mxu0 0
    %3016 = vmatprep.subr.bf16.mxu0 0
    %3017 = vmatpush1.bf16.msra.mxu0 0
    %3018 = vmatprep.mubr.bf16.mxu0 0
    %3019 = vmatmul.mubr.bf16.gmra.mrb[0].mxu0 %v2984
    %v3020 = vpop.f32.mrb[0].mxu0
    %v3021 = vadd.f32 0.0, %v3020
    %v3022 = vpop.f32.mrb[0].mxu0
    %v3023 = vpop.f32.mrb[0].mxu0
    %v3024 = vadd.f32 0.0, %v3023
    %v3025 = vpop.f32.mrb[0].mxu0
    %3026 = vdwg.mxu0
    %v3027 = vlaneseq
    %v3028 = vshrl.u32 %v3027, 7
    %v3029 = vsub.s32 7, %v3028
    %v3030 = vrot.slane %v55, %v3029
    %v3031 = vadd.f32 %v3021, %v3030
    %v3032 = vadd.f32 %v3024, %v3030
    %v3033 = vadd.f32 %v3031, %v2583
    %v3034 = vadd.f32 %v3032, %v2584
    %v3035 = vlaneseq
    %v3036 = vshrl.u32 %v3035, 7
    %v3037 = vsub.s32 0, %v3036
    %v3038 = vrot.slane %v56, %v3037
    %3040 = vrot.lane.b32.xlu0 %v3038, 32
    %v3041 = vpop.permute.xlu0 %3040
    %v3043 = vadd.f32 %v3021, %v3041
    %v3044 = vadd.f32 %v3024, %v3041
    %vm3045 = vcmp.gt.f32.partialorder %v3043, 0.0
    %vm3046 = vcmp.gt.f32.partialorder %v3044, 0.0
    %v3047 = vmin.f32 %v3043, 0.0
    %v3048 = vmin.f32 %v3044, 0.0
    %v3049 = vmul.f32 %v3047, 1.442695
    %v3050 = vpow.pop %v3049
    %v3051 = vmul.f32 %v3048, 1.442695
    %v3052 = vpow.pop %v3051
    %v3053 = vsub.f32 %v3050, 1.0
    %v3054 = vsub.f32 %v3052, 1.0
    %v3055 = vmul.f32 %v3053, 1.6732632
    %v3056 = vmul.f32 %v3054, 1.6732632
    %v3057 = vsel %vm3045, %v3043, %v3055
    %v3058 = vsel %vm3046, %v3044, %v3056
    %v3059 = vmul.f32 %v3057, 1.050701
    %v3060 = vmul.f32 %v3058, 1.050701
    %v3061 = vpack.c.bf16 %v3060, %v3059
    %3063 = vrot.lane.b32.xlu0 %v3061, 96
    %v3064 = vpop.permute.xlu0 %3063
    %v3067 = vsel %vm596, %v191, 0
    %3069 = vmatprep.subr.bf16.mxu0 0
    %3070 = vmatpush1.bf16.msra.mxu0 %v3064
    %3071 = vmatprep.subr.bf16.mxu0 0
    %3072 = vmatpush1.bf16.msra.mxu0 0
    %3073 = vmatprep.subr.bf16.mxu0 0
    %3074 = vmatpush1.bf16.msra.mxu0 0
    %3075 = vmatprep.subr.bf16.mxu0 0
    %3076 = vmatpush1.bf16.msra.mxu0 0
    %3077 = vmatprep.subr.bf16.mxu0 0
    %3078 = vmatpush1.bf16.msra.mxu0 0
    %3079 = vmatprep.subr.bf16.mxu0 0
    %3080 = vmatpush1.bf16.msra.mxu0 0
    %3081 = vmatprep.subr.bf16.mxu0 0
    %3082 = vmatpush1.bf16.msra.mxu0 0
    %3083 = vmatprep.subr.bf16.mxu0 0
    %3084 = vmatpush1.bf16.msra.mxu0 0
    %3085 = vmatprep.subr.bf16.mxu0 0
    %3086 = vmatpush1.bf16.msra.mxu0 0
    %3087 = vmatprep.subr.bf16.mxu0 0
    %3088 = vmatpush1.bf16.msra.mxu0 0
    %3089 = vmatprep.subr.bf16.mxu0 0
    %3090 = vmatpush1.bf16.msra.mxu0 0
    %3091 = vmatprep.subr.bf16.mxu0 0
    %3092 = vmatpush1.bf16.msra.mxu0 0
    %3093 = vmatprep.subr.bf16.mxu0 0
    %3094 = vmatpush1.bf16.msra.mxu0 0
    %3095 = vmatprep.subr.bf16.mxu0 0
    %3096 = vmatpush1.bf16.msra.mxu0 0
    %3097 = vmatprep.subr.bf16.mxu0 0
    %3098 = vmatpush1.bf16.msra.mxu0 0
    %3099 = vmatprep.subr.bf16.mxu0 0
    %3100 = vmatpush1.bf16.msra.mxu0 0
    %3101 = vmatprep.mubr.bf16.mxu0 0
    %3102 = vmatmul.mubr.bf16.gmra.mrb[0].mxu0 %v3067
    %v3103 = vpop.f32.mrb[0].mxu0
    %v3104 = vadd.f32 0.0, %v3103
    %v3105 = vpop.f32.mrb[0].mxu0
    %v3106 = vpop.f32.mrb[0].mxu0
    %v3107 = vpop.f32.mrb[0].mxu0
    %3108 = vdwg.mxu0
    %v3109 = vtanh.pop %v3104
    %3112 = vrot.lane.b32.xlu0 %v3033, 32
    %v3113 = vpop.permute.xlu0 %3112
    %3114 = vrot.lane.b32.xlu0 %v3034, 32
    %v3115 = vpop.permute.xlu0 %3114
    %v3118 = vmul.f32 %v2115, %v3113
    %v3119 = vmul.f32 %v2116, %v3115
    %v3120 = vpack.c.bf16 %v3119, %v3118
    %v3121 = vlaneseq
    %v3122 = vshrl.u32 %v3121, 7
    %v3123 = vsub.s32 1, %v3122
    %v3124 = vrot.slane %v56, %v3123
    %3126 = vrot.lane.b32.xlu0 %v3120, 96
    %v3127 = vpop.permute.xlu0 %3126
    %3128 = vrot.lane.b32.xlu0 %v2525, 32
    %v3129 = vpop.permute.xlu0 %3128
    %3130 = vrot.lane.b32.xlu0 %v2526, 32
    %v3131 = vpop.permute.xlu0 %3130
    %v3135 = vsel %vm364, %v3127, 0
    %3137 = vmatprep.subr.bf16.mxu0 0
    %3138 = vmatpush1.bf16.msra.mxu0 %v3129
    %3139 = vmatprep.subr.bf16.mxu0 0
    %3140 = vmatpush1.bf16.msra.mxu0 %v3131
    %3141 = vmatprep.subr.bf16.mxu0 0
    %3142 = vmatpush1.bf16.msra.mxu0 0
    %3143 = vmatprep.subr.bf16.mxu0 0
    %3144 = vmatpush1.bf16.msra.mxu0 0
    %3145 = vmatprep.subr.bf16.mxu0 0
    %3146 = vmatpush1.bf16.msra.mxu0 0
    %3147 = vmatprep.subr.bf16.mxu0 0
    %3148 = vmatpush1.bf16.msra.mxu0 0
    %3149 = vmatprep.subr.bf16.mxu0 0
    %3150 = vmatpush1.bf16.msra.mxu0 0
    %3151 = vmatprep.subr.bf16.mxu0 0
    %3152 = vmatpush1.bf16.msra.mxu0 0
    %3153 = vmatprep.subr.bf16.mxu0 0
    %3154 = vmatpush1.bf16.msra.mxu0 0
    %3155 = vmatprep.subr.bf16.mxu0 0
    %3156 = vmatpush1.bf16.msra.mxu0 0
    %3157 = vmatprep.subr.bf16.mxu0 0
    %3158 = vmatpush1.bf16.msra.mxu0 0
    %3159 = vmatprep.subr.bf16.mxu0 0
    %3160 = vmatpush1.bf16.msra.mxu0 0
    %3161 = vmatprep.subr.bf16.mxu0 0
    %3162 = vmatpush1.bf16.msra.mxu0 0
    %3163 = vmatprep.subr.bf16.mxu0 0
    %3164 = vmatpush1.bf16.msra.mxu0 0
    %3165 = vmatprep.subr.bf16.mxu0 0
    %3166 = vmatpush1.bf16.msra.mxu0 0
    %3167 = vmatprep.subr.bf16.mxu0 0
    %3168 = vmatpush1.bf16.msra.mxu0 0
    %3169 = vmatprep.mubr.bf16.mxu0 0
    %3170 = vmatmul.mubr.bf16.gmra.mrb[0].mxu0 %v3135
    %v3171 = vpop.f32.mrb[0].mxu0
    %v3172 = vadd.f32 %v3124, %v3171
    %v3173 = vpop.f32.mrb[0].mxu0
    %v3174 = vpop.f32.mrb[0].mxu0
    %v3175 = vadd.f32 %v3124, %v3174
    %v3176 = vpop.f32.mrb[0].mxu0
    %3177 = vdwg.mxu0
    %vm3178 = vcmp.gt.f32.partialorder %v3172, 0.0
    %vm3179 = vcmp.gt.f32.partialorder %v3175, 0.0
    %v3180 = vmin.f32 %v3172, 0.0
    %v3181 = vmin.f32 %v3175, 0.0
    %v3182 = vmul.f32 %v3180, 1.442695
    %v3183 = vpow.pop %v3182
    %v3184 = vmul.f32 %v3181, 1.442695
    %v3185 = vpow.pop %v3184
    %v3186 = vsub.f32 %v3183, 1.0
    %v3187 = vsub.f32 %v3185, 1.0
    %v3188 = vmul.f32 %v3186, 1.6732632
    %v3189 = vmul.f32 %v3187, 1.6732632
    %v3190 = vsel %vm3178, %v3172, %v3188
    %v3191 = vsel %vm3179, %v3175, %v3189
    %v3192 = vmul.f32 %v3190, 1.050701
    %v3193 = vmul.f32 %v3191, 1.050701
    %v3194 = vpack.c.bf16 %v3193, %v3192
    %3195 = vmatprep.subr.bf16.mxu0 0
    %3196 = vmatpush1.bf16.msra.mxu0 %v3194
    %3197 = vmatprep.subr.bf16.mxu0 0
    %3198 = vmatpush1.bf16.msra.mxu0 0
    %3199 = vmatprep.subr.bf16.mxu0 0
    %3200 = vmatpush1.bf16.msra.mxu0 0
    %3201 = vmatprep.subr.bf16.mxu0 0
    %3202 = vmatpush1.bf16.msra.mxu0 0
    %3203 = vmatprep.subr.bf16.mxu0 0
    %3204 = vmatpush1.bf16.msra.mxu0 0
    %3205 = vmatprep.subr.bf16.mxu0 0
    %3206 = vmatpush1.bf16.msra.mxu0 0
    %3207 = vmatprep.subr.bf16.mxu0 0
    %3208 = vmatpush1.bf16.msra.mxu0 0
    %3209 = vmatprep.subr.bf16.mxu0 0
    %3210 = vmatpush1.bf16.msra.mxu0 0
    %3211 = vmatprep.subr.bf16.mxu0 0
    %3212 = vmatpush1.bf16.msra.mxu0 0
    %3213 = vmatprep.subr.bf16.mxu0 0
    %3214 = vmatpush1.bf16.msra.mxu0 0
    %3215 = vmatprep.subr.bf16.mxu0 0
    %3216 = vmatpush1.bf16.msra.mxu0 0
    %3217 = vmatprep.subr.bf16.mxu0 0
    %3218 = vmatpush1.bf16.msra.mxu0 0
    %3219 = vmatprep.subr.bf16.mxu0 0
    %3220 = vmatpush1.bf16.msra.mxu0 0
    %3221 = vmatprep.subr.bf16.mxu0 0
    %3222 = vmatpush1.bf16.msra.mxu0 0
    %3223 = vmatprep.subr.bf16.mxu0 0
    %3224 = vmatpush1.bf16.msra.mxu0 0
    %3225 = vmatprep.subr.bf16.mxu0 0
    %3226 = vmatpush1.bf16.msra.mxu0 0
    %3227 = vmatprep.mubr.bf16.mxu0 0
    %3228 = vmatmul.mubr.bf16.gmra.mrb[0].mxu0 %v3067
    %v3229 = vpop.f32.mrb[0].mxu0
    %v3230 = vadd.f32 0.0, %v3229
    %v3231 = vpop.f32.mrb[0].mxu0
    %v3232 = vpop.f32.mrb[0].mxu0
    %v3233 = vpop.f32.mrb[0].mxu0
    %3234 = vdwg.mxu0
    %v3235 = vtanh.pop %v3230
    %v3236 = vpack.c.bf16 %v3235, %v3235
    %v3237 = vlaneseq
    %v3238 = vshrl.u32 %v3237, 7
    %v3239 = vsub.s32 2, %v3238
    %v3240 = vrot.slane %v56, %v3239
    %v3241 = vunpack.c.h.b16 %v51
    %v3242 = vunpack.c.h.b16 %v52
    %v3243 = vunpack.c.h.b16 %v53
    %v3244 = vunpack.c.h.b16 %v54
    %v3245 = vpack.c.b16 %v3242, %v3241
    %v3246 = vpack.c.b16 %v3244, %v3243
    %v3250 = vsel %vm364, %v3236, 0
    %3252 = vmatprep.subr.bf16.mxu0 0
    %3253 = vmatpush1.bf16.msra.mxu0 %v3245
    %3254 = vmatprep.subr.bf16.mxu0 0
    %3255 = vmatpush1.bf16.msra.mxu0 %v3246
    %3256 = vmatprep.subr.bf16.mxu0 0
    %3257 = vmatpush1.bf16.msra.mxu0 0
    %3258 = vmatprep.subr.bf16.mxu0 0
    %3259 = vmatpush1.bf16.msra.mxu0 0
    %3260 = vmatprep.subr.bf16.mxu0 0
    %3261 = vmatpush1.bf16.msra.mxu0 0
    %3262 = vmatprep.subr.bf16.mxu0 0
    %3263 = vmatpush1.bf16.msra.mxu0 0
    %3264 = vmatprep.subr.bf16.mxu0 0
    %3265 = vmatpush1.bf16.msra.mxu0 0
    %3266 = vmatprep.subr.bf16.mxu0 0
    %3267 = vmatpush1.bf16.msra.mxu0 0
    %3268 = vmatprep.subr.bf16.mxu0 0
    %3269 = vmatpush1.bf16.msra.mxu0 0
    %3270 = vmatprep.subr.bf16.mxu0 0
    %3271 = vmatpush1.bf16.msra.mxu0 0
    %3272 = vmatprep.subr.bf16.mxu0 0
    %3273 = vmatpush1.bf16.msra.mxu0 0
    %3274 = vmatprep.subr.bf16.mxu0 0
    %3275 = vmatpush1.bf16.msra.mxu0 0
    %3276 = vmatprep.subr.bf16.mxu0 0
    %3277 = vmatpush1.bf16.msra.mxu0 0
    %3278 = vmatprep.subr.bf16.mxu0 0
    %3279 = vmatpush1.bf16.msra.mxu0 0
    %3280 = vmatprep.subr.bf16.mxu0 0
    %3281 = vmatpush1.bf16.msra.mxu0 0
    %3282 = vmatprep.subr.bf16.mxu0 0
    %3283 = vmatpush1.bf16.msra.mxu0 0
    %3284 = vmatprep.mubr.bf16.mxu0 0
    %3285 = vmatmul.mubr.bf16.gmra.mrb[0].mxu0 %v3250
    %v3286 = vpop.f32.mrb[0].mxu0
    %v3287 = vadd.f32 %v3240, %v3286
    %v3288 = vpop.f32.mrb[0].mxu0
    %v3289 = vpop.f32.mrb[0].mxu0
    %v3290 = vpop.f32.mrb[0].mxu0
    %3291 = vdwg.mxu0
    %v3292 = vmax.f32 %v3287, 0.0
    %v3293 = vpack.c.bf16 %v3292, %v3292
    %v3294 = vlaneseq
    %v3295 = vshrl.u32 %v3294, 7
    %v3296 = vsub.s32 3, %v3295
    %v3297 = vrot.slane %v56, %v3296
    %3298 = vrot.lane.b32.xlu0 %v3245, 96
    %v3299 = vpop.permute.xlu0 %3298
    %3300 = vrot.lane.b32.xlu0 %v3246, 96
    %v3301 = vpop.permute.xlu0 %3300
    %v3305 = vsel %vm364, %v3293, 0
    %3307 = vmatprep.subr.bf16.mxu0 0
    %3308 = vmatpush1.bf16.msra.mxu0 %v3299
    %3309 = vmatprep.subr.bf16.mxu0 0
    %3310 = vmatpush1.bf16.msra.mxu0 %v3301
    %3311 = vmatprep.subr.bf16.mxu0 0
    %3312 = vmatpush1.bf16.msra.mxu0 0
    %3313 = vmatprep.subr.bf16.mxu0 0
    %3314 = vmatpush1.bf16.msra.mxu0 0
    %3315 = vmatprep.subr.bf16.mxu0 0
    %3316 = vmatpush1.bf16.msra.mxu0 0
    %3317 = vmatprep.subr.bf16.mxu0 0
    %3318 = vmatpush1.bf16.msra.mxu0 0
    %3319 = vmatprep.subr.bf16.mxu0 0
    %3320 = vmatpush1.bf16.msra.mxu0 0
    %3321 = vmatprep.subr.bf16.mxu0 0
    %3322 = vmatpush1.bf16.msra.mxu0 0
    %3323 = vmatprep.subr.bf16.mxu0 0
    %3324 = vmatpush1.bf16.msra.mxu0 0
    %3325 = vmatprep.subr.bf16.mxu0 0
    %3326 = vmatpush1.bf16.msra.mxu0 0
    %3327 = vmatprep.subr.bf16.mxu0 0
    %3328 = vmatpush1.bf16.msra.mxu0 0
    %3329 = vmatprep.subr.bf16.mxu0 0
    %3330 = vmatpush1.bf16.msra.mxu0 0
    %3331 = vmatprep.subr.bf16.mxu0 0
    %3332 = vmatpush1.bf16.msra.mxu0 0
    %3333 = vmatprep.subr.bf16.mxu0 0
    %3334 = vmatpush1.bf16.msra.mxu0 0
    %3335 = vmatprep.subr.bf16.mxu0 0
    %3336 = vmatpush1.bf16.msra.mxu0 0
    %3337 = vmatprep.subr.bf16.mxu0 0
    %3338 = vmatpush1.bf16.msra.mxu0 0
    %3339 = vmatprep.mubr.bf16.mxu0 0
    %3340 = vmatmul.mubr.bf16.gmra.mrb[0].mxu0 %v3305
    %v3341 = vpop.f32.mrb[0].mxu0
    %v3342 = vadd.f32 %v3297, %v3341
    %v3343 = vpop.f32.mrb[0].mxu0
    %v3344 = vpop.f32.mrb[0].mxu0
    %v3345 = vpop.f32.mrb[0].mxu0
    %3346 = vdwg.mxu0
    %v3347 = vpack.c.bf16 %v3109, %v3109
    %v3348 = vlaneseq
    %v3349 = vshrl.u32 %v3348, 7
    %v3350 = vsub.s32 4, %v3349
    %v3351 = vrot.slane %v56, %v3350
    %3352 = vrot.lane.b32.xlu0 %v3245, 64
    %v3353 = vpop.permute.xlu0 %3352
    %3354 = vrot.lane.b32.xlu0 %v3246, 64
    %v3355 = vpop.permute.xlu0 %3354
    %v3359 = vsel %vm364, %v3347, 0
    %3361 = vmatprep.subr.bf16.mxu0 0
    %3362 = vmatpush1.bf16.msra.mxu0 %v3353
    %3363 = vmatprep.subr.bf16.mxu0 0
    %3364 = vmatpush1.bf16.msra.mxu0 %v3355
    %3365 = vmatprep.subr.bf16.mxu0 0
    %3366 = vmatpush1.bf16.msra.mxu0 0
    %3367 = vmatprep.subr.bf16.mxu0 0
    %3368 = vmatpush1.bf16.msra.mxu0 0
    %3369 = vmatprep.subr.bf16.mxu0 0
    %3370 = vmatpush1.bf16.msra.mxu0 0
    %3371 = vmatprep.subr.bf16.mxu0 0
    %3372 = vmatpush1.bf16.msra.mxu0 0
    %3373 = vmatprep.subr.bf16.mxu0 0
    %3374 = vmatpush1.bf16.msra.mxu0 0
    %3375 = vmatprep.subr.bf16.mxu0 0
    %3376 = vmatpush1.bf16.msra.mxu0 0
    %3377 = vmatprep.subr.bf16.mxu0 0
    %3378 = vmatpush1.bf16.msra.mxu0 0
    %3379 = vmatprep.subr.bf16.mxu0 0
    %3380 = vmatpush1.bf16.msra.mxu0 0
    %3381 = vmatprep.subr.bf16.mxu0 0
    %3382 = vmatpush1.bf16.msra.mxu0 0
    %3383 = vmatprep.subr.bf16.mxu0 0
    %3384 = vmatpush1.bf16.msra.mxu0 0
    %3385 = vmatprep.subr.bf16.mxu0 0
    %3386 = vmatpush1.bf16.msra.mxu0 0
    %3387 = vmatprep.subr.bf16.mxu0 0
    %3388 = vmatpush1.bf16.msra.mxu0 0
    %3389 = vmatprep.subr.bf16.mxu0 0
    %3390 = vmatpush1.bf16.msra.mxu0 0
    %3391 = vmatprep.subr.bf16.mxu0 0
    %3392 = vmatpush1.bf16.msra.mxu0 0
    %3393 = vmatprep.mubr.bf16.mxu0 0
    %3394 = vmatmul.mubr.bf16.gmra.mrb[0].mxu0 %v3359
    %v3395 = vpop.f32.mrb[0].mxu0
    %v3396 = vadd.f32 %v3351, %v3395
    %v3397 = vpop.f32.mrb[0].mxu0
    %v3398 = vpop.f32.mrb[0].mxu0
    %v3399 = vpop.f32.mrb[0].mxu0
    %3400 = vdwg.mxu0
    %3402 = vrot.lane.b32.xlu0 %v3396, 32
    %v3403 = vpop.permute.xlu0 %3402
    %v3405 = vsel %vm364, %v3342, %v3403
    %vm3406 = vcmask 517120
    %3407 = vst.msk [vmem:[#allocation2] sm:$0x3] %vm3406, %v3405
    // Predicated region
    $region46: #{tpu_custom_call.1} parent=1 // pred_check
      _
    $region47: #{tpu_custom_call.1} parent=1 // pred_check_branch
      %3409 = sbr.rel (0) target = $region49
    $region48: #{tpu_custom_call.1} parent=1 // pred_region
      %s3411 = ssub.s32 32, 32
      %3412 = vsyncadd [#allocation3], %s3411
      %s3414 = sshll.u32 [#allocation2], 4
      %s3415 = int_to_ptr.vmem [resolvable:$true] %s3414
      %3417 = dma.vmem_to_hbm [thread:$0]  %s3415, 32, %s11, [#allocation3]
    $region49: #{tpu_custom_call.1} parent=1 // pred_fallthru
      _
    // Predicated region
    $region50: #{tpu_custom_call.1} parent=1 // pred_check
      _
    $region51: #{tpu_custom_call.1} parent=1 // pred_check_branch
      %3419 = sbr.rel (0) target = $region53
    $region52: #{tpu_custom_call.1} parent=1 // pred_region
      %3420 = dma.done [#allocation3], 32
    $region53: #{tpu_custom_call.1} parent=1 // pred_fallthru
      _
    %3421 = vsyncpa [#allocation3], 1

</llo_original>
